<compile_context>
chip_gen: v6e
topology: v6e:2x2x1
jax: 0.10.0
libtpu: 0.0.40
codegen_flags: <defaults>
</compile_context>

<pallas_src>
import math
import functools

import jax
import jax.numpy as jnp
from jax.experimental import pallas as pl
from jax.experimental.pallas import tpu as pltpu


# ----------------------------------------------------------------------------
# Fused ESA layer kernel: masked MHA + output proj + FFN, all residual, 1 call.
# ----------------------------------------------------------------------------
def _esa_layer_kernel(x_ref, bias_ref, wqkv_ref, bqkv_ref, wo_ref, bo_ref,
                      w1_ref, b1_ref, w2_ref, b2_ref, o_ref, *, heads, scale):
    GB, N, D = x_ref.shape
    Dh = D // heads

    x = x_ref[...]                                          # (GB, N, D) f32
    xb = x.reshape(GB * N, D).astype(jnp.bfloat16)

    # fused QKV projection (single [D, 3D] matmul, bf16 operands, f32 accum)
    qkv = jnp.dot(xb, wqkv_ref[...],
                  preferred_element_type=jnp.float32) + bqkv_ref[...]
    qkv = qkv.reshape(GB, N, 3 * D)
    q = qkv[:, :, 0 * D:1 * D]
    k = qkv[:, :, 1 * D:2 * D]
    v = qkv[:, :, 2 * D:3 * D]

    bias = bias_ref[...]                                    # (N, N) additive mask
    head_outs = []
    for h in range(heads):                                  # static unroll
        lo, hi = h * Dh, (h + 1) * Dh
        qh = q[:, :, lo:hi].astype(jnp.bfloat16)
        kh = k[:, :, lo:hi].astype(jnp.bfloat16)
        vh = v[:, :, lo:hi].astype(jnp.bfloat16)
        s = jnp.einsum("bnd,bmd->bnm", qh, kh,
                       preferred_element_type=jnp.float32) * scale + bias
        s = s - jnp.max(s, axis=-1, keepdims=True)
        p = jnp.exp(s)
        p = p * pl.reciprocal(jnp.sum(p, axis=-1, keepdims=True), approx=True)
        oh = jnp.einsum("bnm,bmd->bnd", p.astype(jnp.bfloat16), vh,
                        preferred_element_type=jnp.float32)
        head_outs.append(oh)
    attn = jnp.concatenate(head_outs, axis=-1)              # (GB, N, D) f32

    attn = jnp.dot(attn.reshape(GB * N, D).astype(jnp.bfloat16), wo_ref[...],
                   preferred_element_type=jnp.float32) + bo_ref[...]
    x = x + attn.reshape(GB, N, D)                          # residual 1 (f32)

    h1 = jnp.dot(x.reshape(GB * N, D).astype(jnp.bfloat16), w1_ref[...],
                 preferred_element_type=jnp.float32) + b1_ref[...]
    h1 = jnp.maximum(h1, 0.0)                               # lane-dense (.., 4D)
    ff = jnp.dot(h1.astype(jnp.bfloat16), w2_ref[...],
                 preferred_element_type=jnp.float32) + b2_ref[...]
    x = x + ff.reshape(GB, N, D)                            # residual 2 (f32)

    o_ref[...] = x.astype(o_ref.dtype)


def _pick_chunk(G, cap=64):
    """Largest divisor of G that is <= cap and sublane-friendly (mult of 8)."""
    cap = max(1, min(cap, G))
    for gb in range(cap, 0, -1):
        if G % gb == 0 and (gb % 8 == 0 or gb == G):
            return gb
    return G


def esa_layer_pallas(xs, bias, lp, heads, chunk_cap=64):
    """xs: [2, G, N, D] (both branches), lp: branch-stacked layer params."""
    BR, G, N, D = xs.shape
    H = lp["w1"].shape[-1]
    GB = _pick_chunk(G, chunk_cap)
    n_chunks = G // GB
    scale = 1.0 / math.sqrt(D // heads)

    def wspec(shape):
        return pl.BlockSpec((None,) + shape,
                            lambda br, c, _s=shape: (br,) + (0,) * len(_s))

    kern = functools.partial(_esa_layer_kernel, heads=heads, scale=scale)
    return pl.pallas_call(
        kern,
        out_shape=jax.ShapeDtypeStruct((BR, G, N, D), xs.dtype),
        grid=(BR, n_chunks),
        in_specs=[
            pl.BlockSpec((None, GB, N, D), lambda br, c: (br, c, 0, 0)),  # x
            pl.BlockSpec((N, N), lambda br, c: (0, 0)),                   # mask bias
            wspec((D, 3 * D)),                                            # wqkv
            wspec((1, 3 * D)),                                            # bqkv
            wspec((D, D)),                                                # wo
            wspec((1, D)),                                                # bo
            wspec((D, H)),                                                # w1
            wspec((1, H)),                                                # b1
            wspec((H, D)),                                                # w2
            wspec((1, D)),                                                # b2
        ],
        out_specs=pl.BlockSpec((None, GB, N, D), lambda br, c: (br, c, 0, 0)),
        compiler_params=pltpu.CompilerParams(
            dimension_semantics=("parallel", "parallel")),
    )(xs, bias,
      lp["wqkv"].astype(jnp.bfloat16), lp["bqkv"],
      lp["wo"].astype(jnp.bfloat16), lp["bo"],
      lp["w1"].astype(jnp.bfloat16), lp["b1"],
      lp["w2"].astype(jnp.bfloat16), lp["b2"])


# ----------------------------------------------------------------------------
# Head kernel: out(x) + out(x_d) == (x + x_d) @ w_out + 2*b_out, squeezed.
# ----------------------------------------------------------------------------
def _head_kernel(x_ref, w_ref, b_ref, o_ref):
    xsum = x_ref[0] + x_ref[1]                              # (GB, N, D)
    y = jnp.sum(xsum * w_ref[...], axis=-1) + 2.0 * b_ref[...]
    o_ref[...] = y.astype(o_ref.dtype)


def esa_head_pallas(xs, w_out, b_out, chunk_cap=64):
    BR, G, N, D = xs.shape
    GB = _pick_chunk(G, chunk_cap)
    n_chunks = G // GB
    return pl.pallas_call(
        _head_kernel,
        out_shape=jax.ShapeDtypeStruct((G, N), xs.dtype),
        grid=(n_chunks,),
        in_specs=[
            pl.BlockSpec((BR, GB, N, D), lambda c: (0, c, 0, 0)),
            pl.BlockSpec((1, D), lambda c: (0, 0)),
            pl.BlockSpec((1, 1), lambda c: (0, 0)),
        ],
        out_specs=pl.BlockSpec((GB, N), lambda c: (c, 0)),
        compiler_params=pltpu.CompilerParams(dimension_semantics=("parallel",)),
    )(xs, w_out.reshape(1, D), b_out.reshape(1, 1))


# ----------------------------------------------------------------------------
# Forward (mirrors ESA.forward) + parameter init (nn.Linear-style uniform).
# ----------------------------------------------------------------------------
def esa_forward(params, x, te, se, pe, adj, s_adj, cfg):
    # te, se, pe, s_adj are unused by the reference forward.
    B, T, N = x.shape
    assert T == N, "ESA's final x + x_d add requires in_seq_len == num_nodes"
    D = cfg["d_model"]
    heads = cfg["heads"]
    cap = cfg.get("chunk_cap", 64)

    # fc = nn.Linear(1, d_model): a broadcast outer product (done in XLA glue).
    h = (x[..., None] * params["fc"]["w"][0] + params["fc"]["b"]).astype(jnp.float32)

    G = B * T
    xb0 = h.reshape(G, N, D)                                 # x branch
    xb1 = jnp.swapaxes(h, 1, 2).reshape(G, N, D)             # x_d = transpose(-2,-3)
    xs = jnp.stack([xb0, xb1], axis=0)                       # [2, G, N, D]

    # additive attention mask built once from adj (never broadcast in HBM)
    bias = jnp.where(adj > 0, 0.0, -1e9).astype(jnp.float32)  # [N, N]

    # esa[i] (branch 0) and esa_d[i] (branch 1) run in the same fused call.
    for lp in params["layers"]:
        xs = esa_layer_pallas(xs, bias, lp, heads, cap)

    y = esa_head_pallas(xs, params["out"]["w"], params["out"]["b"], cap)  # [G, N]
    return y.reshape(B, T, N)


def _uniform(key, shape, fan_in):
    s = 1.0 / math.sqrt(fan_in)
    return jax.random.uniform(key, shape, jnp.float32, -s, s)


def init_esa_layer_pair(key, D, H):
    # stacked params: index 0 -> esa[i], index 1 -> esa_d[i]
    ks = jax.random.split(key, 16)

    def pair(i, shape, fan_in):
        return jnp.stack([_uniform(ks[2 * i], shape, fan_in),
                          _uniform(ks[2 * i + 1], shape, fan_in)], axis=0)

    return {
        "wqkv": pair(0, (D, 3 * D), D), "bqkv": pair(1, (1, 3 * D), D),
        "wo":   pair(2, (D, D), D),     "bo":   pair(3, (1, D), D),
        "w1":   pair(4, (D, H), D),     "b1":   pair(5, (1, H), D),
        "w2":   pair(6, (H, D), H),     "b2":   pair(7, (1, D), H),
    }


def init_esa(key, cfg):
    D = cfg["d_model"]
    H = cfg.get("ff_hidden", 4 * D)
    L = cfg["num_encoder_layers"]
    ks = jax.random.split(key, L + 2)
    return {
        "fc": {"w": _uniform(ks[0], (1, D), 1),
               "b": _uniform(jax.random.fold_in(ks[0], 1), (D,), 1)},
        "out": {"w": _uniform(ks[1], (D, 1), D),
                "b": _uniform(jax.random.fold_in(ks[1], 1), (1,), D)},
        "layers": [init_esa_layer_pair(ks[2 + i], D, H) for i in range(L)],
    }


if __name__ == "__main__":
    cfg = dict(heads=4, d_model=32, in_seq_len=8, num_encoder_layers=2,
               num_nodes=8, ff_hidden=128, chunk_cap=8)
    B, T, N = 2, cfg["in_seq_len"], cfg["num_nodes"]

    ks = jax.random.split(jax.random.PRNGKey(0), 6)
    x = jax.random.normal(ks[0], (B, T, N), jnp.float32)
    te = jax.random.normal(ks[1], (B, T, 5), jnp.float32)      # unused by forward
    se = jax.random.normal(ks[2], (N, 3), jnp.float32)          # unused by forward
    pe = jax.random.normal(ks[3], (N, 3), jnp.float32)          # unused by forward
    adj = (jax.random.uniform(ks[4], (N, N)) > 0.5).astype(jnp.float32)
    s_adj = (jax.random.uniform(ks[5], (N, N)) > 0.5).astype(jnp.float32)  # unused

    params = init_esa(jax.random.PRNGKey(1), cfg)

    fwd = jax.jit(lambda p, *args: esa_forward(p, *args, cfg))
    out = fwd(params, x, te, se, pe, adj, s_adj)
    out = jax.block_until_ready(out)
    assert out.shape == (B, T, N) and bool(jnp.all(jnp.isfinite(out)))
    print("KERNEL_OK")
</pallas_src>

<mosaic_0001>
module attributes {stable_mosaic.version = 11 : i64} {
  func.func @_head_kernel(%arg0: i32, %arg1: memref<2x8x8x32xf32, #tpu.memory_space<vmem>>, %arg2: memref<1x32xf32, #tpu.memory_space<vmem>>, %arg3: memref<1x1xf32, #tpu.memory_space<vmem>>, %arg4: memref<8x8xf32, #tpu.memory_space<vmem>>) attributes {dimension_semantics = [#tpu.dimension_semantics<parallel>], iteration_bounds = array<i64: 2>, scalar_prefetch = 0 : i64, scratch_operands = 0 : i64, tpu.core_type = #tpu.core_type<tc>, window_params = [{transform_indices = @transform_0, window_bounds = array<i64: 2, 8, 8, 32>}, {pipeline_mode = #tpu.pipeline_mode<synchronous>, transform_indices = @transform_1, window_bounds = array<i64: 1, 32>}, {pipeline_mode = #tpu.pipeline_mode<synchronous>, transform_indices = @transform_2, window_bounds = array<i64: 1, 1>}, {transform_indices = @transform_3, window_bounds = array<i64: 8, 8>}]} {
    %c0 = arith.constant 0 : index
    %c0_0 = arith.constant 0 : index
    %c0_1 = arith.constant 0 : index
    %c0_2 = arith.constant 0 : index
    %0 = vector.load %arg1[%c0, %c0_0, %c0_1, %c0_2] : memref<2x8x8x32xf32, #tpu.memory_space<vmem>>, vector<1x8x8x32xf32>
    %1 = vector.shape_cast %0 : vector<1x8x8x32xf32> to vector<8x8x32xf32>
    %c1 = arith.constant 1 : index
    %c0_3 = arith.constant 0 : index
    %c0_4 = arith.constant 0 : index
    %c0_5 = arith.constant 0 : index
    %2 = vector.load %arg1[%c1, %c0_3, %c0_4, %c0_5] : memref<2x8x8x32xf32, #tpu.memory_space<vmem>>, vector<1x8x8x32xf32>
    %3 = vector.shape_cast %2 : vector<1x8x8x32xf32> to vector<8x8x32xf32>
    %4 = arith.addf %1, %3 : vector<8x8x32xf32>
    %c0_6 = arith.constant 0 : index
    %c0_7 = arith.constant 0 : index
    %5 = vector.load %arg2[%c0_6, %c0_7] : memref<1x32xf32, #tpu.memory_space<vmem>>, vector<1x32xf32>
    %6 = vector.shape_cast %5 : vector<1x32xf32> to vector<1x1x32xf32>
    %7 = vector.broadcast %6 : vector<1x1x32xf32> to vector<8x8x32xf32>
    %8 = arith.mulf %4, %7 : vector<8x8x32xf32>
    %cst = arith.constant dense<0.000000e+00> : vector<8x8xf32>
    %9 = vector.multi_reduction <add>, %8, %cst [2] : vector<8x8x32xf32> to vector<8x8xf32>
    %c0_8 = arith.constant 0 : index
    %c0_9 = arith.constant 0 : index
    %10 = vector.load %arg3[%c0_8, %c0_9] : memref<1x1xf32, #tpu.memory_space<vmem>>, vector<1x1xf32>
    %cst_10 = arith.constant 2.000000e+00 : f32
    %11 = vector.broadcast %cst_10 : f32 to vector<1x1xf32>
    %12 = arith.mulf %11, %10 : vector<1x1xf32>
    %13 = vector.broadcast %12 : vector<1x1xf32> to vector<8x8xf32>
    %14 = arith.addf %9, %13 : vector<8x8xf32>
    %c0_11 = arith.constant 0 : index
    %c0_12 = arith.constant 0 : index
    %15 = vector.load %arg4[%c0_11, %c0_12] : memref<8x8xf32, #tpu.memory_space<vmem>>, vector<8x8xf32>
    tpu.vector_store %arg4[%c0_11, %c0_12], %14 {strides = array<i32>} : memref<8x8xf32, #tpu.memory_space<vmem>>, vector<8x8xf32>,
    return
  }
  func.func @transform_0(%arg0: i32) -> (i32, i32, i32, i32) {
    %c0_i32 = arith.constant 0 : i32
    %c0_i32_0 = arith.constant 0 : i32
    %c0_i32_1 = arith.constant 0 : i32
    %c0_i32_2 = arith.constant 0 : i32
    return %c0_i32, %arg0, %c0_i32_0, %c0_i32_1 : i32, i32, i32, i32
  }
  func.func @transform_1(%arg0: i32) -> (i32, i32) {
    %c0_i32 = arith.constant 0 : i32
    %c0_i32_0 = arith.constant 0 : i32
    %c0_i32_1 = arith.constant 0 : i32
    return %c0_i32, %c0_i32_0 : i32, i32
  }
  func.func @transform_2(%arg0: i32) -> (i32, i32) {
    %c0_i32 = arith.constant 0 : i32
    %c0_i32_0 = arith.constant 0 : i32
    %c0_i32_1 = arith.constant 0 : i32
    return %c0_i32, %c0_i32_0 : i32, i32
  }
  func.func @transform_3(%arg0: i32) -> (i32, i32) {
    %c0_i32 = arith.constant 0 : i32
    %c0_i32_0 = arith.constant 0 : i32
    return %arg0, %c0_i32 : i32, i32
  }
}

module attributes {stable_mosaic.version = 11 : i64} {
  func.func @_esa_layer_kernel(%arg0: i32, %arg1: i32, %arg2: memref<1x8x8x32xf32, #tpu.memory_space<vmem>>, %arg3: memref<8x8xf32, #tpu.memory_space<vmem>>, %arg4: memref<1x32x96xbf16, #tpu.memory_space<vmem>>, %arg5: memref<1x1x96xf32, #tpu.memory_space<vmem>>, %arg6: memref<1x32x32xbf16, #tpu.memory_space<vmem>>, %arg7: memref<1x1x32xf32, #tpu.memory_space<vmem>>, %arg8: memref<1x32x128xbf16, #tpu.memory_space<vmem>>, %arg9: memref<1x1x128xf32, #tpu.memory_space<vmem>>, %arg10: memref<1x128x32xbf16, #tpu.memory_space<vmem>>, %arg11: memref<1x1x32xf32, #tpu.memory_space<vmem>>, %arg12: memref<1x8x8x32xf32, #tpu.memory_space<vmem>>) attributes {dimension_semantics = [#tpu.dimension_semantics<parallel>, #tpu.dimension_semantics<parallel>], iteration_bounds = array<i64: 2, 2>, scalar_prefetch = 0 : i64, scratch_operands = 0 : i64, tpu.core_type = #tpu.core_type<tc>, window_params = [{transform_indices = @transform_0, window_bounds = array<i64: 1, 8, 8, 32>}, {pipeline_mode = #tpu.pipeline_mode<synchronous>, transform_indices = @transform_1, window_bounds = array<i64: 8, 8>}, {transform_indices = @transform_2, window_bounds = array<i64: 1, 32, 96>}, {transform_indices = @transform_3, window_bounds = array<i64: 1, 1, 96>}, {transform_indices = @transform_4, window_bounds = array<i64: 1, 32, 32>}, {transform_indices = @transform_5, window_bounds = array<i64: 1, 1, 32>}, {transform_indices = @transform_6, window_bounds = array<i64: 1, 32, 128>}, {transform_indices = @transform_7, window_bounds = array<i64: 1, 1, 128>}, {transform_indices = @transform_8, window_bounds = array<i64: 1, 128, 32>}, {transform_indices = @transform_9, window_bounds = array<i64: 1, 1, 32>}, {transform_indices = @transform_10, window_bounds = array<i64: 1, 8, 8, 32>}]} {
    %c0 = arith.constant 0 : index
    %c0_0 = arith.constant 0 : index
    %c0_1 = arith.constant 0 : index
    %c0_2 = arith.constant 0 : index
    %0 = vector.load %arg2[%c0, %c0_0, %c0_1, %c0_2] : memref<1x8x8x32xf32, #tpu.memory_space<vmem>>, vector<1x8x8x32xf32>
    %1 = vector.shape_cast %0 : vector<1x8x8x32xf32> to vector<8x8x32xf32>
    %2 = vector.shape_cast %1 : vector<8x8x32xf32> to vector<64x32xf32>
    %3 = arith.truncf %2 : vector<64x32xf32> to vector<64x32xbf16>
    %c0_3 = arith.constant 0 : index
    %c0_4 = arith.constant 0 : index
    %c0_5 = arith.constant 0 : index
    %4 = vector.load %arg4[%c0_3, %c0_4, %c0_5] : memref<1x32x96xbf16, #tpu.memory_space<vmem>>, vector<1x32x96xbf16>
    %5 = vector.shape_cast %4 : vector<1x32x96xbf16> to vector<32x96xbf16>
    %cst = arith.constant dense<0.000000e+00> : vector<64x96xf32>
    %6 = tpu.matmul %3, %5, %cst {dimension_numbers = #tpu.dot_dimension_numbers<[1], [0], [0], [1], [0, 0, 1, 1], [], []>} : vector<64x32xbf16>, vector<32x96xbf16>, vector<64x96xf32> -> vector<64x96xf32>
    %c0_6 = arith.constant 0 : index
    %c0_7 = arith.constant 0 : index
    %c0_8 = arith.constant 0 : index
    %7 = vector.load %arg5[%c0_6, %c0_7, %c0_8] : memref<1x1x96xf32, #tpu.memory_space<vmem>>, vector<1x1x96xf32>
    %8 = vector.shape_cast %7 : vector<1x1x96xf32> to vector<1x96xf32>
    %9 = vector.broadcast %8 : vector<1x96xf32> to vector<64x96xf32>
    %10 = arith.addf %6, %9 : vector<64x96xf32>
    %11 = vector.shape_cast %10 : vector<64x96xf32> to vector<8x8x96xf32>
    %12 = vector.extract_strided_slice %11 {offsets = [0, 0, 0], sizes = [8, 8, 32], strides = [1, 1, 1]} : vector<8x8x96xf32> to vector<8x8x32xf32>
    %13 = vector.extract_strided_slice %11 {offsets = [0, 0, 32], sizes = [8, 8, 32], strides = [1, 1, 1]} : vector<8x8x96xf32> to vector<8x8x32xf32>
    %14 = vector.extract_strided_slice %11 {offsets = [0, 0, 64], sizes = [8, 8, 32], strides = [1, 1, 1]} : vector<8x8x96xf32> to vector<8x8x32xf32>
    %c0_9 = arith.constant 0 : index
    %c0_10 = arith.constant 0 : index
    %15 = vector.load %arg3[%c0_9, %c0_10] : memref<8x8xf32, #tpu.memory_space<vmem>>, vector<8x8xf32>
    %16 = vector.extract_strided_slice %12 {offsets = [0, 0, 0], sizes = [8, 8, 8], strides = [1, 1, 1]} : vector<8x8x32xf32> to vector<8x8x8xf32>
    %17 = arith.truncf %16 : vector<8x8x8xf32> to vector<8x8x8xbf16>
    %18 = vector.extract_strided_slice %13 {offsets = [0, 0, 0], sizes = [8, 8, 8], strides = [1, 1, 1]} : vector<8x8x32xf32> to vector<8x8x8xf32>
    %19 = arith.truncf %18 : vector<8x8x8xf32> to vector<8x8x8xbf16>
    %20 = vector.extract_strided_slice %14 {offsets = [0, 0, 0], sizes = [8, 8, 8], strides = [1, 1, 1]} : vector<8x8x32xf32> to vector<8x8x8xf32>
    %21 = arith.truncf %20 : vector<8x8x8xf32> to vector<8x8x8xbf16>
    "tpu.trace_start"() <{level = 10 : i32, message = "bnd,bmd->bnm"}> : () -> ()
    %cst_11 = arith.constant dense<0.000000e+00> : vector<8x8x8xf32>
    %22 = tpu.matmul %17, %19, %cst_11 {dimension_numbers = #tpu.dot_dimension_numbers<[2], [2], [1], [1], [0, 0, 0, 1, 1, 1], [0], [0]>} : vector<8x8x8xbf16>, vector<8x8x8xbf16>, vector<8x8x8xf32> -> vector<8x8x8xf32>
    "tpu.trace_stop"() : () -> ()
    %cst_12 = arith.constant 0.353553385 : f32
    %23 = vector.broadcast %cst_12 : f32 to vector<8x8x8xf32>
    %24 = arith.mulf %22, %23 : vector<8x8x8xf32>
    %25 = vector.shape_cast %15 : vector<8x8xf32> to vector<1x8x8xf32>
    %26 = vector.broadcast %25 : vector<1x8x8xf32> to vector<8x8x8xf32>
    %27 = arith.addf %24, %26 : vector<8x8x8xf32>
    %cst_13 = arith.constant dense<0xFF800000> : vector<8x8xf32>
    %28 = vector.multi_reduction <maximumf>, %27, %cst_13 [2] : vector<8x8x8xf32> to vector<8x8xf32>
    %29 = vector.shape_cast %28 : vector<8x8xf32> to vector<8x8x1xf32>
    %30 = vector.broadcast %29 : vector<8x8x1xf32> to vector<8x8x8xf32>
    %31 = arith.subf %27, %30 : vector<8x8x8xf32>
    %32 = math.exp %31 : vector<8x8x8xf32>
    %cst_14 = arith.constant dense<0.000000e+00> : vector<8x8xf32>
    %33 = vector.multi_reduction <add>, %32, %cst_14 [2] : vector<8x8x8xf32> to vector<8x8xf32>
    %34 = vector.shape_cast %33 : vector<8x8xf32> to vector<8x8x1xf32>
    %35 = tpu.reciprocal %34 {approx = true} : vector<8x8x1xf32> -> vector<8x8x1xf32>
    %36 = vector.broadcast %35 : vector<8x8x1xf32> to vector<8x8x8xf32>
    %37 = arith.mulf %32, %36 : vector<8x8x8xf32>
    %38 = arith.truncf %37 : vector<8x8x8xf32> to vector<8x8x8xbf16>
    "tpu.trace_start"() <{level = 10 : i32, message = "bnm,bmd->bnd"}> : () -> ()
    %cst_15 = arith.constant dense<0.000000e+00> : vector<8x8x8xf32>
    %39 = tpu.matmul %38, %21, %cst_15 {dimension_numbers = #tpu.dot_dimension_numbers<[2], [1], [1], [2], [0, 0, 0, 1, 1, 2], [0], [0]>} : vector<8x8x8xbf16>, vector<8x8x8xbf16>, vector<8x8x8xf32> -> vector<8x8x8xf32>
    "tpu.trace_stop"() : () -> ()
    %40 = vector.extract_strided_slice %12 {offsets = [0, 0, 8], sizes = [8, 8, 8], strides = [1, 1, 1]} : vector<8x8x32xf32> to vector<8x8x8xf32>
    %41 = arith.truncf %40 : vector<8x8x8xf32> to vector<8x8x8xbf16>
    %42 = vector.extract_strided_slice %13 {offsets = [0, 0, 8], sizes = [8, 8, 8], strides = [1, 1, 1]} : vector<8x8x32xf32> to vector<8x8x8xf32>
    %43 = arith.truncf %42 : vector<8x8x8xf32> to vector<8x8x8xbf16>
    %44 = vector.extract_strided_slice %14 {offsets = [0, 0, 8], sizes = [8, 8, 8], strides = [1, 1, 1]} : vector<8x8x32xf32> to vector<8x8x8xf32>
    %45 = arith.truncf %44 : vector<8x8x8xf32> to vector<8x8x8xbf16>
    "tpu.trace_start"() <{level = 10 : i32, message = "bnd,bmd->bnm"}> : () -> ()
    %cst_16 = arith.constant dense<0.000000e+00> : vector<8x8x8xf32>
    %46 = tpu.matmul %41, %43, %cst_16 {dimension_numbers = #tpu.dot_dimension_numbers<[2], [2], [1], [1], [0, 0, 0, 1, 1, 1], [0], [0]>} : vector<8x8x8xbf16>, vector<8x8x8xbf16>, vector<8x8x8xf32> -> vector<8x8x8xf32>
    "tpu.trace_stop"() : () -> ()
    %cst_17 = arith.constant 0.353553385 : f32
    %47 = vector.broadcast %cst_17 : f32 to vector<8x8x8xf32>
    %48 = arith.mulf %46, %47 : vector<8x8x8xf32>
    %49 = vector.shape_cast %15 : vector<8x8xf32> to vector<1x8x8xf32>
    %50 = vector.broadcast %49 : vector<1x8x8xf32> to vector<8x8x8xf32>
    %51 = arith.addf %48, %50 : vector<8x8x8xf32>
    %cst_18 = arith.constant dense<0xFF800000> : vector<8x8xf32>
    %52 = vector.multi_reduction <maximumf>, %51, %cst_18 [2] : vector<8x8x8xf32> to vector<8x8xf32>
    %53 = vector.shape_cast %52 : vector<8x8xf32> to vector<8x8x1xf32>
    %54 = vector.broadcast %53 : vector<8x8x1xf32> to vector<8x8x8xf32>
    %55 = arith.subf %51, %54 : vector<8x8x8xf32>
    %56 = math.exp %55 : vector<8x8x8xf32>
    %cst_19 = arith.constant dense<0.000000e+00> : vector<8x8xf32>
    %57 = vector.multi_reduction <add>, %56, %cst_19 [2] : vector<8x8x8xf32> to vector<8x8xf32>
    %58 = vector.shape_cast %57 : vector<8x8xf32> to vector<8x8x1xf32>
    %59 = tpu.reciprocal %58 {approx = true} : vector<8x8x1xf32> -> vector<8x8x1xf32>
    %60 = vector.broadcast %59 : vector<8x8x1xf32> to vector<8x8x8xf32>
    %61 = arith.mulf %56, %60 : vector<8x8x8xf32>
    %62 = arith.truncf %61 : vector<8x8x8xf32> to vector<8x8x8xbf16>
    "tpu.trace_start"() <{level = 10 : i32, message = "bnm,bmd->bnd"}> : () -> ()
    %cst_20 = arith.constant dense<0.000000e+00> : vector<8x8x8xf32>
    %63 = tpu.matmul %62, %45, %cst_20 {dimension_numbers = #tpu.dot_dimension_numbers<[2], [1], [1], [2], [0, 0, 0, 1, 1, 2], [0], [0]>} : vector<8x8x8xbf16>, vector<8x8x8xbf16>, vector<8x8x8xf32> -> vector<8x8x8xf32>
    "tpu.trace_stop"() : () -> ()
    %64 = vector.extract_strided_slice %12 {offsets = [0, 0, 16], sizes = [8, 8, 8], strides = [1, 1, 1]} : vector<8x8x32xf32> to vector<8x8x8xf32>
    %65 = arith.truncf %64 : vector<8x8x8xf32> to vector<8x8x8xbf16>
    %66 = vector.extract_strided_slice %13 {offsets = [0, 0, 16], sizes = [8, 8, 8], strides = [1, 1, 1]} : vector<8x8x32xf32> to vector<8x8x8xf32>
    %67 = arith.truncf %66 : vector<8x8x8xf32> to vector<8x8x8xbf16>
    %68 = vector.extract_strided_slice %14 {offsets = [0, 0, 16], sizes = [8, 8, 8], strides = [1, 1, 1]} : vector<8x8x32xf32> to vector<8x8x8xf32>
    %69 = arith.truncf %68 : vector<8x8x8xf32> to vector<8x8x8xbf16>
    "tpu.trace_start"() <{level = 10 : i32, message = "bnd,bmd->bnm"}> : () -> ()
    %cst_21 = arith.constant dense<0.000000e+00> : vector<8x8x8xf32>
    %70 = tpu.matmul %65, %67, %cst_21 {dimension_numbers = #tpu.dot_dimension_numbers<[2], [2], [1], [1], [0, 0, 0, 1, 1, 1], [0], [0]>} : vector<8x8x8xbf16>, vector<8x8x8xbf16>, vector<8x8x8xf32> -> vector<8x8x8xf32>
    "tpu.trace_stop"() : () -> ()
    %cst_22 = arith.constant 0.353553385 : f32
    %71 = vector.broadcast %cst_22 : f32 to vector<8x8x8xf32>
    %72 = arith.mulf %70, %71 : vector<8x8x8xf32>
    %73 = vector.shape_cast %15 : vector<8x8xf32> to vector<1x8x8xf32>
    %74 = vector.broadcast %73 : vector<1x8x8xf32> to vector<8x8x8xf32>
    %75 = arith.addf %72, %74 : vector<8x8x8xf32>
    %cst_23 = arith.constant dense<0xFF800000> : vector<8x8xf32>
    %76 = vector.multi_reduction <maximumf>, %75, %cst_23 [2] : vector<8x8x8xf32> to vector<8x8xf32>
    %77 = vector.shape_cast %76 : vector<8x8xf32> to vector<8x8x1xf32>
    %78 = vector.broadcast %77 : vector<8x8x1xf32> to vector<8x8x8xf32>
    %79 = arith.subf %75, %78 : vector<8x8x8xf32>
    %80 = math.exp %79 : vector<8x8x8xf32>
    %cst_24 = arith.constant dense<0.000000e+00> : vector<8x8xf32>
    %81 = vector.multi_reduction <add>, %80, %cst_24 [2] : vector<8x8x8xf32> to vector<8x8xf32>
    %82 = vector.shape_cast %81 : vector<8x8xf32> to vector<8x8x1xf32>
    %83 = tpu.reciprocal %82 {approx = true} : vector<8x8x1xf32> -> vector<8x8x1xf32>
    %84 = vector.broadcast %83 : vector<8x8x1xf32> to vector<8x8x8xf32>
    %85 = arith.mulf %80, %84 : vector<8x8x8xf32>
    %86 = arith.truncf %85 : vector<8x8x8xf32> to vector<8x8x8xbf16>
    "tpu.trace_start"() <{level = 10 : i32, message = "bnm,bmd->bnd"}> : () -> ()
    %cst_25 = arith.constant dense<0.000000e+00> : vector<8x8x8xf32>
    %87 = tpu.matmul %86, %69, %cst_25 {dimension_numbers = #tpu.dot_dimension_numbers<[2], [1], [1], [2], [0, 0, 0, 1, 1, 2], [0], [0]>} : vector<8x8x8xbf16>, vector<8x8x8xbf16>, vector<8x8x8xf32> -> vector<8x8x8xf32>
    "tpu.trace_stop"() : () -> ()
    %88 = vector.extract_strided_slice %12 {offsets = [0, 0, 24], sizes = [8, 8, 8], strides = [1, 1, 1]} : vector<8x8x32xf32> to vector<8x8x8xf32>
    %89 = arith.truncf %88 : vector<8x8x8xf32> to vector<8x8x8xbf16>
    %90 = vector.extract_strided_slice %13 {offsets = [0, 0, 24], sizes = [8, 8, 8], strides = [1, 1, 1]} : vector<8x8x32xf32> to vector<8x8x8xf32>
    %91 = arith.truncf %90 : vector<8x8x8xf32> to vector<8x8x8xbf16>
    %92 = vector.extract_strided_slice %14 {offsets = [0, 0, 24], sizes = [8, 8, 8], strides = [1, 1, 1]} : vector<8x8x32xf32> to vector<8x8x8xf32>
    %93 = arith.truncf %92 : vector<8x8x8xf32> to vector<8x8x8xbf16>
    "tpu.trace_start"() <{level = 10 : i32, message = "bnd,bmd->bnm"}> : () -> ()
    %cst_26 = arith.constant dense<0.000000e+00> : vector<8x8x8xf32>
    %94 = tpu.matmul %89, %91, %cst_26 {dimension_numbers = #tpu.dot_dimension_numbers<[2], [2], [1], [1], [0, 0, 0, 1, 1, 1], [0], [0]>} : vector<8x8x8xbf16>, vector<8x8x8xbf16>, vector<8x8x8xf32> -> vector<8x8x8xf32>
    "tpu.trace_stop"() : () -> ()
    %cst_27 = arith.constant 0.353553385 : f32
    %95 = vector.broadcast %cst_27 : f32 to vector<8x8x8xf32>
    %96 = arith.mulf %94, %95 : vector<8x8x8xf32>
    %97 = vector.shape_cast %15 : vector<8x8xf32> to vector<1x8x8xf32>
    %98 = vector.broadcast %97 : vector<1x8x8xf32> to vector<8x8x8xf32>
    %99 = arith.addf %96, %98 : vector<8x8x8xf32>
    %cst_28 = arith.constant dense<0xFF800000> : vector<8x8xf32>
    %100 = vector.multi_reduction <maximumf>, %99, %cst_28 [2] : vector<8x8x8xf32> to vector<8x8xf32>
    %101 = vector.shape_cast %100 : vector<8x8xf32> to vector<8x8x1xf32>
    %102 = vector.broadcast %101 : vector<8x8x1xf32> to vector<8x8x8xf32>
    %103 = arith.subf %99, %102 : vector<8x8x8xf32>
    %104 = math.exp %103 : vector<8x8x8xf32>
    %cst_29 = arith.constant dense<0.000000e+00> : vector<8x8xf32>
    %105 = vector.multi_reduction <add>, %104, %cst_29 [2] : vector<8x8x8xf32> to vector<8x8xf32>
    %106 = vector.shape_cast %105 : vector<8x8xf32> to vector<8x8x1xf32>
    %107 = tpu.reciprocal %106 {approx = true} : vector<8x8x1xf32> -> vector<8x8x1xf32>
    %108 = vector.broadcast %107 : vector<8x8x1xf32> to vector<8x8x8xf32>
    %109 = arith.mulf %104, %108 : vector<8x8x8xf32>
    %110 = arith.truncf %109 : vector<8x8x8xf32> to vector<8x8x8xbf16>
    "tpu.trace_start"() <{level = 10 : i32, message = "bnm,bmd->bnd"}> : () -> ()
    %cst_30 = arith.constant dense<0.000000e+00> : vector<8x8x8xf32>
    %111 = tpu.matmul %110, %93, %cst_30 {dimension_numbers = #tpu.dot_dimension_numbers<[2], [1], [1], [2], [0, 0, 0, 1, 1, 2], [0], [0]>} : vector<8x8x8xbf16>, vector<8x8x8xbf16>, vector<8x8x8xf32> -> vector<8x8x8xf32>
    "tpu.trace_stop"() : () -> ()
    %112 = tpu.concatenate %39, %63, %87, %111 in 2 : vector<8x8x8xf32>, vector<8x8x8xf32>, vector<8x8x8xf32>, vector<8x8x8xf32> -> vector<8x8x32xf32>
    %113 = vector.shape_cast %112 : vector<8x8x32xf32> to vector<64x32xf32>
    %114 = arith.truncf %113 : vector<64x32xf32> to vector<64x32xbf16>
    %c0_31 = arith.constant 0 : index
    %c0_32 = arith.constant 0 : index
    %c0_33 = arith.constant 0 : index
    %115 = vector.load %arg6[%c0_31, %c0_32, %c0_33] : memref<1x32x32xbf16, #tpu.memory_space<vmem>>, vector<1x32x32xbf16>
    %116 = vector.shape_cast %115 : vector<1x32x32xbf16> to vector<32x32xbf16>
    %cst_34 = arith.constant dense<0.000000e+00> : vector<64x32xf32>
    %117 = tpu.matmul %114, %116, %cst_34 {dimension_numbers = #tpu.dot_dimension_numbers<[1], [0], [0], [1], [0, 0, 1, 1], [], []>} : vector<64x32xbf16>, vector<32x32xbf16>, vector<64x32xf32> -> vector<64x32xf32>
    %c0_35 = arith.constant 0 : index
    %c0_36 = arith.constant 0 : index
    %c0_37 = arith.constant 0 : index
    %118 = vector.load %arg7[%c0_35, %c0_36, %c0_37] : memref<1x1x32xf32, #tpu.memory_space<vmem>>, vector<1x1x32xf32>
    %119 = vector.shape_cast %118 : vector<1x1x32xf32> to vector<1x32xf32>
    %120 = vector.broadcast %119 : vector<1x32xf32> to vector<64x32xf32>
    %121 = arith.addf %117, %120 : vector<64x32xf32>
    %122 = vector.shape_cast %121 : vector<64x32xf32> to vector<8x8x32xf32>
    %123 = arith.addf %1, %122 : vector<8x8x32xf32>
    %124 = vector.shape_cast %123 : vector<8x8x32xf32> to vector<64x32xf32>
    %125 = arith.truncf %124 : vector<64x32xf32> to vector<64x32xbf16>
    %c0_38 = arith.constant 0 : index
    %c0_39 = arith.constant 0 : index
    %c0_40 = arith.constant 0 : index
    %126 = vector.load %arg8[%c0_38, %c0_39, %c0_40] : memref<1x32x128xbf16, #tpu.memory_space<vmem>>, vector<1x32x128xbf16>
    %127 = vector.shape_cast %126 : vector<1x32x128xbf16> to vector<32x128xbf16>
    %cst_41 = arith.constant dense<0.000000e+00> : vector<64x128xf32>
    %128 = tpu.matmul %125, %127, %cst_41 {dimension_numbers = #tpu.dot_dimension_numbers<[1], [0], [0], [1], [0, 0, 1, 1], [], []>} : vector<64x32xbf16>, vector<32x128xbf16>, vector<64x128xf32> -> vector<64x128xf32>
    %c0_42 = arith.constant 0 : index
    %c0_43 = arith.constant 0 : index
    %c0_44 = arith.constant 0 : index
    %129 = vector.load %arg9[%c0_42, %c0_43, %c0_44] : memref<1x1x128xf32, #tpu.memory_space<vmem>>, vector<1x1x128xf32>
    %130 = vector.shape_cast %129 : vector<1x1x128xf32> to vector<1x128xf32>
    %131 = vector.broadcast %130 : vector<1x128xf32> to vector<64x128xf32>
    %132 = arith.addf %128, %131 : vector<64x128xf32>
    %cst_45 = arith.constant 0.000000e+00 : f32
    %133 = vector.broadcast %cst_45 : f32 to vector<64x128xf32>
    %134 = arith.maximumf %132, %133 : vector<64x128xf32>
    %135 = arith.truncf %134 : vector<64x128xf32> to vector<64x128xbf16>
    %c0_46 = arith.constant 0 : index
    %c0_47 = arith.constant 0 : index
    %c0_48 = arith.constant 0 : index
    %136 = vector.load %arg10[%c0_46, %c0_47, %c0_48] : memref<1x128x32xbf16, #tpu.memory_space<vmem>>, vector<1x128x32xbf16>
    %137 = vector.shape_cast %136 : vector<1x128x32xbf16> to vector<128x32xbf16>
    %cst_49 = arith.constant dense<0.000000e+00> : vector<64x32xf32>
    %138 = tpu.matmul %135, %137, %cst_49 {dimension_numbers = #tpu.dot_dimension_numbers<[1], [0], [0], [1], [0, 0, 1, 1], [], []>} : vector<64x128xbf16>, vector<128x32xbf16>, vector<64x32xf32> -> vector<64x32xf32>
    %c0_50 = arith.constant 0 : index
    %c0_51 = arith.constant 0 : index
    %c0_52 = arith.constant 0 : index
    %139 = vector.load %arg11[%c0_50, %c0_51, %c0_52] : memref<1x1x32xf32, #tpu.memory_space<vmem>>, vector<1x1x32xf32>
    %140 = vector.shape_cast %139 : vector<1x1x32xf32> to vector<1x32xf32>
    %141 = vector.broadcast %140 : vector<1x32xf32> to vector<64x32xf32>
    %142 = arith.addf %138, %141 : vector<64x32xf32>
    %143 = vector.shape_cast %142 : vector<64x32xf32> to vector<8x8x32xf32>
    %144 = arith.addf %123, %143 : vector<8x8x32xf32>
    %c0_53 = arith.constant 0 : index
    %c0_54 = arith.constant 0 : index
    %c0_55 = arith.constant 0 : index
    %c0_56 = arith.constant 0 : index
    %145 = vector.load %arg12[%c0_53, %c0_54, %c0_55, %c0_56] : memref<1x8x8x32xf32, #tpu.memory_space<vmem>>, vector<1x8x8x32xf32>
    %146 = vector.shape_cast %145 : vector<1x8x8x32xf32> to vector<8x8x32xf32>
    %147 = vector.shape_cast %144 : vector<8x8x32xf32> to vector<1x8x8x32xf32>
    tpu.vector_store %arg12[%c0_53, %c0_54, %c0_55, %c0_56], %147 {strides = array<i32>} : memref<1x8x8x32xf32, #tpu.memory_space<vmem>>, vector<1x8x8x32xf32>,
    return
  }
  func.func @transform_0(%arg0: i32, %arg1: i32) -> (i32, i32, i32, i32) {
    %c0_i32 = arith.constant 0 : i32
    %c0_i32_0 = arith.constant 0 : i32
    %c0_i32_1 = arith.constant 0 : i32
    return %arg0, %arg1, %c0_i32, %c0_i32_0 : i32, i32, i32, i32
  }
  func.func @transform_1(%arg0: i32, %arg1: i32) -> (i32, i32) {
    %c0_i32 = arith.constant 0 : i32
    %c0_i32_0 = arith.constant 0 : i32
    %c0_i32_1 = arith.constant 0 : i32
    return %c0_i32, %c0_i32_0 : i32, i32
  }
  func.func @transform_2(%arg0: i32, %arg1: i32) -> (i32, i32, i32) {
    %c0_i32 = arith.constant 0 : i32
    %c0_i32_0 = arith.constant 0 : i32
    %c0_i32_1 = arith.constant 0 : i32
    return %arg0, %c0_i32, %c0_i32_0 : i32, i32, i32
  }
  func.func @transform_3(%arg0: i32, %arg1: i32) -> (i32, i32, i32) {
    %c0_i32 = arith.constant 0 : i32
    %c0_i32_0 = arith.constant 0 : i32
    %c0_i32_1 = arith.constant 0 : i32
    return %arg0, %c0_i32, %c0_i32_0 : i32, i32, i32
  }
  func.func @transform_4(%arg0: i32, %arg1: i32) -> (i32, i32, i32) {
    %c0_i32 = arith.constant 0 : i32
    %c0_i32_0 = arith.constant 0 : i32
    %c0_i32_1 = arith.constant 0 : i32
    return %arg0, %c0_i32, %c0_i32_0 : i32, i32, i32
  }
  func.func @transform_5(%arg0: i32, %arg1: i32) -> (i32, i32, i32) {
    %c0_i32 = arith.constant 0 : i32
    %c0_i32_0 = arith.constant 0 : i32
    %c0_i32_1 = arith.constant 0 : i32
    return %arg0, %c0_i32, %c0_i32_0 : i32, i32, i32
  }
  func.func @transform_6(%arg0: i32, %arg1: i32) -> (i32, i32, i32) {
    %c0_i32 = arith.constant 0 : i32
    %c0_i32_0 = arith.constant 0 : i32
    %c0_i32_1 = arith.constant 0 : i32
    return %arg0, %c0_i32, %c0_i32_0 : i32, i32, i32
  }
  func.func @transform_7(%arg0: i32, %arg1: i32) -> (i32, i32, i32) {
    %c0_i32 = arith.constant 0 : i32
    %c0_i32_0 = arith.constant 0 : i32
    %c0_i32_1 = arith.constant 0 : i32
    return %arg0, %c0_i32, %c0_i32_0 : i32, i32, i32
  }
  func.func @transform_8(%arg0: i32, %arg1: i32) -> (i32, i32, i32) {
    %c0_i32 = arith.constant 0 : i32
    %c0_i32_0 = arith.constant 0 : i32
    %c0_i32_1 = arith.constant 0 : i32
    return %arg0, %c0_i32, %c0_i32_0 : i32, i32, i32
  }
  func.func @transform_9(%arg0: i32, %arg1: i32) -> (i32, i32, i32) {
    %c0_i32 = arith.constant 0 : i32
    %c0_i32_0 = arith.constant 0 : i32
    %c0_i32_1 = arith.constant 0 : i32
    return %arg0, %c0_i32, %c0_i32_0 : i32, i32, i32
  }
  func.func @transform_10(%arg0: i32, %arg1: i32) -> (i32, i32, i32, i32) {
    %c0_i32 = arith.constant 0 : i32
    %c0_i32_0 = arith.constant 0 : i32
    %c0_i32_1 = arith.constant 0 : i32
    return %arg0, %arg1, %c0_i32, %c0_i32_0 : i32, i32, i32, i32
  }
}

</mosaic_0001>

<llo_original>
// kernel: _lambda_.5
$region0: #{_lambda_.5}
  #allocation0 [shape = 'u32[]', space=smem, size = 0x4, offset = 0x4, fixed_abs, tag = 'smem constant byte address 0x4 - core index']
  #allocation1 [shape = 'u32[144,128]{1,0:T(1,128)}', space=vmem, size = 0x12000, scoped, tag = 'internal scratch']
  #allocation2 [shape = 'f32[1,1]{1,0:T(1,128)S(1)}', space=vmem, size = 0x200, scoped, tag = 'scoped memory for _lambda_.5']
  %s0 = inlined_call_operand.vmem [shape: f32[2,16,8,32], index: 0, kind: input, shape index: {}]
  %s1 = inlined_call_operand.vmem [shape: f32[1,32], index: 1, kind: input, shape index: {}]
  %s2 = inlined_call_operand.<no memory space> [shape: f32[1,1], index: 2, kind: input, shape index: {}]
  %s3 = inlined_call_operand.hbm [shape: f32[16,8], index: 3, kind: output, shape index: {}]
  %s4 = sld [smem:[#allocation0]]
  $region83: #{_lambda_.5} parent=0
    _
  %s6 = ssub.s32 1, %s4
  %s7 = scalar_select 0, %s6, %s4
  %v8 = vstv %s2
  %9 = vst [vmem:[#allocation2] sm:$0x1] %v8
  $region1: #{_lambda_.5} parent=0
    #allocation3 [shape = 'u8[131072]{0}', space=vmem, size = 0x20000, scoped, tag = 'input window, operand 0']
    #allocation4 [shape = 'u8[8192]{0}', space=vmem, size = 0x2000, scoped, tag = 'output window, operand 0']
    #allocation5 [shape = 's32[2]{0}', space=sflag, size = 0x8, scoped, tag = 'scoped memory for _lambda_.5']
    %10 = vsyncpa [#allocation5], 0
    %s11 = scalar_lea.sflag [#allocation5], 1
    %12 = vsyncpa %s11, 0
    loop: start=0, step=1, limit=4
    $region2: #{_lambda_.5} parent=1 // loop_pre_header
      _
    $region3: #{_lambda_.5} parent=1 // loop_header
      %s14 = sphi 0, %s18
      %p15 = scmp.ge.s32.totalorder %s14, 4
      %s24 = sphi 0, %s26
      %s27 = sphi 0, %s24
      %s28 = sphi 0, %s27
      %s44 = sphi 0, %s28
      %s48 = sphi 0, %s48
      %s50 = sphi 0, %s48
      %s51 = sphi 0, %s50
      %s65 = sphi 0, %s51
      %s69 = sphi 0, %s69
      %s71 = sphi 0, %s69
      %s72 = sphi 0, %s71
      %s86 = sphi 0, %s72
      %s92 = sphi 0, %s94
      %s95 = sphi 0, %s92
      %s96 = sphi 0, %s95
      %s112 = sphi 0, %s96
    $region4: #{_lambda_.5} parent=1 // loop_header_branch
      %17 = sbr.rel (%p15) target = $region8
    $region5: #{_lambda_.5} parent=1 // loop_body
      %s19 = ssub.s32 %s14, 1
      %s20 = ssub.s32 %s14, 2
      %s21 = sadd.s32 %s14, 1
      %s22 = ssub.s32 %s14, %s21
      %p23 = scmp.eq.s32.totalorder %s22, 0
      %s25 = sadd.s32 %s24, 1
      %s26 = scalar_select %p23, %s24, %s25
      %p29 = pneg %p23
      %p30 = scmp.eq.s32.totalorder %s14, 1
      %p31 = por %p29, %p30
      %p32 = scmp.ne.s32.totalorder %s24, %s27
      %p33 = scmp.eq.s32.totalorder %s14, 0
      %p34 = por %p32, %p33
      %p35 = scmp.ne.s32.totalorder %s24, %s27
      %p36 = scmp.eq.s32.totalorder %s19, 1
      %p37 = por %p35, %p36
      %p38 = scmp.ne.s32.totalorder %s27, %s28
      %p39 = scmp.eq.s32.totalorder %s19, 0
      %p40 = por %p38, %p39
      %p41 = scmp.ne.s32.totalorder %s27, %s28
      %p42 = scmp.eq.s32.totalorder %s20, 1
      %p43 = por %p41, %p42
      %p45 = scmp.ne.s32.totalorder %s28, %s44
      %p46 = scmp.eq.s32.totalorder %s20, 0
      %p47 = por %p45, %p46
      %s49 = sadd.s32 %s48, 1
      %p52 = scmp.eq.s32.totalorder %s14, 1
      %p53 = scmp.ne.s32.totalorder %s48, %s50
      %p54 = scmp.eq.s32.totalorder %s14, 0
      %p55 = por %p53, %p54
      %p56 = scmp.ne.s32.totalorder %s48, %s50
      %p57 = scmp.eq.s32.totalorder %s19, 1
      %p58 = por %p56, %p57
      %p59 = scmp.ne.s32.totalorder %s50, %s51
      %p60 = scmp.eq.s32.totalorder %s19, 0
      %p61 = por %p59, %p60
      %p62 = scmp.ne.s32.totalorder %s50, %s51
      %p63 = scmp.eq.s32.totalorder %s20, 1
      %p64 = por %p62, %p63
      %p66 = scmp.ne.s32.totalorder %s51, %s65
      %p67 = scmp.eq.s32.totalorder %s20, 0
      %p68 = por %p66, %p67
      %s70 = sadd.s32 %s69, 1
      %p73 = scmp.eq.s32.totalorder %s14, 1
      %p74 = scmp.ne.s32.totalorder %s69, %s71
      %p75 = scmp.eq.s32.totalorder %s14, 0
      %p76 = por %p74, %p75
      %p77 = scmp.ne.s32.totalorder %s69, %s71
      %p78 = scmp.eq.s32.totalorder %s19, 1
      %p79 = por %p77, %p78
      %p80 = scmp.ne.s32.totalorder %s71, %s72
      %p81 = scmp.eq.s32.totalorder %s19, 0
      %p82 = por %p80, %p81
      %p83 = scmp.ne.s32.totalorder %s71, %s72
      %p84 = scmp.eq.s32.totalorder %s20, 1
      %p85 = por %p83, %p84
      %p87 = scmp.ne.s32.totalorder %s72, %s86
      %p88 = scmp.eq.s32.totalorder %s20, 0
      %p89 = por %p87, %p88
      %s90 = ssub.s32 %s14, %s21
      %p91 = scmp.eq.s32.totalorder %s90, 0
      %s93 = sadd.s32 %s92, 1
      %s94 = scalar_select %p91, %s92, %s93
      %p97 = pneg %p91
      %p98 = scmp.eq.s32.totalorder %s14, 1
      %p99 = por %p97, %p98
      %p100 = scmp.ne.s32.totalorder %s92, %s95
      %p101 = scmp.eq.s32.totalorder %s14, 0
      %p102 = por %p100, %p101
      %p103 = scmp.ne.s32.totalorder %s92, %s95
      %p104 = scmp.eq.s32.totalorder %s19, 1
      %p105 = por %p103, %p104
      %p106 = scmp.ne.s32.totalorder %s95, %s96
      %p107 = scmp.eq.s32.totalorder %s19, 0
      %p108 = por %p106, %p107
      %p109 = scmp.ne.s32.totalorder %s95, %s96
      %p110 = scmp.eq.s32.totalorder %s20, 1
      %p111 = por %p109, %p110
      %p113 = scmp.ne.s32.totalorder %s96, %s112
      %p114 = scmp.eq.s32.totalorder %s20, 0
      %p115 = por %p113, %p114
      %p116 = scmp.le.s32.totalorder 1, %s14
      %p117 = scmp.lt.s32.totalorder %s14, 3
      %p118 = pnand %p116, %p117
      %p119 = pneg %p118
      // Predicated region
      $region9: #{_lambda_.5} parent=5 // pred_check
        _
      $region10: #{_lambda_.5} parent=5 // pred_check_branch
        %121 = sbr.rel (%p118) target = $region12
      $region11: #{_lambda_.5} parent=5 // pred_region
        %s122 = ssub.s32 %s14, 1
        // Predicated region
        $region13: #{_lambda_.5} parent=11 // pred_check
          %p123 = pneg %p61
        $region14: #{_lambda_.5} parent=11 // pred_check_branch
          %125 = sbr.rel (%p123) target = $region16
        $region15: #{_lambda_.5} parent=11 // pred_region
          _
        $region16: #{_lambda_.5} parent=11 // pred_fallthru
          _
        // Predicated region
        $region17: #{_lambda_.5} parent=11 // pred_check
          %p126 = pneg %p82
        $region18: #{_lambda_.5} parent=11 // pred_check_branch
          %128 = sbr.rel (%p126) target = $region20
        $region19: #{_lambda_.5} parent=11 // pred_region
          _
        $region20: #{_lambda_.5} parent=11 // pred_fallthru
          _
      $region12: #{_lambda_.5} parent=5 // pred_fallthru
        _
      %p129 = scmp.lt.s32.totalorder %s14, 2
      // Predicated region
      $region21: #{_lambda_.5} parent=5 // pred_check
        %p130 = pneg %p129
      $region22: #{_lambda_.5} parent=5 // pred_check_branch
        %132 = sbr.rel (%p130) target = $region24
      $region23: #{_lambda_.5} parent=5 // pred_region
        // Predicated region
        $region25: #{_lambda_.5} parent=23 // pred_check
          %p133 = pneg %p34
        $region26: #{_lambda_.5} parent=23 // pred_check_branch
          %135 = sbr.rel (%p133) target = $region28
        $region27: #{_lambda_.5} parent=23 // pred_region
          %s136 = sand.u32 %s24, 1
          %s137 = sand.u32 %s24, 1
          %s138 = smul.addr %s137, 128
          %s139 = scalar_lea.vmem [#allocation3], %s138
          %s140 = smul.u32 8, %s14
          %s141 = smul.addr %s140, 8
          %s142 = scalar_lea.vmem %s0, %s141
          // Predicated region
          $region29: #{_lambda_.5} parent=27 // pred_check
            _
          $region30: #{_lambda_.5} parent=27 // pred_check_branch
            %144 = sbr.rel (0) target = $region32
          $region31: #{_lambda_.5} parent=27 // pred_region
            // Predicated region
            $region33: #{_lambda_.5} parent=31 // pred_check
              _
            $region34: #{_lambda_.5} parent=31 // pred_check_branch
              %146 = sbr.rel (0) target = $region36
            $region35: #{_lambda_.5} parent=31 // pred_region
              // Predicated region
              $region48: #{_lambda_.5} parent=35 // pred_check
                _
              $region49: #{_lambda_.5} parent=35 // pred_check_branch
                %192 = sbr.rel (0) target = $region51
              $region50: #{_lambda_.5} parent=35 // pred_region
                loop: start=0, step=1, limit=1
                $region52: #{_lambda_.5} parent=50 // loop_pre_header
                  _
                $region53: #{_lambda_.5} parent=50 // loop_header
                  %s194 = sphi 0, %s198
                  %p195 = scmp.ge.s32.totalorder %s194, 1
                  %s199 = sphi %s142, %s142
                  %s200 = sphi %s139, %s139
                $region54: #{_lambda_.5} parent=50 // loop_header_branch
                  %197 = sbr.rel (%p195) target = $region58
                $region55: #{_lambda_.5} parent=50 // loop_body
                  %v201 = vld [vmem:[%s199] sm:$0xff]
                  %202 = vst [vmem:[%s200] sm:$0xff] %v201
                  %v203 = vld [vmem:[%s199 + $0x8] sm:$0xff]
                  %204 = vst [vmem:[%s200 + $0x8] sm:$0xff] %v203
                  %v205 = vld [vmem:[%s199 + $0x10] sm:$0xff]
                  %206 = vst [vmem:[%s200 + $0x10] sm:$0xff] %v205
                  %v207 = vld [vmem:[%s199 + $0x18] sm:$0xff]
                  %208 = vst [vmem:[%s200 + $0x18] sm:$0xff] %v207
                  %v209 = vld [vmem:[%s199 + $0x20] sm:$0xff]
                  %210 = vst [vmem:[%s200 + $0x20] sm:$0xff] %v209
                  %v211 = vld [vmem:[%s199 + $0x28] sm:$0xff]
                  %212 = vst [vmem:[%s200 + $0x28] sm:$0xff] %v211
                  %v213 = vld [vmem:[%s199 + $0x30] sm:$0xff]
                  %214 = vst [vmem:[%s200 + $0x30] sm:$0xff] %v213
                  %v215 = vld [vmem:[%s199 + $0x38] sm:$0xff]
                  %216 = vst [vmem:[%s200 + $0x38] sm:$0xff] %v215
                  %v217 = vld [vmem:[%s199 + $0x80] sm:$0xff]
                  %218 = vst [vmem:[%s200 + $0x40] sm:$0xff] %v217
                  %v219 = vld [vmem:[%s199 + $0x88] sm:$0xff]
                  %220 = vst [vmem:[%s200 + $0x48] sm:$0xff] %v219
                  %v221 = vld [vmem:[%s199 + $0x90] sm:$0xff]
                  %222 = vst [vmem:[%s200 + $0x50] sm:$0xff] %v221
                  %v223 = vld [vmem:[%s199 + $0x98] sm:$0xff]
                  %224 = vst [vmem:[%s200 + $0x58] sm:$0xff] %v223
                  %v225 = vld [vmem:[%s199 + $0xa0] sm:$0xff]
                  %226 = vst [vmem:[%s200 + $0x60] sm:$0xff] %v225
                  %v227 = vld [vmem:[%s199 + $0xa8] sm:$0xff]
                  %228 = vst [vmem:[%s200 + $0x68] sm:$0xff] %v227
                  %v229 = vld [vmem:[%s199 + $0xb0] sm:$0xff]
                  %230 = vst [vmem:[%s200 + $0x70] sm:$0xff] %v229
                  %v231 = vld [vmem:[%s199 + $0xb8] sm:$0xff]
                  %232 = vst [vmem:[%s200 + $0x78] sm:$0xff] %v231
                $region56: #{_lambda_.5} parent=50 // loop_footer
                  %s198 = sadd.s32 1, %s194
                $region57: #{_lambda_.5} parent=50 // loop_footer_branch
                  %193 = sbr.rel target = $region53
                $region58: #{_lambda_.5} parent=50 // loop_exit
                  _
              $region51: #{_lambda_.5} parent=35 // pred_fallthru
                _
              // Predicated region
              $region59: #{_lambda_.5} parent=35 // pred_check
                _
              $region60: #{_lambda_.5} parent=35 // pred_check_branch
                %234 = sbr.rel target = $region62
              $region61: #{_lambda_.5} parent=35 // pred_region
                _
              $region62: #{_lambda_.5} parent=35 // pred_fallthru
                _
            $region36: #{_lambda_.5} parent=31 // pred_fallthru
              _
            // Predicated region
            $region37: #{_lambda_.5} parent=31 // pred_check
              _
            $region38: #{_lambda_.5} parent=31 // pred_check_branch
              %148 = sbr.rel target = $region40
            $region39: #{_lambda_.5} parent=31 // pred_region
              %s150 = ssub.s32 256, 1
              loop: start=0, step=1, limit=1
              $region41: #{_lambda_.5} parent=39 // loop_pre_header
                _
              $region42: #{_lambda_.5} parent=39 // loop_header
                %s152 = sphi 0, %s156
                %p153 = scmp.ge.s32.totalorder %s152, 1
                %s157 = sphi %s142, %s142
                %s158 = sphi %s139, %s139
              $region43: #{_lambda_.5} parent=39 // loop_header_branch
                %155 = sbr.rel (%p153) target = $region47
              $region44: #{_lambda_.5} parent=39 // loop_body
                %v159 = vld [vmem:[%s157] sm:%s150]
                %160 = vst [vmem:[%s158] sm:%s150] %v159
                %v161 = vld [vmem:[%s157 + $0x8] sm:%s150]
                %162 = vst [vmem:[%s158 + $0x8] sm:%s150] %v161
                %v163 = vld [vmem:[%s157 + $0x10] sm:%s150]
                %164 = vst [vmem:[%s158 + $0x10] sm:%s150] %v163
                %v165 = vld [vmem:[%s157 + $0x18] sm:%s150]
                %166 = vst [vmem:[%s158 + $0x18] sm:%s150] %v165
                %v167 = vld [vmem:[%s157 + $0x20] sm:%s150]
                %168 = vst [vmem:[%s158 + $0x20] sm:%s150] %v167
                %v169 = vld [vmem:[%s157 + $0x28] sm:%s150]
                %170 = vst [vmem:[%s158 + $0x28] sm:%s150] %v169
                %v171 = vld [vmem:[%s157 + $0x30] sm:%s150]
                %172 = vst [vmem:[%s158 + $0x30] sm:%s150] %v171
                %v173 = vld [vmem:[%s157 + $0x38] sm:%s150]
                %174 = vst [vmem:[%s158 + $0x38] sm:%s150] %v173
                %v175 = vld [vmem:[%s157 + $0x80] sm:%s150]
                %176 = vst [vmem:[%s158 + $0x40] sm:%s150] %v175
                %v177 = vld [vmem:[%s157 + $0x88] sm:%s150]
                %178 = vst [vmem:[%s158 + $0x48] sm:%s150] %v177
                %v179 = vld [vmem:[%s157 + $0x90] sm:%s150]
                %180 = vst [vmem:[%s158 + $0x50] sm:%s150] %v179
                %v181 = vld [vmem:[%s157 + $0x98] sm:%s150]
                %182 = vst [vmem:[%s158 + $0x58] sm:%s150] %v181
                %v183 = vld [vmem:[%s157 + $0xa0] sm:%s150]
                %184 = vst [vmem:[%s158 + $0x60] sm:%s150] %v183
                %v185 = vld [vmem:[%s157 + $0xa8] sm:%s150]
                %186 = vst [vmem:[%s158 + $0x68] sm:%s150] %v185
                %v187 = vld [vmem:[%s157 + $0xb0] sm:%s150]
                %188 = vst [vmem:[%s158 + $0x70] sm:%s150] %v187
                %v189 = vld [vmem:[%s157 + $0xb8] sm:%s150]
                %190 = vst [vmem:[%s158 + $0x78] sm:%s150] %v189
              $region45: #{_lambda_.5} parent=39 // loop_footer
                %s156 = sadd.s32 1, %s152
              $region46: #{_lambda_.5} parent=39 // loop_footer_branch
                %151 = sbr.rel target = $region42
              $region47: #{_lambda_.5} parent=39 // loop_exit
                _
            $region40: #{_lambda_.5} parent=31 // pred_fallthru
              _
          $region32: #{_lambda_.5} parent=27 // pred_fallthru
            _
          %235 = vnop
        $region28: #{_lambda_.5} parent=23 // pred_fallthru
          _
      $region24: #{_lambda_.5} parent=5 // pred_fallthru
        _
      %p236 = scmp.le.s32.totalorder 1, %s14
      %p237 = scmp.lt.s32.totalorder %s14, 3
      %p238 = pnand %p236, %p237
      %p239 = pneg %p238
      // Predicated region
      $region63: #{_lambda_.5} parent=5 // pred_check
        _
      $region64: #{_lambda_.5} parent=5 // pred_check_branch
        %241 = sbr.rel (%p238) target = $region66
      $region65: #{_lambda_.5} parent=5 // pred_region
        %s242 = ssub.s32 %s14, 1
        %s243 = sand.u32 %s27, 1
        %s244 = sand.u32 %s27, 1
        %s245 = smul.addr %s244, 128
        %s246 = scalar_lea.vmem [#allocation3], %s245
        // Predicated region
        $region67: #{_lambda_.5} parent=65 // pred_check
          %p247 = pneg %p40
        $region68: #{_lambda_.5} parent=65 // pred_check_branch
          %249 = sbr.rel (%p247) target = $region70
        $region69: #{_lambda_.5} parent=65 // pred_region
          _
        $region70: #{_lambda_.5} parent=65 // pred_fallthru
          _
        %s250 = sand.u32 %s27, 1
        %s251 = sand.u32 %s27, 1
        %s252 = smul.addr %s251, 128
        %s253 = scalar_lea.vmem [#allocation3], %s252
        %p254 = pneg %p40
        %p255 = pneg %p37
        %p256 = pneg %p61
        %p257 = pneg %p58
        %p258 = pneg %p82
        %p259 = pneg %p79
        %p260 = pneg %p108
        %p261 = pneg %p105
        %s262 = sand.u32 %s95, 1
        %s263 = scalar_lea.sflag [#allocation5], %s262
        %s264 = sand.u32 %s95, 1
        %s265 = smul.addr %s264, 8
        %s266 = scalar_lea.vmem [#allocation4], %s265
        %s267 = smul.u32 8, %s19
        %v268 = vld [vmem:[%s246] sm:$0xff]
        %v269 = vld [vmem:[%s246 + $0x8] sm:$0xff]
        %v270 = vld [vmem:[%s246 + $0x10] sm:$0xff]
        %v271 = vld [vmem:[%s246 + $0x18] sm:$0xff]
        %v272 = vld [vmem:[%s246 + $0x20] sm:$0xff]
        %v273 = vld [vmem:[%s246 + $0x28] sm:$0xff]
        %v274 = vld [vmem:[%s246 + $0x30] sm:$0xff]
        %v275 = vld [vmem:[%s246 + $0x38] sm:$0xff]
        %s276 = scalar_lea.vmem %s246, 64 [#allocation3]
        %v277 = vld [vmem:[%s276] sm:$0xff]
        %v278 = vld [vmem:[%s276 + $0x8] sm:$0xff]
        %v279 = vld [vmem:[%s276 + $0x10] sm:$0xff]
        %v280 = vld [vmem:[%s276 + $0x18] sm:$0xff]
        %v281 = vld [vmem:[%s276 + $0x20] sm:$0xff]
        %v282 = vld [vmem:[%s276 + $0x28] sm:$0xff]
        %v283 = vld [vmem:[%s276 + $0x30] sm:$0xff]
        %v284 = vld [vmem:[%s276 + $0x38] sm:$0xff]
        %v285 = vadd.f32 %v268, %v277
        %v286 = vadd.f32 %v269, %v278
        %v287 = vadd.f32 %v270, %v279
        %v288 = vadd.f32 %v271, %v280
        %v289 = vadd.f32 %v272, %v281
        %v290 = vadd.f32 %v273, %v282
        %v291 = vadd.f32 %v274, %v283
        %v292 = vadd.f32 %v275, %v284
        %v293 = vld [vmem:[%s1] sm:$0x1]
        %v295 = vlaneseq
        %v296 = vshrl.u32 %v295, 7
        %v297 = vsub.s32 0, %v296
        %v298 = vrot.slane %v293, %v297
        %v300 = vmul.f32 %v285, %v298
        %v301 = vmul.f32 %v286, %v298
        %v302 = vmul.f32 %v287, %v298
        %v303 = vmul.f32 %v288, %v298
        %v304 = vmul.f32 %v289, %v298
        %v305 = vmul.f32 %v290, %v298
        %v306 = vmul.f32 %v291, %v298
        %v307 = vmul.f32 %v292, %v298
        %vm308 = vcmask 261120
        %v309 = vsel %vm308, %v300, 0.0
        %310 = vadd.xlane.f32.xlu0 %v309
        %v311 = vpop.xlane.xlu0 %310
        %v312 = vsel %vm308, %v301, 0.0
        %313 = vadd.xlane.f32.xlu0 %v312
        %v314 = vpop.xlane.xlu0 %313
        %v315 = vsel %vm308, %v302, 0.0
        %316 = vadd.xlane.f32.xlu0 %v315
        %v317 = vpop.xlane.xlu0 %316
        %v318 = vsel %vm308, %v303, 0.0
        %319 = vadd.xlane.f32.xlu0 %v318
        %v320 = vpop.xlane.xlu0 %319
        %v321 = vsel %vm308, %v304, 0.0
        %322 = vadd.xlane.f32.xlu0 %v321
        %v323 = vpop.xlane.xlu0 %322
        %v324 = vsel %vm308, %v305, 0.0
        %325 = vadd.xlane.f32.xlu0 %v324
        %v326 = vpop.xlane.xlu0 %325
        %v327 = vsel %vm308, %v306, 0.0
        %328 = vadd.xlane.f32.xlu0 %v327
        %v329 = vpop.xlane.xlu0 %328
        %v330 = vsel %vm308, %v307, 0.0
        %331 = vadd.xlane.f32.xlu0 %v330
        %v332 = vpop.xlane.xlu0 %331
        %v333 = vld [vmem:[#allocation2] sm:$0x1]
        %v334 = vmul.f32 %v333, 2.0
        %v336 = vlaneseq
        %v337 = vshrl.u32 %v336, 7
        %v338 = vsub.s32 0, %v337
        %v339 = vrot.slane %v334, %v338
        %340 = vset.pattern.permute.xlu0 0
        %341 = vperm.xlu0 %340, %v339
        %v342 = vpop.permute.xlu0 %341
        %v344 = vadd.f32 %v311, %v342
        %v345 = vadd.f32 %v314, %v342
        %v346 = vadd.f32 %v317, %v342
        %v347 = vadd.f32 %v320, %v342
        %v348 = vadd.f32 %v323, %v342
        %v349 = vadd.f32 %v326, %v342
        %v350 = vadd.f32 %v329, %v342
        %v351 = vadd.f32 %v332, %v342
        %v360 = vlaneseq
        %v361 = vand.u32 %v360, 127
        %v362 = vlaneseq
        %v363 = vshrl.u32 %v362, 7
        %v364 = vsub.s32 %v361, %v363
        %v365 = vrot.slane %v344, %v364
        %v366 = vlaneseq
        %v367 = vshrl.u32 %v366, 7
        %v368 = vsub.s32 %v361, %v367
        %v369 = vrot.slane %v345, %v368
        %v370 = vlaneseq
        %v371 = vshrl.u32 %v370, 7
        %v372 = vsub.s32 %v361, %v371
        %v373 = vrot.slane %v346, %v372
        %v374 = vlaneseq
        %v375 = vshrl.u32 %v374, 7
        %v376 = vsub.s32 %v361, %v375
        %v377 = vrot.slane %v347, %v376
        %v378 = vlaneseq
        %v379 = vshrl.u32 %v378, 7
        %v380 = vsub.s32 %v361, %v379
        %v381 = vrot.slane %v348, %v380
        %v382 = vlaneseq
        %v383 = vshrl.u32 %v382, 7
        %v384 = vsub.s32 %v361, %v383
        %v385 = vrot.slane %v349, %v384
        %v386 = vlaneseq
        %v387 = vshrl.u32 %v386, 7
        %v388 = vsub.s32 %v361, %v387
        %v389 = vrot.slane %v350, %v388
        %v390 = vlaneseq
        %v391 = vshrl.u32 %v390, 7
        %v392 = vsub.s32 %v361, %v391
        %v393 = vrot.slane %v351, %v392
        %vm394 = vcmask 1041409
        %v395 = vsel %vm394, %v369, %v365
        %vm396 = vcmask 1042434
        %v397 = vsel %vm396, %v373, %v395
        %vm398 = vcmask 1043459
        %v399 = vsel %vm398, %v377, %v397
        %vm400 = vcmask 1044484
        %v401 = vsel %vm400, %v381, %v399
        %vm402 = vcmask 1045509
        %v403 = vsel %vm402, %v385, %v401
        %vm404 = vcmask 1046534
        %v405 = vsel %vm404, %v389, %v403
        %vm406 = vcmask 1047559
        %v407 = vsel %vm406, %v393, %v405
        %vm409 = vcmask 64512
        %410 = vst.msk [vmem:[%s266] sm:$0xff] %vm409, %v407
        %s411 = sand.u32 %s95, 1
        %s412 = scalar_lea.sflag [#allocation5], %s411
        %s413 = sand.u32 %s95, 1
        %s414 = smul.addr %s413, 8
        %s415 = scalar_lea.vmem [#allocation4], %s414
        // Predicated region
        $region71: #{_lambda_.5} parent=65 // pred_check
          %p416 = pneg %p105
        $region72: #{_lambda_.5} parent=65 // pred_check_branch
          %418 = sbr.rel (%p416) target = $region74
        $region73: #{_lambda_.5} parent=65 // pred_region
          %s420 = ssub.s32 128, 128
          %421 = vsyncadd %s412, %s420
          %s422 = smul.addr %s19, 128
          %s423 = scalar_lea.hbm %s3, %s422
          %s425 = sshll.u32 %s415, 4
          %s426 = int_to_ptr.vmem [resolvable:$true] %s425
          %428 = dma.vmem_to_hbm [thread:$0]  %s426, 128, %s423, %s412
        $region74: #{_lambda_.5} parent=65 // pred_fallthru
          _
      $region66: #{_lambda_.5} parent=5 // pred_fallthru
        _
      %p429 = scmp.le.s32.totalorder 2, %s14
      // Predicated region
      $region75: #{_lambda_.5} parent=5 // pred_check
        %p430 = pneg %p429
      $region76: #{_lambda_.5} parent=5 // pred_check_branch
        %432 = sbr.rel (%p430) target = $region78
      $region77: #{_lambda_.5} parent=5 // pred_region
        %s433 = ssub.s32 %s14, 2
        // Predicated region
        $region79: #{_lambda_.5} parent=77 // pred_check
          %p434 = pneg %p111
        $region80: #{_lambda_.5} parent=77 // pred_check_branch
          %436 = sbr.rel (%p434) target = $region82
        $region81: #{_lambda_.5} parent=77 // pred_region
          %s437 = sand.u32 %s96, 1
          %s438 = scalar_lea.sflag [#allocation5], %s437
          %s439 = sand.u32 %s96, 1
          %s440 = smul.addr %s439, 8
          %s441 = scalar_lea.vmem [#allocation4], %s440
          %442 = dma.done %s438, 128
        $region82: #{_lambda_.5} parent=77 // pred_fallthru
          _
      $region78: #{_lambda_.5} parent=5 // pred_fallthru
        _
    $region6: #{_lambda_.5} parent=1 // loop_footer
      %s18 = sadd.s32 1, %s14
    $region7: #{_lambda_.5} parent=1 // loop_footer_branch
      %13 = sbr.rel target = $region3
    $region8: #{_lambda_.5} parent=1 // loop_exit
      _
    %443 = vsyncpa [#allocation5], 1
    %s444 = scalar_lea.sflag [#allocation5], 1
    %445 = vsyncpa %s444, 1

// kernel: _lambda_.3
$region0: #{_lambda_.3}
  #allocation0 [shape = 'u32[]', space=smem, size = 0x4, offset = 0x4, fixed_abs, tag = 'smem constant byte address 0x4 - core index']
  #allocation1 [shape = 'u32[144,128]{1,0:T(1,128)}', space=vmem, size = 0x12000, scoped, tag = 'internal scratch']
  %s0 = inlined_call_operand.vmem [shape: f32[2,16,8,32], index: 0, kind: input, shape index: {}]
  %s1 = inlined_call_operand.vmem [shape: f32[8,8], index: 1, kind: input, shape index: {}]
  %s2 = inlined_call_operand.vmem [shape: bf16[2,32,96], index: 2, kind: input, shape index: {}]
  %s3 = inlined_call_operand.vmem [shape: f32[2,1,96], index: 3, kind: input, shape index: {}]
  %s4 = inlined_call_operand.vmem [shape: bf16[2,32,32], index: 4, kind: input, shape index: {}]
  %s5 = inlined_call_operand.vmem [shape: f32[2,1,32], index: 5, kind: input, shape index: {}]
  %s6 = inlined_call_operand.vmem [shape: bf16[2,32,128], index: 6, kind: input, shape index: {}]
  %s7 = inlined_call_operand.vmem [shape: f32[2,1,128], index: 7, kind: input, shape index: {}]
  %s8 = inlined_call_operand.vmem [shape: bf16[2,128,32], index: 8, kind: input, shape index: {}]
  %s9 = inlined_call_operand.vmem [shape: f32[2,1,32], index: 9, kind: input, shape index: {}]
  %s10 = inlined_call_operand.vmem [shape: f32[2,16,8,32], index: 10, kind: output, shape index: {}]
  %s11 = sld [smem:[#allocation0]]
  $region73: #{_lambda_.3} parent=0
    _
  %s13 = ssub.s32 1, %s11
  %s14 = scalar_select 0, %s13, %s11
  loop: start=0, step=1, limit=6
  $region2: #{_lambda_.3} parent=0 // loop_pre_header
    _
  $region3: #{_lambda_.3} parent=0 // loop_header
    %s16 = sphi 0, %s20
    %p17 = scmp.ge.s32.totalorder %s16, 6
    %s23 = sphi 0, %s35
    %s24 = sphi 0, %s31
    %s25 = sphi 0, %s23
    %s26 = sphi 0, %s24
    %s27 = sphi 0, %s25
    %s28 = sphi 0, %s26
    %s40 = sphi 0, %s42
    %s43 = sphi 0, %s40
    %s44 = sphi 0, %s43
    %s60 = sphi 0, %s44
    %s64 = sphi 0, %s64
    %s66 = sphi 0, %s64
    %s67 = sphi 0, %s66
    %s81 = sphi 0, %s67
    %s87 = sphi 0, %s89
    %s90 = sphi 0, %s87
    %s91 = sphi 0, %s90
    %s107 = sphi 0, %s91
    %s113 = sphi 0, %s115
    %s116 = sphi 0, %s113
    %s117 = sphi 0, %s116
    %s133 = sphi 0, %s117
    %s139 = sphi 0, %s141
    %s142 = sphi 0, %s139
    %s143 = sphi 0, %s142
    %s159 = sphi 0, %s143
    %s165 = sphi 0, %s167
    %s168 = sphi 0, %s165
    %s169 = sphi 0, %s168
    %s185 = sphi 0, %s169
    %s191 = sphi 0, %s193
    %s194 = sphi 0, %s191
    %s195 = sphi 0, %s194
    %s211 = sphi 0, %s195
    %s217 = sphi 0, %s219
    %s220 = sphi 0, %s217
    %s221 = sphi 0, %s220
    %s237 = sphi 0, %s221
    %s243 = sphi 0, %s245
    %s246 = sphi 0, %s243
    %s247 = sphi 0, %s246
    %s263 = sphi 0, %s247
    %s269 = sphi 0, %s271
    %s272 = sphi 0, %s269
    %s273 = sphi 0, %s272
    %s289 = sphi 0, %s273
    %s297 = sphi 0, %s299
    %s300 = sphi 0, %s297
    %s301 = sphi 0, %s300
    %s317 = sphi 0, %s301
  $region4: #{_lambda_.3} parent=0 // loop_header_branch
    %19 = sbr.rel (%p17) target = $region8
  $region5: #{_lambda_.3} parent=0 // loop_body
    %s21 = ssub.s32 %s16, 1
    %s22 = ssub.s32 %s16, 2
    %s29 = sadd.s32 1, %s24
    %p30 = scmp.ge.s32.totalorder %s29, 2
    %s31 = scalar_select %p30, 0, %s29
    %s32 = sadd.s32 1, %s23
    %s33 = scalar_select %p30, %s32, %s23
    %p34 = scmp.ge.s32.totalorder %s33, 2
    %s35 = scalar_select %p34, 0, %s33
    %s36 = ssub.s32 %s23, %s35
    %s37 = ssub.s32 %s24, %s31
    %s38 = sor.u32 %s36, %s37
    %p39 = scmp.eq.s32.totalorder %s38, 0
    %s41 = sadd.s32 %s40, 1
    %s42 = scalar_select %p39, %s40, %s41
    %p45 = pneg %p39
    %p46 = scmp.eq.s32.totalorder %s16, 3
    %p47 = por %p45, %p46
    %p48 = scmp.ne.s32.totalorder %s40, %s43
    %p49 = scmp.eq.s32.totalorder %s16, 0
    %p50 = por %p48, %p49
    %p51 = scmp.ne.s32.totalorder %s40, %s43
    %p52 = scmp.eq.s32.totalorder %s21, 3
    %p53 = por %p51, %p52
    %p54 = scmp.ne.s32.totalorder %s43, %s44
    %p55 = scmp.eq.s32.totalorder %s21, 0
    %p56 = por %p54, %p55
    %p57 = scmp.ne.s32.totalorder %s43, %s44
    %p58 = scmp.eq.s32.totalorder %s22, 3
    %p59 = por %p57, %p58
    %p61 = scmp.ne.s32.totalorder %s44, %s60
    %p62 = scmp.eq.s32.totalorder %s22, 0
    %p63 = por %p61, %p62
    %s65 = sadd.s32 %s64, 1
    %p68 = scmp.eq.s32.totalorder %s16, 3
    %p69 = scmp.ne.s32.totalorder %s64, %s66
    %p70 = scmp.eq.s32.totalorder %s16, 0
    %p71 = por %p69, %p70
    %p72 = scmp.ne.s32.totalorder %s64, %s66
    %p73 = scmp.eq.s32.totalorder %s21, 3
    %p74 = por %p72, %p73
    %p75 = scmp.ne.s32.totalorder %s66, %s67
    %p76 = scmp.eq.s32.totalorder %s21, 0
    %p77 = por %p75, %p76
    %p78 = scmp.ne.s32.totalorder %s66, %s67
    %p79 = scmp.eq.s32.totalorder %s22, 3
    %p80 = por %p78, %p79
    %p82 = scmp.ne.s32.totalorder %s67, %s81
    %p83 = scmp.eq.s32.totalorder %s22, 0
    %p84 = por %p82, %p83
    %s85 = ssub.s32 %s23, %s35
    %p86 = scmp.eq.s32.totalorder %s85, 0
    %s88 = sadd.s32 %s87, 1
    %s89 = scalar_select %p86, %s87, %s88
    %p92 = pneg %p86
    %p93 = scmp.eq.s32.totalorder %s16, 3
    %p94 = por %p92, %p93
    %p95 = scmp.ne.s32.totalorder %s87, %s90
    %p96 = scmp.eq.s32.totalorder %s16, 0
    %p97 = por %p95, %p96
    %p98 = scmp.ne.s32.totalorder %s87, %s90
    %p99 = scmp.eq.s32.totalorder %s21, 3
    %p100 = por %p98, %p99
    %p101 = scmp.ne.s32.totalorder %s90, %s91
    %p102 = scmp.eq.s32.totalorder %s21, 0
    %p103 = por %p101, %p102
    %p104 = scmp.ne.s32.totalorder %s90, %s91
    %p105 = scmp.eq.s32.totalorder %s22, 3
    %p106 = por %p104, %p105
    %p108 = scmp.ne.s32.totalorder %s91, %s107
    %p109 = scmp.eq.s32.totalorder %s22, 0
    %p110 = por %p108, %p109
    %s111 = ssub.s32 %s23, %s35
    %p112 = scmp.eq.s32.totalorder %s111, 0
    %s114 = sadd.s32 %s113, 1
    %s115 = scalar_select %p112, %s113, %s114
    %p118 = pneg %p112
    %p119 = scmp.eq.s32.totalorder %s16, 3
    %p120 = por %p118, %p119
    %p121 = scmp.ne.s32.totalorder %s113, %s116
    %p122 = scmp.eq.s32.totalorder %s16, 0
    %p123 = por %p121, %p122
    %p124 = scmp.ne.s32.totalorder %s113, %s116
    %p125 = scmp.eq.s32.totalorder %s21, 3
    %p126 = por %p124, %p125
    %p127 = scmp.ne.s32.totalorder %s116, %s117
    %p128 = scmp.eq.s32.totalorder %s21, 0
    %p129 = por %p127, %p128
    %p130 = scmp.ne.s32.totalorder %s116, %s117
    %p131 = scmp.eq.s32.totalorder %s22, 3
    %p132 = por %p130, %p131
    %p134 = scmp.ne.s32.totalorder %s117, %s133
    %p135 = scmp.eq.s32.totalorder %s22, 0
    %p136 = por %p134, %p135
    %s137 = ssub.s32 %s23, %s35
    %p138 = scmp.eq.s32.totalorder %s137, 0
    %s140 = sadd.s32 %s139, 1
    %s141 = scalar_select %p138, %s139, %s140
    %p144 = pneg %p138
    %p145 = scmp.eq.s32.totalorder %s16, 3
    %p146 = por %p144, %p145
    %p147 = scmp.ne.s32.totalorder %s139, %s142
    %p148 = scmp.eq.s32.totalorder %s16, 0
    %p149 = por %p147, %p148
    %p150 = scmp.ne.s32.totalorder %s139, %s142
    %p151 = scmp.eq.s32.totalorder %s21, 3
    %p152 = por %p150, %p151
    %p153 = scmp.ne.s32.totalorder %s142, %s143
    %p154 = scmp.eq.s32.totalorder %s21, 0
    %p155 = por %p153, %p154
    %p156 = scmp.ne.s32.totalorder %s142, %s143
    %p157 = scmp.eq.s32.totalorder %s22, 3
    %p158 = por %p156, %p157
    %p160 = scmp.ne.s32.totalorder %s143, %s159
    %p161 = scmp.eq.s32.totalorder %s22, 0
    %p162 = por %p160, %p161
    %s163 = ssub.s32 %s23, %s35
    %p164 = scmp.eq.s32.totalorder %s163, 0
    %s166 = sadd.s32 %s165, 1
    %s167 = scalar_select %p164, %s165, %s166
    %p170 = pneg %p164
    %p171 = scmp.eq.s32.totalorder %s16, 3
    %p172 = por %p170, %p171
    %p173 = scmp.ne.s32.totalorder %s165, %s168
    %p174 = scmp.eq.s32.totalorder %s16, 0
    %p175 = por %p173, %p174
    %p176 = scmp.ne.s32.totalorder %s165, %s168
    %p177 = scmp.eq.s32.totalorder %s21, 3
    %p178 = por %p176, %p177
    %p179 = scmp.ne.s32.totalorder %s168, %s169
    %p180 = scmp.eq.s32.totalorder %s21, 0
    %p181 = por %p179, %p180
    %p182 = scmp.ne.s32.totalorder %s168, %s169
    %p183 = scmp.eq.s32.totalorder %s22, 3
    %p184 = por %p182, %p183
    %p186 = scmp.ne.s32.totalorder %s169, %s185
    %p187 = scmp.eq.s32.totalorder %s22, 0
    %p188 = por %p186, %p187
    %s189 = ssub.s32 %s23, %s35
    %p190 = scmp.eq.s32.totalorder %s189, 0
    %s192 = sadd.s32 %s191, 1
    %s193 = scalar_select %p190, %s191, %s192
    %p196 = pneg %p190
    %p197 = scmp.eq.s32.totalorder %s16, 3
    %p198 = por %p196, %p197
    %p199 = scmp.ne.s32.totalorder %s191, %s194
    %p200 = scmp.eq.s32.totalorder %s16, 0
    %p201 = por %p199, %p200
    %p202 = scmp.ne.s32.totalorder %s191, %s194
    %p203 = scmp.eq.s32.totalorder %s21, 3
    %p204 = por %p202, %p203
    %p205 = scmp.ne.s32.totalorder %s194, %s195
    %p206 = scmp.eq.s32.totalorder %s21, 0
    %p207 = por %p205, %p206
    %p208 = scmp.ne.s32.totalorder %s194, %s195
    %p209 = scmp.eq.s32.totalorder %s22, 3
    %p210 = por %p208, %p209
    %p212 = scmp.ne.s32.totalorder %s195, %s211
    %p213 = scmp.eq.s32.totalorder %s22, 0
    %p214 = por %p212, %p213
    %s215 = ssub.s32 %s23, %s35
    %p216 = scmp.eq.s32.totalorder %s215, 0
    %s218 = sadd.s32 %s217, 1
    %s219 = scalar_select %p216, %s217, %s218
    %p222 = pneg %p216
    %p223 = scmp.eq.s32.totalorder %s16, 3
    %p224 = por %p222, %p223
    %p225 = scmp.ne.s32.totalorder %s217, %s220
    %p226 = scmp.eq.s32.totalorder %s16, 0
    %p227 = por %p225, %p226
    %p228 = scmp.ne.s32.totalorder %s217, %s220
    %p229 = scmp.eq.s32.totalorder %s21, 3
    %p230 = por %p228, %p229
    %p231 = scmp.ne.s32.totalorder %s220, %s221
    %p232 = scmp.eq.s32.totalorder %s21, 0
    %p233 = por %p231, %p232
    %p234 = scmp.ne.s32.totalorder %s220, %s221
    %p235 = scmp.eq.s32.totalorder %s22, 3
    %p236 = por %p234, %p235
    %p238 = scmp.ne.s32.totalorder %s221, %s237
    %p239 = scmp.eq.s32.totalorder %s22, 0
    %p240 = por %p238, %p239
    %s241 = ssub.s32 %s23, %s35
    %p242 = scmp.eq.s32.totalorder %s241, 0
    %s244 = sadd.s32 %s243, 1
    %s245 = scalar_select %p242, %s243, %s244
    %p248 = pneg %p242
    %p249 = scmp.eq.s32.totalorder %s16, 3
    %p250 = por %p248, %p249
    %p251 = scmp.ne.s32.totalorder %s243, %s246
    %p252 = scmp.eq.s32.totalorder %s16, 0
    %p253 = por %p251, %p252
    %p254 = scmp.ne.s32.totalorder %s243, %s246
    %p255 = scmp.eq.s32.totalorder %s21, 3
    %p256 = por %p254, %p255
    %p257 = scmp.ne.s32.totalorder %s246, %s247
    %p258 = scmp.eq.s32.totalorder %s21, 0
    %p259 = por %p257, %p258
    %p260 = scmp.ne.s32.totalorder %s246, %s247
    %p261 = scmp.eq.s32.totalorder %s22, 3
    %p262 = por %p260, %p261
    %p264 = scmp.ne.s32.totalorder %s247, %s263
    %p265 = scmp.eq.s32.totalorder %s22, 0
    %p266 = por %p264, %p265
    %s267 = ssub.s32 %s23, %s35
    %p268 = scmp.eq.s32.totalorder %s267, 0
    %s270 = sadd.s32 %s269, 1
    %s271 = scalar_select %p268, %s269, %s270
    %p274 = pneg %p268
    %p275 = scmp.eq.s32.totalorder %s16, 3
    %p276 = por %p274, %p275
    %p277 = scmp.ne.s32.totalorder %s269, %s272
    %p278 = scmp.eq.s32.totalorder %s16, 0
    %p279 = por %p277, %p278
    %p280 = scmp.ne.s32.totalorder %s269, %s272
    %p281 = scmp.eq.s32.totalorder %s21, 3
    %p282 = por %p280, %p281
    %p283 = scmp.ne.s32.totalorder %s272, %s273
    %p284 = scmp.eq.s32.totalorder %s21, 0
    %p285 = por %p283, %p284
    %p286 = scmp.ne.s32.totalorder %s272, %s273
    %p287 = scmp.eq.s32.totalorder %s22, 3
    %p288 = por %p286, %p287
    %p290 = scmp.ne.s32.totalorder %s273, %s289
    %p291 = scmp.eq.s32.totalorder %s22, 0
    %p292 = por %p290, %p291
    %s293 = ssub.s32 %s23, %s35
    %s294 = ssub.s32 %s24, %s31
    %s295 = sor.u32 %s293, %s294
    %p296 = scmp.eq.s32.totalorder %s295, 0
    %s298 = sadd.s32 %s297, 1
    %s299 = scalar_select %p296, %s297, %s298
    %p302 = pneg %p296
    %p303 = scmp.eq.s32.totalorder %s16, 3
    %p304 = por %p302, %p303
    %p305 = scmp.ne.s32.totalorder %s297, %s300
    %p306 = scmp.eq.s32.totalorder %s16, 0
    %p307 = por %p305, %p306
    %p308 = scmp.ne.s32.totalorder %s297, %s300
    %p309 = scmp.eq.s32.totalorder %s21, 3
    %p310 = por %p308, %p309
    %p311 = scmp.ne.s32.totalorder %s300, %s301
    %p312 = scmp.eq.s32.totalorder %s21, 0
    %p313 = por %p311, %p312
    %p314 = scmp.ne.s32.totalorder %s300, %s301
    %p315 = scmp.eq.s32.totalorder %s22, 3
    %p316 = por %p314, %p315
    %p318 = scmp.ne.s32.totalorder %s301, %s317
    %p319 = scmp.eq.s32.totalorder %s22, 0
    %p320 = por %p318, %p319
    %p321 = scmp.le.s32.totalorder 1, %s16
    %p322 = scmp.lt.s32.totalorder %s16, 5
    %p323 = pnand %p321, %p322
    %p324 = pneg %p323
    // Predicated region
    $region9: #{_lambda_.3} parent=5 // pred_check
      _
    $region10: #{_lambda_.3} parent=5 // pred_check_branch
      %326 = sbr.rel (%p323) target = $region12
    $region11: #{_lambda_.3} parent=5 // pred_region
      %s327 = ssub.s32 %s16, 1
      // Predicated region
      $region13: #{_lambda_.3} parent=11 // pred_check
        %p328 = pneg %p77
      $region14: #{_lambda_.3} parent=11 // pred_check_branch
        %330 = sbr.rel (%p328) target = $region16
      $region15: #{_lambda_.3} parent=11 // pred_region
        _
      $region16: #{_lambda_.3} parent=11 // pred_fallthru
        _
    $region12: #{_lambda_.3} parent=5 // pred_fallthru
      _
    %p331 = scmp.lt.s32.totalorder %s16, 4
    // Predicated region
    $region17: #{_lambda_.3} parent=5 // pred_check
      %p332 = pneg %p331
    $region18: #{_lambda_.3} parent=5 // pred_check_branch
      %334 = sbr.rel (%p332) target = $region20
    $region19: #{_lambda_.3} parent=5 // pred_region
      // Predicated region
      $region21: #{_lambda_.3} parent=19 // pred_check
        %p335 = pneg %p50
      $region22: #{_lambda_.3} parent=19 // pred_check_branch
        %337 = sbr.rel (%p335) target = $region24
      $region23: #{_lambda_.3} parent=19 // pred_region
        %s338 = smul.u32 8, %s24
        %p339 = scmp.lt.s32.totalorder %s23, 1
        %s340 = scalar_select %p339, %s23, 1
        %p341 = scmp.lt.s32.totalorder %s338, 15
        %s342 = scalar_select %p341, %s338, 15
        %s343 = smul.addr %s340, 16
        %s344 = sadd.s32 %s342, %s343
        %s345 = smul.addr %s344, 8
        %s346 = scalar_lea.vmem %s0, %s345
        %s347 = smul.u32 8, %s24
      $region24: #{_lambda_.3} parent=19 // pred_fallthru
        _
      // Predicated region
      $region25: #{_lambda_.3} parent=19 // pred_check
        %p348 = pneg %p97
      $region26: #{_lambda_.3} parent=19 // pred_check_branch
        %350 = sbr.rel (%p348) target = $region28
      $region27: #{_lambda_.3} parent=19 // pred_region
        %p351 = scmp.lt.s32.totalorder %s23, 1
        %s352 = scalar_select %p351, %s23, 1
        %s353 = smul.addr %s352, 4
        %s354 = smul.addr %s353, 4
        %s355 = scalar_lea.vmem %s2, %s354
      $region28: #{_lambda_.3} parent=19 // pred_fallthru
        _
      // Predicated region
      $region29: #{_lambda_.3} parent=19 // pred_check
        %p356 = pneg %p123
      $region30: #{_lambda_.3} parent=19 // pred_check_branch
        %358 = sbr.rel (%p356) target = $region32
      $region31: #{_lambda_.3} parent=19 // pred_region
        %p359 = scmp.lt.s32.totalorder %s23, 1
        %s360 = scalar_select %p359, %s23, 1
        %s361 = scalar_lea.vmem %s3, %s360
      $region32: #{_lambda_.3} parent=19 // pred_fallthru
        _
      // Predicated region
      $region33: #{_lambda_.3} parent=19 // pred_check
        %p362 = pneg %p149
      $region34: #{_lambda_.3} parent=19 // pred_check_branch
        %364 = sbr.rel (%p362) target = $region36
      $region35: #{_lambda_.3} parent=19 // pred_region
        %p365 = scmp.lt.s32.totalorder %s23, 1
        %s366 = scalar_select %p365, %s23, 1
        %s367 = smul.addr %s366, 4
        %s368 = smul.addr %s367, 4
        %s369 = scalar_lea.vmem %s4, %s368
      $region36: #{_lambda_.3} parent=19 // pred_fallthru
        _
      // Predicated region
      $region37: #{_lambda_.3} parent=19 // pred_check
        %p370 = pneg %p175
      $region38: #{_lambda_.3} parent=19 // pred_check_branch
        %372 = sbr.rel (%p370) target = $region40
      $region39: #{_lambda_.3} parent=19 // pred_region
        %p373 = scmp.lt.s32.totalorder %s23, 1
        %s374 = scalar_select %p373, %s23, 1
        %s375 = scalar_lea.vmem %s5, %s374
      $region40: #{_lambda_.3} parent=19 // pred_fallthru
        _
      // Predicated region
      $region41: #{_lambda_.3} parent=19 // pred_check
        %p376 = pneg %p201
      $region42: #{_lambda_.3} parent=19 // pred_check_branch
        %378 = sbr.rel (%p376) target = $region44
      $region43: #{_lambda_.3} parent=19 // pred_region
        %p379 = scmp.lt.s32.totalorder %s23, 1
        %s380 = scalar_select %p379, %s23, 1
        %s381 = smul.addr %s380, 4
        %s382 = smul.addr %s381, 4
        %s383 = scalar_lea.vmem %s6, %s382
      $region44: #{_lambda_.3} parent=19 // pred_fallthru
        _
      // Predicated region
      $region45: #{_lambda_.3} parent=19 // pred_check
        %p384 = pneg %p227
      $region46: #{_lambda_.3} parent=19 // pred_check_branch
        %386 = sbr.rel (%p384) target = $region48
      $region47: #{_lambda_.3} parent=19 // pred_region
        %p387 = scmp.lt.s32.totalorder %s23, 1
        %s388 = scalar_select %p387, %s23, 1
        %s389 = scalar_lea.vmem %s7, %s388
      $region48: #{_lambda_.3} parent=19 // pred_fallthru
        _
      // Predicated region
      $region49: #{_lambda_.3} parent=19 // pred_check
        %p390 = pneg %p253
      $region50: #{_lambda_.3} parent=19 // pred_check_branch
        %392 = sbr.rel (%p390) target = $region52
      $region51: #{_lambda_.3} parent=19 // pred_region
        %p393 = scmp.lt.s32.totalorder %s23, 1
        %s394 = scalar_select %p393, %s23, 1
        %s395 = smul.addr %s394, 16
        %s396 = smul.addr %s395, 4
        %s397 = scalar_lea.vmem %s8, %s396
      $region52: #{_lambda_.3} parent=19 // pred_fallthru
        _
      // Predicated region
      $region53: #{_lambda_.3} parent=19 // pred_check
        %p398 = pneg %p279
      $region54: #{_lambda_.3} parent=19 // pred_check_branch
        %400 = sbr.rel (%p398) target = $region56
      $region55: #{_lambda_.3} parent=19 // pred_region
        %p401 = scmp.lt.s32.totalorder %s23, 1
        %s402 = scalar_select %p401, %s23, 1
        %s403 = scalar_lea.vmem %s9, %s402
      $region56: #{_lambda_.3} parent=19 // pred_fallthru
        _
    $region20: #{_lambda_.3} parent=5 // pred_fallthru
      _
    %p404 = scmp.le.s32.totalorder 1, %s16
    %p405 = scmp.lt.s32.totalorder %s16, 5
    %p406 = pnand %p404, %p405
    %p407 = pneg %p406
    // Predicated region
    $region57: #{_lambda_.3} parent=5 // pred_check
      _
    $region58: #{_lambda_.3} parent=5 // pred_check_branch
      %409 = sbr.rel (%p406) target = $region60
    $region59: #{_lambda_.3} parent=5 // pred_region
      %s410 = ssub.s32 %s16, 1
      %s411 = smul.u32 8, %s26
      %p412 = scmp.lt.s32.totalorder %s25, 1
      %s413 = scalar_select %p412, %s25, 1
      %p414 = scmp.lt.s32.totalorder %s411, 15
      %s415 = scalar_select %p414, %s411, 15
      %s416 = smul.addr %s413, 16
      %s417 = sadd.s32 %s415, %s416
      %s418 = smul.addr %s417, 8
      %s419 = scalar_lea.vmem %s0, %s418
      %p420 = pneg %p56
      %p421 = pneg %p53
      %p422 = pneg %p77
      %p423 = pneg %p74
      %p424 = scmp.lt.s32.totalorder %s25, 1
      %s425 = scalar_select %p424, %s25, 1
      %s426 = smul.addr %s425, 4
      %s427 = smul.addr %s426, 4
      %s428 = scalar_lea.vmem %s2, %s427
      %p429 = pneg %p103
      %p430 = pneg %p100
      %p431 = scmp.lt.s32.totalorder %s25, 1
      %s432 = scalar_select %p431, %s25, 1
      %s433 = scalar_lea.vmem %s3, %s432
      %p434 = pneg %p129
      %p435 = pneg %p126
      %p436 = scmp.lt.s32.totalorder %s25, 1
      %s437 = scalar_select %p436, %s25, 1
      %s438 = smul.addr %s437, 4
      %s439 = smul.addr %s438, 4
      %s440 = scalar_lea.vmem %s4, %s439
      %p441 = pneg %p155
      %p442 = pneg %p152
      %p443 = scmp.lt.s32.totalorder %s25, 1
      %s444 = scalar_select %p443, %s25, 1
      %s445 = scalar_lea.vmem %s5, %s444
      %p446 = pneg %p181
      %p447 = pneg %p178
      %p448 = scmp.lt.s32.totalorder %s25, 1
      %s449 = scalar_select %p448, %s25, 1
      %s450 = smul.addr %s449, 4
      %s451 = smul.addr %s450, 4
      %s452 = scalar_lea.vmem %s6, %s451
      %p453 = pneg %p207
      %p454 = pneg %p204
      %p455 = scmp.lt.s32.totalorder %s25, 1
      %s456 = scalar_select %p455, %s25, 1
      %s457 = scalar_lea.vmem %s7, %s456
      %p458 = pneg %p233
      %p459 = pneg %p230
      %p460 = scmp.lt.s32.totalorder %s25, 1
      %s461 = scalar_select %p460, %s25, 1
      %s462 = smul.addr %s461, 16
      %s463 = smul.addr %s462, 4
      %s464 = scalar_lea.vmem %s8, %s463
      %p465 = pneg %p259
      %p466 = pneg %p256
      %p467 = scmp.lt.s32.totalorder %s25, 1
      %s468 = scalar_select %p467, %s25, 1
      %s469 = scalar_lea.vmem %s9, %s468
      %p470 = pneg %p285
      %p471 = pneg %p282
      %p472 = pneg %p313
      %p473 = pneg %p310
      %s474 = smul.u32 8, %s26
      %p475 = scmp.lt.s32.totalorder %s25, 1
      %s476 = scalar_select %p475, %s25, 1
      %p477 = scmp.lt.s32.totalorder %s474, 15
      %s478 = scalar_select %p477, %s474, 15
      %s479 = smul.addr %s476, 16
      %s480 = sadd.s32 %s478, %s479
      %s481 = smul.addr %s480, 8
      %s482 = scalar_lea.vmem %s10, %s481
      %s483 = smul.u32 8, %s26
      %p484 = scmp.lt.s32.totalorder %s25, 1
      %s485 = scalar_select %p484, %s25, 1
      %p486 = scmp.lt.s32.totalorder %s483, 15
      %s487 = scalar_select %p486, %s483, 15
      %s488 = smul.addr %s485, 16
      %s489 = sadd.s32 %s487, %s488
      %s490 = smul.addr %s489, 8
      %s491 = scalar_lea.vmem %s0, %s490
      %s492 = smul.u32 8, %s26
      %p493 = scmp.lt.s32.totalorder %s25, 1
      %s494 = scalar_select %p493, %s25, 1
      %s495 = smul.addr %s494, 4
      %s496 = smul.addr %s495, 4
      %s497 = scalar_lea.vmem %s2, %s496
      %p498 = scmp.lt.s32.totalorder %s25, 1
      %s499 = scalar_select %p498, %s25, 1
      %s500 = scalar_lea.vmem %s3, %s499
      %p501 = scmp.lt.s32.totalorder %s25, 1
      %s502 = scalar_select %p501, %s25, 1
      %s503 = smul.addr %s502, 4
      %s504 = smul.addr %s503, 4
      %s505 = scalar_lea.vmem %s4, %s504
      %p506 = scmp.lt.s32.totalorder %s25, 1
      %s507 = scalar_select %p506, %s25, 1
      %s508 = scalar_lea.vmem %s5, %s507
      %p509 = scmp.lt.s32.totalorder %s25, 1
      %s510 = scalar_select %p509, %s25, 1
      %s511 = smul.addr %s510, 4
      %s512 = smul.addr %s511, 4
      %s513 = scalar_lea.vmem %s6, %s512
      %p514 = scmp.lt.s32.totalorder %s25, 1
      %s515 = scalar_select %p514, %s25, 1
      %s516 = scalar_lea.vmem %s7, %s515
      %p517 = scmp.lt.s32.totalorder %s25, 1
      %s518 = scalar_select %p517, %s25, 1
      %s519 = smul.addr %s518, 16
      %s520 = smul.addr %s519, 4
      %s521 = scalar_lea.vmem %s8, %s520
      %p522 = scmp.lt.s32.totalorder %s25, 1
      %s523 = scalar_select %p522, %s25, 1
      %s524 = scalar_lea.vmem %s9, %s523
      %s525 = smul.u32 8, %s26
      %p526 = scmp.lt.s32.totalorder %s25, 1
      %s527 = scalar_select %p526, %s25, 1
      %p528 = scmp.lt.s32.totalorder %s525, 15
      %s529 = scalar_select %p528, %s525, 15
      %s530 = smul.addr %s527, 16
      %s531 = sadd.s32 %s529, %s530
      %s532 = smul.addr %s531, 8
      %s533 = scalar_lea.vmem %s10, %s532
      %s534 = smul.u32 8, %s26
      %v536 = vld [vmem:[%s491] sm:$0xff]
      %v537 = vld [vmem:[%s491 + $0x8] sm:$0xff]
      %v538 = vld [vmem:[%s491 + $0x10] sm:$0xff]
      %v539 = vld [vmem:[%s491 + $0x18] sm:$0xff]
      %v540 = vld [vmem:[%s491 + $0x20] sm:$0xff]
      %v541 = vld [vmem:[%s491 + $0x28] sm:$0xff]
      %v542 = vld [vmem:[%s491 + $0x30] sm:$0xff]
      %v543 = vld [vmem:[%s491 + $0x38] sm:$0xff]
      %v544 = vpack.c.bf16 %v537, %v536
      %v545 = vpack.c.bf16 %v539, %v538
      %v546 = vpack.c.bf16 %v541, %v540
      %v547 = vpack.c.bf16 %v543, %v542
      %v548 = vld [vmem:[%s497] sm:$0xf]
      %v549 = vld [vmem:[%s497 + $0x4] sm:$0xf]
      %v550 = vld [vmem:[%s497 + $0x8] sm:$0xf]
      %v551 = vld [vmem:[%s497 + $0xc] sm:$0xf]
      %v552 = vld [vmem:[%s500] sm:$0x1]
      %v554 = vlaneseq
      %v555 = vshrl.u32 %v554, 7
      %v556 = vsub.s32 0, %v555
      %v557 = vrot.slane %v552, %v556
      %v563 = vunpack.c.l.b16 %v548
      %v564 = vunpack.c.l.b16 %v549
      %v565 = vunpack.c.l.b16 %v550
      %v566 = vunpack.c.l.b16 %v551
      %v567 = vpack.c.b16 %v564, %v563
      %v568 = vpack.c.b16 %v566, %v565
      %vm571 = vcmask 261120
      %v573 = vsel %vm571, %v544, 0
      %v576 = vsel %vm571, %v545, 0
      %v579 = vsel %vm571, %v546, 0
      %v582 = vsel %vm571, %v547, 0
      %584 = vmatprep.subr.bf16.mxu0 0
      %585 = vmatpush1.bf16.msra.mxu0 0
      %586 = vmatprep.subr.bf16.mxu0 0
      %587 = vmatpush1.bf16.msra.mxu0 0
      %588 = vmatprep.subr.bf16.mxu0 0
      %589 = vmatpush1.bf16.msra.mxu0 0
      %590 = vmatprep.subr.bf16.mxu0 0
      %591 = vmatpush1.bf16.msra.mxu0 0
      %592 = vmatprep.subr.bf16.mxu0 0
      %593 = vmatpush1.bf16.msra.mxu0 0
      %594 = vmatprep.subr.bf16.mxu0 0
      %595 = vmatpush1.bf16.msra.mxu0 0
      %596 = vmatprep.subr.bf16.mxu0 0
      %597 = vmatpush1.bf16.msra.mxu0 %v568
      %598 = vmatprep.subr.bf16.mxu0 0
      %599 = vmatpush1.bf16.msra.mxu0 %v567
      %600 = vmatprep.subr.bf16.mxu0 0
      %601 = vmatpush2.bf16.msra.mxu0 0
      %602 = vmatprep.subr.bf16.mxu0 0
      %603 = vmatpush2.bf16.msra.mxu0 0
      %604 = vmatprep.subr.bf16.mxu0 0
      %605 = vmatpush2.bf16.msra.mxu0 0
      %606 = vmatprep.subr.bf16.mxu0 0
      %607 = vmatpush2.bf16.msra.mxu0 0
      %608 = vmatprep.subr.bf16.mxu0 0
      %609 = vmatpush2.bf16.msra.mxu0 0
      %610 = vmatprep.subr.bf16.mxu0 0
      %611 = vmatpush2.bf16.msra.mxu0 0
      %612 = vmatprep.subr.bf16.mxu0 0
      %613 = vmatpush2.bf16.msra.mxu0 0
      %614 = vmatprep.subr.bf16.mxu0 0
      %615 = vmatpush2.bf16.msra.mxu0 0
      %616 = vmatprep.mubr.bf16.mxu0 0
      %617 = vmatmul.mubr.bf16.gmra.mxu0 %v573
      %v618 = vpop.f32.mrf.mxu0
      %v619 = vadd.f32 %v557, %v618
      %v620 = vpop.f32.mrf.mxu0
      %v621 = vpop.f32.mrf.mxu0
      %v622 = vadd.f32 %v557, %v621
      %v623 = vpop.f32.mrf.mxu0
      %624 = vmatprep.mubr.bf16.mxu0 0
      %625 = vmatmul.mubr.bf16.gmra.mxu0 %v576
      %v626 = vpop.f32.mrf.mxu0
      %v627 = vadd.f32 %v557, %v626
      %v628 = vpop.f32.mrf.mxu0
      %v629 = vpop.f32.mrf.mxu0
      %v630 = vadd.f32 %v557, %v629
      %v631 = vpop.f32.mrf.mxu0
      %632 = vmatprep.mubr.bf16.mxu0 0
      %633 = vmatmul.mubr.bf16.gmra.mxu0 %v579
      %v634 = vpop.f32.mrf.mxu0
      %v635 = vadd.f32 %v557, %v634
      %v636 = vpop.f32.mrf.mxu0
      %v637 = vpop.f32.mrf.mxu0
      %v638 = vadd.f32 %v557, %v637
      %v639 = vpop.f32.mrf.mxu0
      %640 = vmatprep.mubr.bf16.mxu0 0
      %641 = vmatmul.mubr.bf16.gmra.mxu0 %v582
      %v642 = vpop.f32.mrf.mxu0
      %v643 = vadd.f32 %v557, %v642
      %v644 = vpop.f32.mrf.mxu0
      %v645 = vpop.f32.mrf.mxu0
      %v646 = vadd.f32 %v557, %v645
      %v647 = vpop.f32.mrf.mxu0
      %648 = vdwg.mxu0
      %v649 = vld [vmem:[%s1] sm:$0xff]
      %v650 = vpack.c.bf16 %v619, %v619
      %v651 = vpack.c.bf16 %v622, %v622
      %v652 = vpack.c.bf16 %v627, %v627
      %v653 = vpack.c.bf16 %v630, %v630
      %v654 = vpack.c.bf16 %v635, %v635
      %v655 = vpack.c.bf16 %v638, %v638
      %v656 = vpack.c.bf16 %v643, %v643
      %v657 = vpack.c.bf16 %v646, %v646
      %659 = vrot.lane.b32.xlu0 %v650, 96
      %v660 = vpop.permute.xlu0 %659
      %vm661 = vcmask 64512
      %v663 = vsel %vm661, %v650, 0
      %v666 = vsel %vm661, %v660, 0
      %668 = vmatprep.subr.bf16.mxu0 0
      %669 = vmatpush1.bf16.xpose.msra.mxu0 0
      %670 = vmatprep.subr.bf16.mxu0 0
      %671 = vmatpush1.bf16.xpose.msra.mxu0 0
      %672 = vmatprep.subr.bf16.mxu0 0
      %673 = vmatpush1.bf16.xpose.msra.mxu0 0
      %674 = vmatprep.subr.bf16.mxu0 0
      %675 = vmatpush1.bf16.xpose.msra.mxu0 0
      %676 = vmatprep.subr.bf16.mxu0 0
      %677 = vmatpush1.bf16.xpose.msra.mxu0 0
      %678 = vmatprep.subr.bf16.mxu0 0
      %679 = vmatpush1.bf16.xpose.msra.mxu0 0
      %680 = vmatprep.subr.bf16.mxu0 0
      %681 = vmatpush1.bf16.xpose.msra.mxu0 0
      %682 = vmatprep.subr.bf16.mxu0 0
      %683 = vmatpush1.bf16.xpose.msra.mxu0 %v666
      %684 = vmatprep.subr.bf16.mxu0 0
      %685 = vmatpush2.bf16.xpose.msra.mxu0 0
      %686 = vmatprep.subr.bf16.mxu0 0
      %687 = vmatpush2.bf16.xpose.msra.mxu0 0
      %688 = vmatprep.subr.bf16.mxu0 0
      %689 = vmatpush2.bf16.xpose.msra.mxu0 0
      %690 = vmatprep.subr.bf16.mxu0 0
      %691 = vmatpush2.bf16.xpose.msra.mxu0 0
      %692 = vmatprep.subr.bf16.mxu0 0
      %693 = vmatpush2.bf16.xpose.msra.mxu0 0
      %694 = vmatprep.subr.bf16.mxu0 0
      %695 = vmatpush2.bf16.xpose.msra.mxu0 0
      %696 = vmatprep.subr.bf16.mxu0 0
      %697 = vmatpush2.bf16.xpose.msra.mxu0 0
      %698 = vmatprep.subr.bf16.mxu0 0
      %699 = vmatpush2.bf16.xpose.msra.mxu0 0
      %700 = vmatprep.mubr.bf16.mxu0 0
      %701 = vmatmul.mubr.bf16.gmra.mxu0 %v663
      %v702 = vpop.f32.mrf.mxu0
      %v703 = vadd.f32 0.0, %v702
      %v704 = vpop.f32.mrf.mxu0
      %v705 = vpop.f32.mrf.mxu0
      %v706 = vpop.f32.mrf.mxu0
      %707 = vdwg.mxu0
      %709 = vrot.lane.b32.xlu0 %v651, 96
      %v710 = vpop.permute.xlu0 %709
      %v712 = vsel %vm661, %v651, 0
      %v715 = vsel %vm661, %v710, 0
      %717 = vmatprep.subr.bf16.mxu0 0
      %718 = vmatpush1.bf16.xpose.msra.mxu0 0
      %719 = vmatprep.subr.bf16.mxu0 0
      %720 = vmatpush1.bf16.xpose.msra.mxu0 0
      %721 = vmatprep.subr.bf16.mxu0 0
      %722 = vmatpush1.bf16.xpose.msra.mxu0 0
      %723 = vmatprep.subr.bf16.mxu0 0
      %724 = vmatpush1.bf16.xpose.msra.mxu0 0
      %725 = vmatprep.subr.bf16.mxu0 0
      %726 = vmatpush1.bf16.xpose.msra.mxu0 0
      %727 = vmatprep.subr.bf16.mxu0 0
      %728 = vmatpush1.bf16.xpose.msra.mxu0 0
      %729 = vmatprep.subr.bf16.mxu0 0
      %730 = vmatpush1.bf16.xpose.msra.mxu0 0
      %731 = vmatprep.subr.bf16.mxu0 0
      %732 = vmatpush1.bf16.xpose.msra.mxu0 %v715
      %733 = vmatprep.subr.bf16.mxu0 0
      %734 = vmatpush2.bf16.xpose.msra.mxu0 0
      %735 = vmatprep.subr.bf16.mxu0 0
      %736 = vmatpush2.bf16.xpose.msra.mxu0 0
      %737 = vmatprep.subr.bf16.mxu0 0
      %738 = vmatpush2.bf16.xpose.msra.mxu0 0
      %739 = vmatprep.subr.bf16.mxu0 0
      %740 = vmatpush2.bf16.xpose.msra.mxu0 0
      %741 = vmatprep.subr.bf16.mxu0 0
      %742 = vmatpush2.bf16.xpose.msra.mxu0 0
      %743 = vmatprep.subr.bf16.mxu0 0
      %744 = vmatpush2.bf16.xpose.msra.mxu0 0
      %745 = vmatprep.subr.bf16.mxu0 0
      %746 = vmatpush2.bf16.xpose.msra.mxu0 0
      %747 = vmatprep.subr.bf16.mxu0 0
      %748 = vmatpush2.bf16.xpose.msra.mxu0 0
      %749 = vmatprep.mubr.bf16.mxu0 0
      %750 = vmatmul.mubr.bf16.gmra.mxu0 %v712
      %v751 = vpop.f32.mrf.mxu0
      %v752 = vadd.f32 0.0, %v751
      %v753 = vpop.f32.mrf.mxu0
      %v754 = vpop.f32.mrf.mxu0
      %v755 = vpop.f32.mrf.mxu0
      %756 = vdwg.mxu0
      %758 = vrot.lane.b32.xlu0 %v652, 96
      %v759 = vpop.permute.xlu0 %758
      %v761 = vsel %vm661, %v652, 0
      %v764 = vsel %vm661, %v759, 0
      %766 = vmatprep.subr.bf16.mxu0 0
      %767 = vmatpush1.bf16.xpose.msra.mxu0 0
      %768 = vmatprep.subr.bf16.mxu0 0
      %769 = vmatpush1.bf16.xpose.msra.mxu0 0
      %770 = vmatprep.subr.bf16.mxu0 0
      %771 = vmatpush1.bf16.xpose.msra.mxu0 0
      %772 = vmatprep.subr.bf16.mxu0 0
      %773 = vmatpush1.bf16.xpose.msra.mxu0 0
      %774 = vmatprep.subr.bf16.mxu0 0
      %775 = vmatpush1.bf16.xpose.msra.mxu0 0
      %776 = vmatprep.subr.bf16.mxu0 0
      %777 = vmatpush1.bf16.xpose.msra.mxu0 0
      %778 = vmatprep.subr.bf16.mxu0 0
      %779 = vmatpush1.bf16.xpose.msra.mxu0 0
      %780 = vmatprep.subr.bf16.mxu0 0
      %781 = vmatpush1.bf16.xpose.msra.mxu0 %v764
      %782 = vmatprep.subr.bf16.mxu0 0
      %783 = vmatpush2.bf16.xpose.msra.mxu0 0
      %784 = vmatprep.subr.bf16.mxu0 0
      %785 = vmatpush2.bf16.xpose.msra.mxu0 0
      %786 = vmatprep.subr.bf16.mxu0 0
      %787 = vmatpush2.bf16.xpose.msra.mxu0 0
      %788 = vmatprep.subr.bf16.mxu0 0
      %789 = vmatpush2.bf16.xpose.msra.mxu0 0
      %790 = vmatprep.subr.bf16.mxu0 0
      %791 = vmatpush2.bf16.xpose.msra.mxu0 0
      %792 = vmatprep.subr.bf16.mxu0 0
      %793 = vmatpush2.bf16.xpose.msra.mxu0 0
      %794 = vmatprep.subr.bf16.mxu0 0
      %795 = vmatpush2.bf16.xpose.msra.mxu0 0
      %796 = vmatprep.subr.bf16.mxu0 0
      %797 = vmatpush2.bf16.xpose.msra.mxu0 0
      %798 = vmatprep.mubr.bf16.mxu0 0
      %799 = vmatmul.mubr.bf16.gmra.mxu0 %v761
      %v800 = vpop.f32.mrf.mxu0
      %v801 = vadd.f32 0.0, %v800
      %v802 = vpop.f32.mrf.mxu0
      %v803 = vpop.f32.mrf.mxu0
      %v804 = vpop.f32.mrf.mxu0
      %805 = vdwg.mxu0
      %807 = vrot.lane.b32.xlu0 %v653, 96
      %v808 = vpop.permute.xlu0 %807
      %v810 = vsel %vm661, %v653, 0
      %v813 = vsel %vm661, %v808, 0
      %815 = vmatprep.subr.bf16.mxu0 0
      %816 = vmatpush1.bf16.xpose.msra.mxu0 0
      %817 = vmatprep.subr.bf16.mxu0 0
      %818 = vmatpush1.bf16.xpose.msra.mxu0 0
      %819 = vmatprep.subr.bf16.mxu0 0
      %820 = vmatpush1.bf16.xpose.msra.mxu0 0
      %821 = vmatprep.subr.bf16.mxu0 0
      %822 = vmatpush1.bf16.xpose.msra.mxu0 0
      %823 = vmatprep.subr.bf16.mxu0 0
      %824 = vmatpush1.bf16.xpose.msra.mxu0 0
      %825 = vmatprep.subr.bf16.mxu0 0
      %826 = vmatpush1.bf16.xpose.msra.mxu0 0
      %827 = vmatprep.subr.bf16.mxu0 0
      %828 = vmatpush1.bf16.xpose.msra.mxu0 0
      %829 = vmatprep.subr.bf16.mxu0 0
      %830 = vmatpush1.bf16.xpose.msra.mxu0 %v813
      %831 = vmatprep.subr.bf16.mxu0 0
      %832 = vmatpush2.bf16.xpose.msra.mxu0 0
      %833 = vmatprep.subr.bf16.mxu0 0
      %834 = vmatpush2.bf16.xpose.msra.mxu0 0
      %835 = vmatprep.subr.bf16.mxu0 0
      %836 = vmatpush2.bf16.xpose.msra.mxu0 0
      %837 = vmatprep.subr.bf16.mxu0 0
      %838 = vmatpush2.bf16.xpose.msra.mxu0 0
      %839 = vmatprep.subr.bf16.mxu0 0
      %840 = vmatpush2.bf16.xpose.msra.mxu0 0
      %841 = vmatprep.subr.bf16.mxu0 0
      %842 = vmatpush2.bf16.xpose.msra.mxu0 0
      %843 = vmatprep.subr.bf16.mxu0 0
      %844 = vmatpush2.bf16.xpose.msra.mxu0 0
      %845 = vmatprep.subr.bf16.mxu0 0
      %846 = vmatpush2.bf16.xpose.msra.mxu0 0
      %847 = vmatprep.mubr.bf16.mxu0 0
      %848 = vmatmul.mubr.bf16.gmra.mxu0 %v810
      %v849 = vpop.f32.mrf.mxu0
      %v850 = vadd.f32 0.0, %v849
      %v851 = vpop.f32.mrf.mxu0
      %v852 = vpop.f32.mrf.mxu0
      %v853 = vpop.f32.mrf.mxu0
      %854 = vdwg.mxu0
      %856 = vrot.lane.b32.xlu0 %v654, 96
      %v857 = vpop.permute.xlu0 %856
      %v859 = vsel %vm661, %v654, 0
      %v862 = vsel %vm661, %v857, 0
      %864 = vmatprep.subr.bf16.mxu0 0
      %865 = vmatpush1.bf16.xpose.msra.mxu0 0
      %866 = vmatprep.subr.bf16.mxu0 0
      %867 = vmatpush1.bf16.xpose.msra.mxu0 0
      %868 = vmatprep.subr.bf16.mxu0 0
      %869 = vmatpush1.bf16.xpose.msra.mxu0 0
      %870 = vmatprep.subr.bf16.mxu0 0
      %871 = vmatpush1.bf16.xpose.msra.mxu0 0
      %872 = vmatprep.subr.bf16.mxu0 0
      %873 = vmatpush1.bf16.xpose.msra.mxu0 0
      %874 = vmatprep.subr.bf16.mxu0 0
      %875 = vmatpush1.bf16.xpose.msra.mxu0 0
      %876 = vmatprep.subr.bf16.mxu0 0
      %877 = vmatpush1.bf16.xpose.msra.mxu0 0
      %878 = vmatprep.subr.bf16.mxu0 0
      %879 = vmatpush1.bf16.xpose.msra.mxu0 %v862
      %880 = vmatprep.subr.bf16.mxu0 0
      %881 = vmatpush2.bf16.xpose.msra.mxu0 0
      %882 = vmatprep.subr.bf16.mxu0 0
      %883 = vmatpush2.bf16.xpose.msra.mxu0 0
      %884 = vmatprep.subr.bf16.mxu0 0
      %885 = vmatpush2.bf16.xpose.msra.mxu0 0
      %886 = vmatprep.subr.bf16.mxu0 0
      %887 = vmatpush2.bf16.xpose.msra.mxu0 0
      %888 = vmatprep.subr.bf16.mxu0 0
      %889 = vmatpush2.bf16.xpose.msra.mxu0 0
      %890 = vmatprep.subr.bf16.mxu0 0
      %891 = vmatpush2.bf16.xpose.msra.mxu0 0
      %892 = vmatprep.subr.bf16.mxu0 0
      %893 = vmatpush2.bf16.xpose.msra.mxu0 0
      %894 = vmatprep.subr.bf16.mxu0 0
      %895 = vmatpush2.bf16.xpose.msra.mxu0 0
      %896 = vmatprep.mubr.bf16.mxu0 0
      %897 = vmatmul.mubr.bf16.gmra.mxu0 %v859
      %v898 = vpop.f32.mrf.mxu0
      %v899 = vadd.f32 0.0, %v898
      %v900 = vpop.f32.mrf.mxu0
      %v901 = vpop.f32.mrf.mxu0
      %v902 = vpop.f32.mrf.mxu0
      %903 = vdwg.mxu0
      %905 = vrot.lane.b32.xlu0 %v655, 96
      %v906 = vpop.permute.xlu0 %905
      %v908 = vsel %vm661, %v655, 0
      %v911 = vsel %vm661, %v906, 0
      %913 = vmatprep.subr.bf16.mxu0 0
      %914 = vmatpush1.bf16.xpose.msra.mxu0 0
      %915 = vmatprep.subr.bf16.mxu0 0
      %916 = vmatpush1.bf16.xpose.msra.mxu0 0
      %917 = vmatprep.subr.bf16.mxu0 0
      %918 = vmatpush1.bf16.xpose.msra.mxu0 0
      %919 = vmatprep.subr.bf16.mxu0 0
      %920 = vmatpush1.bf16.xpose.msra.mxu0 0
      %921 = vmatprep.subr.bf16.mxu0 0
      %922 = vmatpush1.bf16.xpose.msra.mxu0 0
      %923 = vmatprep.subr.bf16.mxu0 0
      %924 = vmatpush1.bf16.xpose.msra.mxu0 0
      %925 = vmatprep.subr.bf16.mxu0 0
      %926 = vmatpush1.bf16.xpose.msra.mxu0 0
      %927 = vmatprep.subr.bf16.mxu0 0
      %928 = vmatpush1.bf16.xpose.msra.mxu0 %v911
      %929 = vmatprep.subr.bf16.mxu0 0
      %930 = vmatpush2.bf16.xpose.msra.mxu0 0
      %931 = vmatprep.subr.bf16.mxu0 0
      %932 = vmatpush2.bf16.xpose.msra.mxu0 0
      %933 = vmatprep.subr.bf16.mxu0 0
      %934 = vmatpush2.bf16.xpose.msra.mxu0 0
      %935 = vmatprep.subr.bf16.mxu0 0
      %936 = vmatpush2.bf16.xpose.msra.mxu0 0
      %937 = vmatprep.subr.bf16.mxu0 0
      %938 = vmatpush2.bf16.xpose.msra.mxu0 0
      %939 = vmatprep.subr.bf16.mxu0 0
      %940 = vmatpush2.bf16.xpose.msra.mxu0 0
      %941 = vmatprep.subr.bf16.mxu0 0
      %942 = vmatpush2.bf16.xpose.msra.mxu0 0
      %943 = vmatprep.subr.bf16.mxu0 0
      %944 = vmatpush2.bf16.xpose.msra.mxu0 0
      %945 = vmatprep.mubr.bf16.mxu0 0
      %946 = vmatmul.mubr.bf16.gmra.mxu0 %v908
      %v947 = vpop.f32.mrf.mxu0
      %v948 = vadd.f32 0.0, %v947
      %v949 = vpop.f32.mrf.mxu0
      %v950 = vpop.f32.mrf.mxu0
      %v951 = vpop.f32.mrf.mxu0
      %952 = vdwg.mxu0
      %954 = vrot.lane.b32.xlu0 %v656, 96
      %v955 = vpop.permute.xlu0 %954
      %v957 = vsel %vm661, %v656, 0
      %v960 = vsel %vm661, %v955, 0
      %962 = vmatprep.subr.bf16.mxu0 0
      %963 = vmatpush1.bf16.xpose.msra.mxu0 0
      %964 = vmatprep.subr.bf16.mxu0 0
      %965 = vmatpush1.bf16.xpose.msra.mxu0 0
      %966 = vmatprep.subr.bf16.mxu0 0
      %967 = vmatpush1.bf16.xpose.msra.mxu0 0
      %968 = vmatprep.subr.bf16.mxu0 0
      %969 = vmatpush1.bf16.xpose.msra.mxu0 0
      %970 = vmatprep.subr.bf16.mxu0 0
      %971 = vmatpush1.bf16.xpose.msra.mxu0 0
      %972 = vmatprep.subr.bf16.mxu0 0
      %973 = vmatpush1.bf16.xpose.msra.mxu0 0
      %974 = vmatprep.subr.bf16.mxu0 0
      %975 = vmatpush1.bf16.xpose.msra.mxu0 0
      %976 = vmatprep.subr.bf16.mxu0 0
      %977 = vmatpush1.bf16.xpose.msra.mxu0 %v960
      %978 = vmatprep.subr.bf16.mxu0 0
      %979 = vmatpush2.bf16.xpose.msra.mxu0 0
      %980 = vmatprep.subr.bf16.mxu0 0
      %981 = vmatpush2.bf16.xpose.msra.mxu0 0
      %982 = vmatprep.subr.bf16.mxu0 0
      %983 = vmatpush2.bf16.xpose.msra.mxu0 0
      %984 = vmatprep.subr.bf16.mxu0 0
      %985 = vmatpush2.bf16.xpose.msra.mxu0 0
      %986 = vmatprep.subr.bf16.mxu0 0
      %987 = vmatpush2.bf16.xpose.msra.mxu0 0
      %988 = vmatprep.subr.bf16.mxu0 0
      %989 = vmatpush2.bf16.xpose.msra.mxu0 0
      %990 = vmatprep.subr.bf16.mxu0 0
      %991 = vmatpush2.bf16.xpose.msra.mxu0 0
      %992 = vmatprep.subr.bf16.mxu0 0
      %993 = vmatpush2.bf16.xpose.msra.mxu0 0
      %994 = vmatprep.mubr.bf16.mxu0 0
      %995 = vmatmul.mubr.bf16.gmra.mxu0 %v957
      %v996 = vpop.f32.mrf.mxu0
      %v997 = vadd.f32 0.0, %v996
      %v998 = vpop.f32.mrf.mxu0
      %v999 = vpop.f32.mrf.mxu0
      %v1000 = vpop.f32.mrf.mxu0
      %1001 = vdwg.mxu0
      %1003 = vrot.lane.b32.xlu0 %v657, 96
      %v1004 = vpop.permute.xlu0 %1003
      %v1006 = vsel %vm661, %v657, 0
      %v1009 = vsel %vm661, %v1004, 0
      %1011 = vmatprep.subr.bf16.mxu0 0
      %1012 = vmatpush1.bf16.xpose.msra.mxu0 0
      %1013 = vmatprep.subr.bf16.mxu0 0
      %1014 = vmatpush1.bf16.xpose.msra.mxu0 0
      %1015 = vmatprep.subr.bf16.mxu0 0
      %1016 = vmatpush1.bf16.xpose.msra.mxu0 0
      %1017 = vmatprep.subr.bf16.mxu0 0
      %1018 = vmatpush1.bf16.xpose.msra.mxu0 0
      %1019 = vmatprep.subr.bf16.mxu0 0
      %1020 = vmatpush1.bf16.xpose.msra.mxu0 0
      %1021 = vmatprep.subr.bf16.mxu0 0
      %1022 = vmatpush1.bf16.xpose.msra.mxu0 0
      %1023 = vmatprep.subr.bf16.mxu0 0
      %1024 = vmatpush1.bf16.xpose.msra.mxu0 0
      %1025 = vmatprep.subr.bf16.mxu0 0
      %1026 = vmatpush1.bf16.xpose.msra.mxu0 %v1009
      %1027 = vmatprep.subr.bf16.mxu0 0
      %1028 = vmatpush2.bf16.xpose.msra.mxu0 0
      %1029 = vmatprep.subr.bf16.mxu0 0
      %1030 = vmatpush2.bf16.xpose.msra.mxu0 0
      %1031 = vmatprep.subr.bf16.mxu0 0
      %1032 = vmatpush2.bf16.xpose.msra.mxu0 0
      %1033 = vmatprep.subr.bf16.mxu0 0
      %1034 = vmatpush2.bf16.xpose.msra.mxu0 0
      %1035 = vmatprep.subr.bf16.mxu0 0
      %1036 = vmatpush2.bf16.xpose.msra.mxu0 0
      %1037 = vmatprep.subr.bf16.mxu0 0
      %1038 = vmatpush2.bf16.xpose.msra.mxu0 0
      %1039 = vmatprep.subr.bf16.mxu0 0
      %1040 = vmatpush2.bf16.xpose.msra.mxu0 0
      %1041 = vmatprep.subr.bf16.mxu0 0
      %1042 = vmatpush2.bf16.xpose.msra.mxu0 0
      %1043 = vmatprep.mubr.bf16.mxu0 0
      %1044 = vmatmul.mubr.bf16.gmra.mxu0 %v1006
      %v1045 = vpop.f32.mrf.mxu0
      %v1046 = vadd.f32 0.0, %v1045
      %v1047 = vpop.f32.mrf.mxu0
      %v1048 = vpop.f32.mrf.mxu0
      %v1049 = vpop.f32.mrf.mxu0
      %1050 = vdwg.mxu0
      %v1051 = vmul.f32 %v703, 0.35355338
      %v1052 = vmul.f32 %v752, 0.35355338
      %v1053 = vmul.f32 %v801, 0.35355338
      %v1054 = vmul.f32 %v850, 0.35355338
      %v1055 = vmul.f32 %v899, 0.35355338
      %v1056 = vmul.f32 %v948, 0.35355338
      %v1057 = vmul.f32 %v997, 0.35355338
      %v1058 = vmul.f32 %v1046, 0.35355338
      %v1059 = vadd.f32 %v1051, %v649
      %v1060 = vadd.f32 %v1052, %v649
      %v1061 = vadd.f32 %v1053, %v649
      %v1062 = vadd.f32 %v1054, %v649
      %v1063 = vadd.f32 %v1055, %v649
      %v1064 = vadd.f32 %v1056, %v649
      %v1065 = vadd.f32 %v1057, %v649
      %v1066 = vadd.f32 %v1058, %v649
      %v1067 = vsel %vm661, %v1059, -inf
      %1068 = vmax.xlane.f32.xlu0 %v1067
      %v1069 = vpop.xlane.xlu0 %1068
      %v1070 = vsel %vm661, %v1060, -inf
      %1071 = vmax.xlane.f32.xlu0 %v1070
      %v1072 = vpop.xlane.xlu0 %1071
      %v1073 = vsel %vm661, %v1061, -inf
      %1074 = vmax.xlane.f32.xlu0 %v1073
      %v1075 = vpop.xlane.xlu0 %1074
      %v1076 = vsel %vm661, %v1062, -inf
      %1077 = vmax.xlane.f32.xlu0 %v1076
      %v1078 = vpop.xlane.xlu0 %1077
      %v1079 = vsel %vm661, %v1063, -inf
      %1080 = vmax.xlane.f32.xlu0 %v1079
      %v1081 = vpop.xlane.xlu0 %1080
      %v1082 = vsel %vm661, %v1064, -inf
      %1083 = vmax.xlane.f32.xlu0 %v1082
      %v1084 = vpop.xlane.xlu0 %1083
      %v1085 = vsel %vm661, %v1065, -inf
      %1086 = vmax.xlane.f32.xlu0 %v1085
      %v1087 = vpop.xlane.xlu0 %1086
      %v1088 = vsel %vm661, %v1066, -inf
      %1089 = vmax.xlane.f32.xlu0 %v1088
      %v1090 = vpop.xlane.xlu0 %1089
      %v1091 = vsub.f32 %v1059, %v1069
      %v1092 = vsub.f32 %v1060, %v1072
      %v1093 = vsub.f32 %v1061, %v1075
      %v1094 = vsub.f32 %v1062, %v1078
      %v1095 = vsub.f32 %v1063, %v1081
      %v1096 = vsub.f32 %v1064, %v1084
      %v1097 = vsub.f32 %v1065, %v1087
      %v1098 = vsub.f32 %v1066, %v1090
      %v1099 = vmul.f32 %v1091, 1.442695
      %v1100 = vpow.pop %v1099
      %v1101 = vmul.f32 %v1092, 1.442695
      %v1102 = vpow.pop %v1101
      %v1103 = vmul.f32 %v1093, 1.442695
      %v1104 = vpow.pop %v1103
      %v1105 = vmul.f32 %v1094, 1.442695
      %v1106 = vpow.pop %v1105
      %v1107 = vmul.f32 %v1095, 1.442695
      %v1108 = vpow.pop %v1107
      %v1109 = vmul.f32 %v1096, 1.442695
      %v1110 = vpow.pop %v1109
      %v1111 = vmul.f32 %v1097, 1.442695
      %v1112 = vpow.pop %v1111
      %v1113 = vmul.f32 %v1098, 1.442695
      %v1114 = vpow.pop %v1113
      %v1115 = vsel %vm661, %v1100, 0.0
      %1116 = vadd.xlane.f32.xlu0 %v1115
      %v1117 = vpop.xlane.xlu0 %1116
      %v1118 = vsel %vm661, %v1102, 0.0
      %1119 = vadd.xlane.f32.xlu0 %v1118
      %v1120 = vpop.xlane.xlu0 %1119
      %v1121 = vsel %vm661, %v1104, 0.0
      %1122 = vadd.xlane.f32.xlu0 %v1121
      %v1123 = vpop.xlane.xlu0 %1122
      %v1124 = vsel %vm661, %v1106, 0.0
      %1125 = vadd.xlane.f32.xlu0 %v1124
      %v1126 = vpop.xlane.xlu0 %1125
      %v1127 = vsel %vm661, %v1108, 0.0
      %1128 = vadd.xlane.f32.xlu0 %v1127
      %v1129 = vpop.xlane.xlu0 %1128
      %v1130 = vsel %vm661, %v1110, 0.0
      %1131 = vadd.xlane.f32.xlu0 %v1130
      %v1132 = vpop.xlane.xlu0 %1131
      %v1133 = vsel %vm661, %v1112, 0.0
      %1134 = vadd.xlane.f32.xlu0 %v1133
      %v1135 = vpop.xlane.xlu0 %1134
      %v1136 = vsel %vm661, %v1114, 0.0
      %1137 = vadd.xlane.f32.xlu0 %v1136
      %v1138 = vpop.xlane.xlu0 %1137
      %v1139 = vrcp.pop %v1117
      %v1140 = vrcp.pop %v1120
      %v1141 = vrcp.pop %v1123
      %v1142 = vrcp.pop %v1126
      %v1143 = vrcp.pop %v1129
      %v1144 = vrcp.pop %v1132
      %v1145 = vrcp.pop %v1135
      %v1146 = vrcp.pop %v1138
      %v1147 = vmul.f32 %v1100, %v1139
      %v1148 = vmul.f32 %v1102, %v1140
      %v1149 = vmul.f32 %v1104, %v1141
      %v1150 = vmul.f32 %v1106, %v1142
      %v1151 = vmul.f32 %v1108, %v1143
      %v1152 = vmul.f32 %v1110, %v1144
      %v1153 = vmul.f32 %v1112, %v1145
      %v1154 = vmul.f32 %v1114, %v1146
      %v1155 = vpack.c.bf16 %v1147, %v1147
      %v1156 = vpack.c.bf16 %v1148, %v1148
      %v1157 = vpack.c.bf16 %v1149, %v1149
      %v1158 = vpack.c.bf16 %v1150, %v1150
      %v1159 = vpack.c.bf16 %v1151, %v1151
      %v1160 = vpack.c.bf16 %v1152, %v1152
      %v1161 = vpack.c.bf16 %v1153, %v1153
      %v1162 = vpack.c.bf16 %v1154, %v1154
      %1163 = vrot.lane.b32.xlu0 %v650, 64
      %v1164 = vpop.permute.xlu0 %1163
      %v1166 = vsel %vm661, %v1155, 0
      %vm1168 = vcmask 1043456
      %v1170 = vsel %vm1168, %v1164, 0
      %1172 = vmatprep.subr.bf16.mxu0 0
      %1173 = vmatpush1.bf16.msra.mxu0 0
      %1174 = vmatprep.subr.bf16.mxu0 0
      %1175 = vmatpush1.bf16.msra.mxu0 0
      %1176 = vmatprep.subr.bf16.mxu0 0
      %1177 = vmatpush1.bf16.msra.mxu0 0
      %1178 = vmatprep.subr.bf16.mxu0 0
      %1179 = vmatpush1.bf16.msra.mxu0 0
      %1180 = vmatprep.subr.bf16.mxu0 0
      %1181 = vmatpush1.bf16.msra.mxu0 0
      %1182 = vmatprep.subr.bf16.mxu0 0
      %1183 = vmatpush1.bf16.msra.mxu0 0
      %1184 = vmatprep.subr.bf16.mxu0 0
      %1185 = vmatpush1.bf16.msra.mxu0 0
      %1186 = vmatprep.subr.bf16.mxu0 0
      %1187 = vmatpush1.bf16.msra.mxu0 %v1170
      %1188 = vmatprep.subr.bf16.mxu0 0
      %1189 = vmatpush2.bf16.msra.mxu0 0
      %1190 = vmatprep.subr.bf16.mxu0 0
      %1191 = vmatpush2.bf16.msra.mxu0 0
      %1192 = vmatprep.subr.bf16.mxu0 0
      %1193 = vmatpush2.bf16.msra.mxu0 0
      %1194 = vmatprep.subr.bf16.mxu0 0
      %1195 = vmatpush2.bf16.msra.mxu0 0
      %1196 = vmatprep.subr.bf16.mxu0 0
      %1197 = vmatpush2.bf16.msra.mxu0 0
      %1198 = vmatprep.subr.bf16.mxu0 0
      %1199 = vmatpush2.bf16.msra.mxu0 0
      %1200 = vmatprep.subr.bf16.mxu0 0
      %1201 = vmatpush2.bf16.msra.mxu0 0
      %1202 = vmatprep.subr.bf16.mxu0 0
      %1203 = vmatpush2.bf16.msra.mxu0 0
      %1204 = vmatprep.mubr.bf16.mxu0 0
      %1205 = vmatmul.mubr.bf16.gmra.mxu0 %v1166
      %v1206 = vpop.f32.mrf.mxu0
      %v1207 = vadd.f32 0.0, %v1206
      %v1208 = vpop.f32.mrf.mxu0
      %v1209 = vpop.f32.mrf.mxu0
      %v1210 = vpop.f32.mrf.mxu0
      %1211 = vdwg.mxu0
      %1212 = vrot.lane.b32.xlu0 %v651, 64
      %v1213 = vpop.permute.xlu0 %1212
      %v1215 = vsel %vm661, %v1156, 0
      %v1218 = vsel %vm1168, %v1213, 0
      %1220 = vmatprep.subr.bf16.mxu0 0
      %1221 = vmatpush1.bf16.msra.mxu0 0
      %1222 = vmatprep.subr.bf16.mxu0 0
      %1223 = vmatpush1.bf16.msra.mxu0 0
      %1224 = vmatprep.subr.bf16.mxu0 0
      %1225 = vmatpush1.bf16.msra.mxu0 0
      %1226 = vmatprep.subr.bf16.mxu0 0
      %1227 = vmatpush1.bf16.msra.mxu0 0
      %1228 = vmatprep.subr.bf16.mxu0 0
      %1229 = vmatpush1.bf16.msra.mxu0 0
      %1230 = vmatprep.subr.bf16.mxu0 0
      %1231 = vmatpush1.bf16.msra.mxu0 0
      %1232 = vmatprep.subr.bf16.mxu0 0
      %1233 = vmatpush1.bf16.msra.mxu0 0
      %1234 = vmatprep.subr.bf16.mxu0 0
      %1235 = vmatpush1.bf16.msra.mxu0 %v1218
      %1236 = vmatprep.subr.bf16.mxu0 0
      %1237 = vmatpush2.bf16.msra.mxu0 0
      %1238 = vmatprep.subr.bf16.mxu0 0
      %1239 = vmatpush2.bf16.msra.mxu0 0
      %1240 = vmatprep.subr.bf16.mxu0 0
      %1241 = vmatpush2.bf16.msra.mxu0 0
      %1242 = vmatprep.subr.bf16.mxu0 0
      %1243 = vmatpush2.bf16.msra.mxu0 0
      %1244 = vmatprep.subr.bf16.mxu0 0
      %1245 = vmatpush2.bf16.msra.mxu0 0
      %1246 = vmatprep.subr.bf16.mxu0 0
      %1247 = vmatpush2.bf16.msra.mxu0 0
      %1248 = vmatprep.subr.bf16.mxu0 0
      %1249 = vmatpush2.bf16.msra.mxu0 0
      %1250 = vmatprep.subr.bf16.mxu0 0
      %1251 = vmatpush2.bf16.msra.mxu0 0
      %1252 = vmatprep.mubr.bf16.mxu0 0
      %1253 = vmatmul.mubr.bf16.gmra.mxu0 %v1215
      %v1254 = vpop.f32.mrf.mxu0
      %v1255 = vadd.f32 0.0, %v1254
      %v1256 = vpop.f32.mrf.mxu0
      %v1257 = vpop.f32.mrf.mxu0
      %v1258 = vpop.f32.mrf.mxu0
      %1259 = vdwg.mxu0
      %1260 = vrot.lane.b32.xlu0 %v652, 64
      %v1261 = vpop.permute.xlu0 %1260
      %v1263 = vsel %vm661, %v1157, 0
      %v1266 = vsel %vm1168, %v1261, 0
      %1268 = vmatprep.subr.bf16.mxu0 0
      %1269 = vmatpush1.bf16.msra.mxu0 0
      %1270 = vmatprep.subr.bf16.mxu0 0
      %1271 = vmatpush1.bf16.msra.mxu0 0
      %1272 = vmatprep.subr.bf16.mxu0 0
      %1273 = vmatpush1.bf16.msra.mxu0 0
      %1274 = vmatprep.subr.bf16.mxu0 0
      %1275 = vmatpush1.bf16.msra.mxu0 0
      %1276 = vmatprep.subr.bf16.mxu0 0
      %1277 = vmatpush1.bf16.msra.mxu0 0
      %1278 = vmatprep.subr.bf16.mxu0 0
      %1279 = vmatpush1.bf16.msra.mxu0 0
      %1280 = vmatprep.subr.bf16.mxu0 0
      %1281 = vmatpush1.bf16.msra.mxu0 0
      %1282 = vmatprep.subr.bf16.mxu0 0
      %1283 = vmatpush1.bf16.msra.mxu0 %v1266
      %1284 = vmatprep.subr.bf16.mxu0 0
      %1285 = vmatpush2.bf16.msra.mxu0 0
      %1286 = vmatprep.subr.bf16.mxu0 0
      %1287 = vmatpush2.bf16.msra.mxu0 0
      %1288 = vmatprep.subr.bf16.mxu0 0
      %1289 = vmatpush2.bf16.msra.mxu0 0
      %1290 = vmatprep.subr.bf16.mxu0 0
      %1291 = vmatpush2.bf16.msra.mxu0 0
      %1292 = vmatprep.subr.bf16.mxu0 0
      %1293 = vmatpush2.bf16.msra.mxu0 0
      %1294 = vmatprep.subr.bf16.mxu0 0
      %1295 = vmatpush2.bf16.msra.mxu0 0
      %1296 = vmatprep.subr.bf16.mxu0 0
      %1297 = vmatpush2.bf16.msra.mxu0 0
      %1298 = vmatprep.subr.bf16.mxu0 0
      %1299 = vmatpush2.bf16.msra.mxu0 0
      %1300 = vmatprep.mubr.bf16.mxu0 0
      %1301 = vmatmul.mubr.bf16.gmra.mxu0 %v1263
      %v1302 = vpop.f32.mrf.mxu0
      %v1303 = vadd.f32 0.0, %v1302
      %v1304 = vpop.f32.mrf.mxu0
      %v1305 = vpop.f32.mrf.mxu0
      %v1306 = vpop.f32.mrf.mxu0
      %1307 = vdwg.mxu0
      %1308 = vrot.lane.b32.xlu0 %v653, 64
      %v1309 = vpop.permute.xlu0 %1308
      %v1311 = vsel %vm661, %v1158, 0
      %v1314 = vsel %vm1168, %v1309, 0
      %1316 = vmatprep.subr.bf16.mxu0 0
      %1317 = vmatpush1.bf16.msra.mxu0 0
      %1318 = vmatprep.subr.bf16.mxu0 0
      %1319 = vmatpush1.bf16.msra.mxu0 0
      %1320 = vmatprep.subr.bf16.mxu0 0
      %1321 = vmatpush1.bf16.msra.mxu0 0
      %1322 = vmatprep.subr.bf16.mxu0 0
      %1323 = vmatpush1.bf16.msra.mxu0 0
      %1324 = vmatprep.subr.bf16.mxu0 0
      %1325 = vmatpush1.bf16.msra.mxu0 0
      %1326 = vmatprep.subr.bf16.mxu0 0
      %1327 = vmatpush1.bf16.msra.mxu0 0
      %1328 = vmatprep.subr.bf16.mxu0 0
      %1329 = vmatpush1.bf16.msra.mxu0 0
      %1330 = vmatprep.subr.bf16.mxu0 0
      %1331 = vmatpush1.bf16.msra.mxu0 %v1314
      %1332 = vmatprep.subr.bf16.mxu0 0
      %1333 = vmatpush2.bf16.msra.mxu0 0
      %1334 = vmatprep.subr.bf16.mxu0 0
      %1335 = vmatpush2.bf16.msra.mxu0 0
      %1336 = vmatprep.subr.bf16.mxu0 0
      %1337 = vmatpush2.bf16.msra.mxu0 0
      %1338 = vmatprep.subr.bf16.mxu0 0
      %1339 = vmatpush2.bf16.msra.mxu0 0
      %1340 = vmatprep.subr.bf16.mxu0 0
      %1341 = vmatpush2.bf16.msra.mxu0 0
      %1342 = vmatprep.subr.bf16.mxu0 0
      %1343 = vmatpush2.bf16.msra.mxu0 0
      %1344 = vmatprep.subr.bf16.mxu0 0
      %1345 = vmatpush2.bf16.msra.mxu0 0
      %1346 = vmatprep.subr.bf16.mxu0 0
      %1347 = vmatpush2.bf16.msra.mxu0 0
      %1348 = vmatprep.mubr.bf16.mxu0 0
      %1349 = vmatmul.mubr.bf16.gmra.mxu0 %v1311
      %v1350 = vpop.f32.mrf.mxu0
      %v1351 = vadd.f32 0.0, %v1350
      %v1352 = vpop.f32.mrf.mxu0
      %v1353 = vpop.f32.mrf.mxu0
      %v1354 = vpop.f32.mrf.mxu0
      %1355 = vdwg.mxu0
      %1356 = vrot.lane.b32.xlu0 %v654, 64
      %v1357 = vpop.permute.xlu0 %1356
      %v1359 = vsel %vm661, %v1159, 0
      %v1362 = vsel %vm1168, %v1357, 0
      %1364 = vmatprep.subr.bf16.mxu0 0
      %1365 = vmatpush1.bf16.msra.mxu0 0
      %1366 = vmatprep.subr.bf16.mxu0 0
      %1367 = vmatpush1.bf16.msra.mxu0 0
      %1368 = vmatprep.subr.bf16.mxu0 0
      %1369 = vmatpush1.bf16.msra.mxu0 0
      %1370 = vmatprep.subr.bf16.mxu0 0
      %1371 = vmatpush1.bf16.msra.mxu0 0
      %1372 = vmatprep.subr.bf16.mxu0 0
      %1373 = vmatpush1.bf16.msra.mxu0 0
      %1374 = vmatprep.subr.bf16.mxu0 0
      %1375 = vmatpush1.bf16.msra.mxu0 0
      %1376 = vmatprep.subr.bf16.mxu0 0
      %1377 = vmatpush1.bf16.msra.mxu0 0
      %1378 = vmatprep.subr.bf16.mxu0 0
      %1379 = vmatpush1.bf16.msra.mxu0 %v1362
      %1380 = vmatprep.subr.bf16.mxu0 0
      %1381 = vmatpush2.bf16.msra.mxu0 0
      %1382 = vmatprep.subr.bf16.mxu0 0
      %1383 = vmatpush2.bf16.msra.mxu0 0
      %1384 = vmatprep.subr.bf16.mxu0 0
      %1385 = vmatpush2.bf16.msra.mxu0 0
      %1386 = vmatprep.subr.bf16.mxu0 0
      %1387 = vmatpush2.bf16.msra.mxu0 0
      %1388 = vmatprep.subr.bf16.mxu0 0
      %1389 = vmatpush2.bf16.msra.mxu0 0
      %1390 = vmatprep.subr.bf16.mxu0 0
      %1391 = vmatpush2.bf16.msra.mxu0 0
      %1392 = vmatprep.subr.bf16.mxu0 0
      %1393 = vmatpush2.bf16.msra.mxu0 0
      %1394 = vmatprep.subr.bf16.mxu0 0
      %1395 = vmatpush2.bf16.msra.mxu0 0
      %1396 = vmatprep.mubr.bf16.mxu0 0
      %1397 = vmatmul.mubr.bf16.gmra.mxu0 %v1359
      %v1398 = vpop.f32.mrf.mxu0
      %v1399 = vadd.f32 0.0, %v1398
      %v1400 = vpop.f32.mrf.mxu0
      %v1401 = vpop.f32.mrf.mxu0
      %v1402 = vpop.f32.mrf.mxu0
      %1403 = vdwg.mxu0
      %1404 = vrot.lane.b32.xlu0 %v655, 64
      %v1405 = vpop.permute.xlu0 %1404
      %v1407 = vsel %vm661, %v1160, 0
      %v1410 = vsel %vm1168, %v1405, 0
      %1412 = vmatprep.subr.bf16.mxu0 0
      %1413 = vmatpush1.bf16.msra.mxu0 0
      %1414 = vmatprep.subr.bf16.mxu0 0
      %1415 = vmatpush1.bf16.msra.mxu0 0
      %1416 = vmatprep.subr.bf16.mxu0 0
      %1417 = vmatpush1.bf16.msra.mxu0 0
      %1418 = vmatprep.subr.bf16.mxu0 0
      %1419 = vmatpush1.bf16.msra.mxu0 0
      %1420 = vmatprep.subr.bf16.mxu0 0
      %1421 = vmatpush1.bf16.msra.mxu0 0
      %1422 = vmatprep.subr.bf16.mxu0 0
      %1423 = vmatpush1.bf16.msra.mxu0 0
      %1424 = vmatprep.subr.bf16.mxu0 0
      %1425 = vmatpush1.bf16.msra.mxu0 0
      %1426 = vmatprep.subr.bf16.mxu0 0
      %1427 = vmatpush1.bf16.msra.mxu0 %v1410
      %1428 = vmatprep.subr.bf16.mxu0 0
      %1429 = vmatpush2.bf16.msra.mxu0 0
      %1430 = vmatprep.subr.bf16.mxu0 0
      %1431 = vmatpush2.bf16.msra.mxu0 0
      %1432 = vmatprep.subr.bf16.mxu0 0
      %1433 = vmatpush2.bf16.msra.mxu0 0
      %1434 = vmatprep.subr.bf16.mxu0 0
      %1435 = vmatpush2.bf16.msra.mxu0 0
      %1436 = vmatprep.subr.bf16.mxu0 0
      %1437 = vmatpush2.bf16.msra.mxu0 0
      %1438 = vmatprep.subr.bf16.mxu0 0
      %1439 = vmatpush2.bf16.msra.mxu0 0
      %1440 = vmatprep.subr.bf16.mxu0 0
      %1441 = vmatpush2.bf16.msra.mxu0 0
      %1442 = vmatprep.subr.bf16.mxu0 0
      %1443 = vmatpush2.bf16.msra.mxu0 0
      %1444 = vmatprep.mubr.bf16.mxu0 0
      %1445 = vmatmul.mubr.bf16.gmra.mxu0 %v1407
      %v1446 = vpop.f32.mrf.mxu0
      %v1447 = vadd.f32 0.0, %v1446
      %v1448 = vpop.f32.mrf.mxu0
      %v1449 = vpop.f32.mrf.mxu0
      %v1450 = vpop.f32.mrf.mxu0
      %1451 = vdwg.mxu0
      %1452 = vrot.lane.b32.xlu0 %v656, 64
      %v1453 = vpop.permute.xlu0 %1452
      %v1455 = vsel %vm661, %v1161, 0
      %v1458 = vsel %vm1168, %v1453, 0
      %1460 = vmatprep.subr.bf16.mxu0 0
      %1461 = vmatpush1.bf16.msra.mxu0 0
      %1462 = vmatprep.subr.bf16.mxu0 0
      %1463 = vmatpush1.bf16.msra.mxu0 0
      %1464 = vmatprep.subr.bf16.mxu0 0
      %1465 = vmatpush1.bf16.msra.mxu0 0
      %1466 = vmatprep.subr.bf16.mxu0 0
      %1467 = vmatpush1.bf16.msra.mxu0 0
      %1468 = vmatprep.subr.bf16.mxu0 0
      %1469 = vmatpush1.bf16.msra.mxu0 0
      %1470 = vmatprep.subr.bf16.mxu0 0
      %1471 = vmatpush1.bf16.msra.mxu0 0
      %1472 = vmatprep.subr.bf16.mxu0 0
      %1473 = vmatpush1.bf16.msra.mxu0 0
      %1474 = vmatprep.subr.bf16.mxu0 0
      %1475 = vmatpush1.bf16.msra.mxu0 %v1458
      %1476 = vmatprep.subr.bf16.mxu0 0
      %1477 = vmatpush2.bf16.msra.mxu0 0
      %1478 = vmatprep.subr.bf16.mxu0 0
      %1479 = vmatpush2.bf16.msra.mxu0 0
      %1480 = vmatprep.subr.bf16.mxu0 0
      %1481 = vmatpush2.bf16.msra.mxu0 0
      %1482 = vmatprep.subr.bf16.mxu0 0
      %1483 = vmatpush2.bf16.msra.mxu0 0
      %1484 = vmatprep.subr.bf16.mxu0 0
      %1485 = vmatpush2.bf16.msra.mxu0 0
      %1486 = vmatprep.subr.bf16.mxu0 0
      %1487 = vmatpush2.bf16.msra.mxu0 0
      %1488 = vmatprep.subr.bf16.mxu0 0
      %1489 = vmatpush2.bf16.msra.mxu0 0
      %1490 = vmatprep.subr.bf16.mxu0 0
      %1491 = vmatpush2.bf16.msra.mxu0 0
      %1492 = vmatprep.mubr.bf16.mxu0 0
      %1493 = vmatmul.mubr.bf16.gmra.mxu0 %v1455
      %v1494 = vpop.f32.mrf.mxu0
      %v1495 = vadd.f32 0.0, %v1494
      %v1496 = vpop.f32.mrf.mxu0
      %v1497 = vpop.f32.mrf.mxu0
      %v1498 = vpop.f32.mrf.mxu0
      %1499 = vdwg.mxu0
      %1500 = vrot.lane.b32.xlu0 %v657, 64
      %v1501 = vpop.permute.xlu0 %1500
      %v1503 = vsel %vm661, %v1162, 0
      %v1506 = vsel %vm1168, %v1501, 0
      %1508 = vmatprep.subr.bf16.mxu0 0
      %1509 = vmatpush1.bf16.msra.mxu0 0
      %1510 = vmatprep.subr.bf16.mxu0 0
      %1511 = vmatpush1.bf16.msra.mxu0 0
      %1512 = vmatprep.subr.bf16.mxu0 0
      %1513 = vmatpush1.bf16.msra.mxu0 0
      %1514 = vmatprep.subr.bf16.mxu0 0
      %1515 = vmatpush1.bf16.msra.mxu0 0
      %1516 = vmatprep.subr.bf16.mxu0 0
      %1517 = vmatpush1.bf16.msra.mxu0 0
      %1518 = vmatprep.subr.bf16.mxu0 0
      %1519 = vmatpush1.bf16.msra.mxu0 0
      %1520 = vmatprep.subr.bf16.mxu0 0
      %1521 = vmatpush1.bf16.msra.mxu0 0
      %1522 = vmatprep.subr.bf16.mxu0 0
      %1523 = vmatpush1.bf16.msra.mxu0 %v1506
      %1524 = vmatprep.subr.bf16.mxu0 0
      %1525 = vmatpush2.bf16.msra.mxu0 0
      %1526 = vmatprep.subr.bf16.mxu0 0
      %1527 = vmatpush2.bf16.msra.mxu0 0
      %1528 = vmatprep.subr.bf16.mxu0 0
      %1529 = vmatpush2.bf16.msra.mxu0 0
      %1530 = vmatprep.subr.bf16.mxu0 0
      %1531 = vmatpush2.bf16.msra.mxu0 0
      %1532 = vmatprep.subr.bf16.mxu0 0
      %1533 = vmatpush2.bf16.msra.mxu0 0
      %1534 = vmatprep.subr.bf16.mxu0 0
      %1535 = vmatpush2.bf16.msra.mxu0 0
      %1536 = vmatprep.subr.bf16.mxu0 0
      %1537 = vmatpush2.bf16.msra.mxu0 0
      %1538 = vmatprep.subr.bf16.mxu0 0
      %1539 = vmatpush2.bf16.msra.mxu0 0
      %1540 = vmatprep.mubr.bf16.mxu0 0
      %1541 = vmatmul.mubr.bf16.gmra.mxu0 %v1503
      %v1542 = vpop.f32.mrf.mxu0
      %v1543 = vadd.f32 0.0, %v1542
      %v1544 = vpop.f32.mrf.mxu0
      %v1545 = vpop.f32.mrf.mxu0
      %v1546 = vpop.f32.mrf.mxu0
      %1547 = vdwg.mxu0
      %1548 = vrot.lane.b32.xlu0 %v650, 120
      %v1549 = vpop.permute.xlu0 %1548
      %1550 = vrot.lane.b32.xlu0 %v650, 88
      %v1551 = vpop.permute.xlu0 %1550
      %v1553 = vsel %vm661, %v1549, 0
      %v1556 = vsel %vm661, %v1551, 0
      %1558 = vmatprep.subr.bf16.mxu0 0
      %1559 = vmatpush1.bf16.xpose.msra.mxu0 0
      %1560 = vmatprep.subr.bf16.mxu0 0
      %1561 = vmatpush1.bf16.xpose.msra.mxu0 0
      %1562 = vmatprep.subr.bf16.mxu0 0
      %1563 = vmatpush1.bf16.xpose.msra.mxu0 0
      %1564 = vmatprep.subr.bf16.mxu0 0
      %1565 = vmatpush1.bf16.xpose.msra.mxu0 0
      %1566 = vmatprep.subr.bf16.mxu0 0
      %1567 = vmatpush1.bf16.xpose.msra.mxu0 0
      %1568 = vmatprep.subr.bf16.mxu0 0
      %1569 = vmatpush1.bf16.xpose.msra.mxu0 0
      %1570 = vmatprep.subr.bf16.mxu0 0
      %1571 = vmatpush1.bf16.xpose.msra.mxu0 0
      %1572 = vmatprep.subr.bf16.mxu0 0
      %1573 = vmatpush1.bf16.xpose.msra.mxu0 %v1556
      %1574 = vmatprep.subr.bf16.mxu0 0
      %1575 = vmatpush2.bf16.xpose.msra.mxu0 0
      %1576 = vmatprep.subr.bf16.mxu0 0
      %1577 = vmatpush2.bf16.xpose.msra.mxu0 0
      %1578 = vmatprep.subr.bf16.mxu0 0
      %1579 = vmatpush2.bf16.xpose.msra.mxu0 0
      %1580 = vmatprep.subr.bf16.mxu0 0
      %1581 = vmatpush2.bf16.xpose.msra.mxu0 0
      %1582 = vmatprep.subr.bf16.mxu0 0
      %1583 = vmatpush2.bf16.xpose.msra.mxu0 0
      %1584 = vmatprep.subr.bf16.mxu0 0
      %1585 = vmatpush2.bf16.xpose.msra.mxu0 0
      %1586 = vmatprep.subr.bf16.mxu0 0
      %1587 = vmatpush2.bf16.xpose.msra.mxu0 0
      %1588 = vmatprep.subr.bf16.mxu0 0
      %1589 = vmatpush2.bf16.xpose.msra.mxu0 0
      %1590 = vmatprep.mubr.bf16.mxu0 0
      %1591 = vmatmul.mubr.bf16.gmra.mxu0 %v1553
      %v1592 = vpop.f32.mrf.mxu0
      %v1593 = vadd.f32 0.0, %v1592
      %v1594 = vpop.f32.mrf.mxu0
      %v1595 = vpop.f32.mrf.mxu0
      %v1596 = vpop.f32.mrf.mxu0
      %1597 = vdwg.mxu0
      %1598 = vrot.lane.b32.xlu0 %v651, 120
      %v1599 = vpop.permute.xlu0 %1598
      %1600 = vrot.lane.b32.xlu0 %v651, 88
      %v1601 = vpop.permute.xlu0 %1600
      %v1603 = vsel %vm661, %v1599, 0
      %v1606 = vsel %vm661, %v1601, 0
      %1608 = vmatprep.subr.bf16.mxu0 0
      %1609 = vmatpush1.bf16.xpose.msra.mxu0 0
      %1610 = vmatprep.subr.bf16.mxu0 0
      %1611 = vmatpush1.bf16.xpose.msra.mxu0 0
      %1612 = vmatprep.subr.bf16.mxu0 0
      %1613 = vmatpush1.bf16.xpose.msra.mxu0 0
      %1614 = vmatprep.subr.bf16.mxu0 0
      %1615 = vmatpush1.bf16.xpose.msra.mxu0 0
      %1616 = vmatprep.subr.bf16.mxu0 0
      %1617 = vmatpush1.bf16.xpose.msra.mxu0 0
      %1618 = vmatprep.subr.bf16.mxu0 0
      %1619 = vmatpush1.bf16.xpose.msra.mxu0 0
      %1620 = vmatprep.subr.bf16.mxu0 0
      %1621 = vmatpush1.bf16.xpose.msra.mxu0 0
      %1622 = vmatprep.subr.bf16.mxu0 0
      %1623 = vmatpush1.bf16.xpose.msra.mxu0 %v1606
      %1624 = vmatprep.subr.bf16.mxu0 0
      %1625 = vmatpush2.bf16.xpose.msra.mxu0 0
      %1626 = vmatprep.subr.bf16.mxu0 0
      %1627 = vmatpush2.bf16.xpose.msra.mxu0 0
      %1628 = vmatprep.subr.bf16.mxu0 0
      %1629 = vmatpush2.bf16.xpose.msra.mxu0 0
      %1630 = vmatprep.subr.bf16.mxu0 0
      %1631 = vmatpush2.bf16.xpose.msra.mxu0 0
      %1632 = vmatprep.subr.bf16.mxu0 0
      %1633 = vmatpush2.bf16.xpose.msra.mxu0 0
      %1634 = vmatprep.subr.bf16.mxu0 0
      %1635 = vmatpush2.bf16.xpose.msra.mxu0 0
      %1636 = vmatprep.subr.bf16.mxu0 0
      %1637 = vmatpush2.bf16.xpose.msra.mxu0 0
      %1638 = vmatprep.subr.bf16.mxu0 0
      %1639 = vmatpush2.bf16.xpose.msra.mxu0 0
      %1640 = vmatprep.mubr.bf16.mxu0 0
      %1641 = vmatmul.mubr.bf16.gmra.mxu0 %v1603
      %v1642 = vpop.f32.mrf.mxu0
      %v1643 = vadd.f32 0.0, %v1642
      %v1644 = vpop.f32.mrf.mxu0
      %v1645 = vpop.f32.mrf.mxu0
      %v1646 = vpop.f32.mrf.mxu0
      %1647 = vdwg.mxu0
      %1648 = vrot.lane.b32.xlu0 %v652, 120
      %v1649 = vpop.permute.xlu0 %1648
      %1650 = vrot.lane.b32.xlu0 %v652, 88
      %v1651 = vpop.permute.xlu0 %1650
      %v1653 = vsel %vm661, %v1649, 0
      %v1656 = vsel %vm661, %v1651, 0
      %1658 = vmatprep.subr.bf16.mxu0 0
      %1659 = vmatpush1.bf16.xpose.msra.mxu0 0
      %1660 = vmatprep.subr.bf16.mxu0 0
      %1661 = vmatpush1.bf16.xpose.msra.mxu0 0
      %1662 = vmatprep.subr.bf16.mxu0 0
      %1663 = vmatpush1.bf16.xpose.msra.mxu0 0
      %1664 = vmatprep.subr.bf16.mxu0 0
      %1665 = vmatpush1.bf16.xpose.msra.mxu0 0
      %1666 = vmatprep.subr.bf16.mxu0 0
      %1667 = vmatpush1.bf16.xpose.msra.mxu0 0
      %1668 = vmatprep.subr.bf16.mxu0 0
      %1669 = vmatpush1.bf16.xpose.msra.mxu0 0
      %1670 = vmatprep.subr.bf16.mxu0 0
      %1671 = vmatpush1.bf16.xpose.msra.mxu0 0
      %1672 = vmatprep.subr.bf16.mxu0 0
      %1673 = vmatpush1.bf16.xpose.msra.mxu0 %v1656
      %1674 = vmatprep.subr.bf16.mxu0 0
      %1675 = vmatpush2.bf16.xpose.msra.mxu0 0
      %1676 = vmatprep.subr.bf16.mxu0 0
      %1677 = vmatpush2.bf16.xpose.msra.mxu0 0
      %1678 = vmatprep.subr.bf16.mxu0 0
      %1679 = vmatpush2.bf16.xpose.msra.mxu0 0
      %1680 = vmatprep.subr.bf16.mxu0 0
      %1681 = vmatpush2.bf16.xpose.msra.mxu0 0
      %1682 = vmatprep.subr.bf16.mxu0 0
      %1683 = vmatpush2.bf16.xpose.msra.mxu0 0
      %1684 = vmatprep.subr.bf16.mxu0 0
      %1685 = vmatpush2.bf16.xpose.msra.mxu0 0
      %1686 = vmatprep.subr.bf16.mxu0 0
      %1687 = vmatpush2.bf16.xpose.msra.mxu0 0
      %1688 = vmatprep.subr.bf16.mxu0 0
      %1689 = vmatpush2.bf16.xpose.msra.mxu0 0
      %1690 = vmatprep.mubr.bf16.mxu0 0
      %1691 = vmatmul.mubr.bf16.gmra.mxu0 %v1653
      %v1692 = vpop.f32.mrf.mxu0
      %v1693 = vadd.f32 0.0, %v1692
      %v1694 = vpop.f32.mrf.mxu0
      %v1695 = vpop.f32.mrf.mxu0
      %v1696 = vpop.f32.mrf.mxu0
      %1697 = vdwg.mxu0
      %1698 = vrot.lane.b32.xlu0 %v653, 120
      %v1699 = vpop.permute.xlu0 %1698
      %1700 = vrot.lane.b32.xlu0 %v653, 88
      %v1701 = vpop.permute.xlu0 %1700
      %v1703 = vsel %vm661, %v1699, 0
      %v1706 = vsel %vm661, %v1701, 0
      %1708 = vmatprep.subr.bf16.mxu0 0
      %1709 = vmatpush1.bf16.xpose.msra.mxu0 0
      %1710 = vmatprep.subr.bf16.mxu0 0
      %1711 = vmatpush1.bf16.xpose.msra.mxu0 0
      %1712 = vmatprep.subr.bf16.mxu0 0
      %1713 = vmatpush1.bf16.xpose.msra.mxu0 0
      %1714 = vmatprep.subr.bf16.mxu0 0
      %1715 = vmatpush1.bf16.xpose.msra.mxu0 0
      %1716 = vmatprep.subr.bf16.mxu0 0
      %1717 = vmatpush1.bf16.xpose.msra.mxu0 0
      %1718 = vmatprep.subr.bf16.mxu0 0
      %1719 = vmatpush1.bf16.xpose.msra.mxu0 0
      %1720 = vmatprep.subr.bf16.mxu0 0
      %1721 = vmatpush1.bf16.xpose.msra.mxu0 0
      %1722 = vmatprep.subr.bf16.mxu0 0
      %1723 = vmatpush1.bf16.xpose.msra.mxu0 %v1706
      %1724 = vmatprep.subr.bf16.mxu0 0
      %1725 = vmatpush2.bf16.xpose.msra.mxu0 0
      %1726 = vmatprep.subr.bf16.mxu0 0
      %1727 = vmatpush2.bf16.xpose.msra.mxu0 0
      %1728 = vmatprep.subr.bf16.mxu0 0
      %1729 = vmatpush2.bf16.xpose.msra.mxu0 0
      %1730 = vmatprep.subr.bf16.mxu0 0
      %1731 = vmatpush2.bf16.xpose.msra.mxu0 0
      %1732 = vmatprep.subr.bf16.mxu0 0
      %1733 = vmatpush2.bf16.xpose.msra.mxu0 0
      %1734 = vmatprep.subr.bf16.mxu0 0
      %1735 = vmatpush2.bf16.xpose.msra.mxu0 0
      %1736 = vmatprep.subr.bf16.mxu0 0
      %1737 = vmatpush2.bf16.xpose.msra.mxu0 0
      %1738 = vmatprep.subr.bf16.mxu0 0
      %1739 = vmatpush2.bf16.xpose.msra.mxu0 0
      %1740 = vmatprep.mubr.bf16.mxu0 0
      %1741 = vmatmul.mubr.bf16.gmra.mxu0 %v1703
      %v1742 = vpop.f32.mrf.mxu0
      %v1743 = vadd.f32 0.0, %v1742
      %v1744 = vpop.f32.mrf.mxu0
      %v1745 = vpop.f32.mrf.mxu0
      %v1746 = vpop.f32.mrf.mxu0
      %1747 = vdwg.mxu0
      %1748 = vrot.lane.b32.xlu0 %v654, 120
      %v1749 = vpop.permute.xlu0 %1748
      %1750 = vrot.lane.b32.xlu0 %v654, 88
      %v1751 = vpop.permute.xlu0 %1750
      %v1753 = vsel %vm661, %v1749, 0
      %v1756 = vsel %vm661, %v1751, 0
      %1758 = vmatprep.subr.bf16.mxu0 0
      %1759 = vmatpush1.bf16.xpose.msra.mxu0 0
      %1760 = vmatprep.subr.bf16.mxu0 0
      %1761 = vmatpush1.bf16.xpose.msra.mxu0 0
      %1762 = vmatprep.subr.bf16.mxu0 0
      %1763 = vmatpush1.bf16.xpose.msra.mxu0 0
      %1764 = vmatprep.subr.bf16.mxu0 0
      %1765 = vmatpush1.bf16.xpose.msra.mxu0 0
      %1766 = vmatprep.subr.bf16.mxu0 0
      %1767 = vmatpush1.bf16.xpose.msra.mxu0 0
      %1768 = vmatprep.subr.bf16.mxu0 0
      %1769 = vmatpush1.bf16.xpose.msra.mxu0 0
      %1770 = vmatprep.subr.bf16.mxu0 0
      %1771 = vmatpush1.bf16.xpose.msra.mxu0 0
      %1772 = vmatprep.subr.bf16.mxu0 0
      %1773 = vmatpush1.bf16.xpose.msra.mxu0 %v1756
      %1774 = vmatprep.subr.bf16.mxu0 0
      %1775 = vmatpush2.bf16.xpose.msra.mxu0 0
      %1776 = vmatprep.subr.bf16.mxu0 0
      %1777 = vmatpush2.bf16.xpose.msra.mxu0 0
      %1778 = vmatprep.subr.bf16.mxu0 0
      %1779 = vmatpush2.bf16.xpose.msra.mxu0 0
      %1780 = vmatprep.subr.bf16.mxu0 0
      %1781 = vmatpush2.bf16.xpose.msra.mxu0 0
      %1782 = vmatprep.subr.bf16.mxu0 0
      %1783 = vmatpush2.bf16.xpose.msra.mxu0 0
      %1784 = vmatprep.subr.bf16.mxu0 0
      %1785 = vmatpush2.bf16.xpose.msra.mxu0 0
      %1786 = vmatprep.subr.bf16.mxu0 0
      %1787 = vmatpush2.bf16.xpose.msra.mxu0 0
      %1788 = vmatprep.subr.bf16.mxu0 0
      %1789 = vmatpush2.bf16.xpose.msra.mxu0 0
      %1790 = vmatprep.mubr.bf16.mxu0 0
      %1791 = vmatmul.mubr.bf16.gmra.mxu0 %v1753
      %v1792 = vpop.f32.mrf.mxu0
      %v1793 = vadd.f32 0.0, %v1792
      %v1794 = vpop.f32.mrf.mxu0
      %v1795 = vpop.f32.mrf.mxu0
      %v1796 = vpop.f32.mrf.mxu0
      %1797 = vdwg.mxu0
      %1798 = vrot.lane.b32.xlu0 %v655, 120
      %v1799 = vpop.permute.xlu0 %1798
      %1800 = vrot.lane.b32.xlu0 %v655, 88
      %v1801 = vpop.permute.xlu0 %1800
      %v1803 = vsel %vm661, %v1799, 0
      %v1806 = vsel %vm661, %v1801, 0
      %1808 = vmatprep.subr.bf16.mxu0 0
      %1809 = vmatpush1.bf16.xpose.msra.mxu0 0
      %1810 = vmatprep.subr.bf16.mxu0 0
      %1811 = vmatpush1.bf16.xpose.msra.mxu0 0
      %1812 = vmatprep.subr.bf16.mxu0 0
      %1813 = vmatpush1.bf16.xpose.msra.mxu0 0
      %1814 = vmatprep.subr.bf16.mxu0 0
      %1815 = vmatpush1.bf16.xpose.msra.mxu0 0
      %1816 = vmatprep.subr.bf16.mxu0 0
      %1817 = vmatpush1.bf16.xpose.msra.mxu0 0
      %1818 = vmatprep.subr.bf16.mxu0 0
      %1819 = vmatpush1.bf16.xpose.msra.mxu0 0
      %1820 = vmatprep.subr.bf16.mxu0 0
      %1821 = vmatpush1.bf16.xpose.msra.mxu0 0
      %1822 = vmatprep.subr.bf16.mxu0 0
      %1823 = vmatpush1.bf16.xpose.msra.mxu0 %v1806
      %1824 = vmatprep.subr.bf16.mxu0 0
      %1825 = vmatpush2.bf16.xpose.msra.mxu0 0
      %1826 = vmatprep.subr.bf16.mxu0 0
      %1827 = vmatpush2.bf16.xpose.msra.mxu0 0
      %1828 = vmatprep.subr.bf16.mxu0 0
      %1829 = vmatpush2.bf16.xpose.msra.mxu0 0
      %1830 = vmatprep.subr.bf16.mxu0 0
      %1831 = vmatpush2.bf16.xpose.msra.mxu0 0
      %1832 = vmatprep.subr.bf16.mxu0 0
      %1833 = vmatpush2.bf16.xpose.msra.mxu0 0
      %1834 = vmatprep.subr.bf16.mxu0 0
      %1835 = vmatpush2.bf16.xpose.msra.mxu0 0
      %1836 = vmatprep.subr.bf16.mxu0 0
      %1837 = vmatpush2.bf16.xpose.msra.mxu0 0
      %1838 = vmatprep.subr.bf16.mxu0 0
      %1839 = vmatpush2.bf16.xpose.msra.mxu0 0
      %1840 = vmatprep.mubr.bf16.mxu0 0
      %1841 = vmatmul.mubr.bf16.gmra.mxu0 %v1803
      %v1842 = vpop.f32.mrf.mxu0
      %v1843 = vadd.f32 0.0, %v1842
      %v1844 = vpop.f32.mrf.mxu0
      %v1845 = vpop.f32.mrf.mxu0
      %v1846 = vpop.f32.mrf.mxu0
      %1847 = vdwg.mxu0
      %1848 = vrot.lane.b32.xlu0 %v656, 120
      %v1849 = vpop.permute.xlu0 %1848
      %1850 = vrot.lane.b32.xlu0 %v656, 88
      %v1851 = vpop.permute.xlu0 %1850
      %v1853 = vsel %vm661, %v1849, 0
      %v1856 = vsel %vm661, %v1851, 0
      %1858 = vmatprep.subr.bf16.mxu0 0
      %1859 = vmatpush1.bf16.xpose.msra.mxu0 0
      %1860 = vmatprep.subr.bf16.mxu0 0
      %1861 = vmatpush1.bf16.xpose.msra.mxu0 0
      %1862 = vmatprep.subr.bf16.mxu0 0
      %1863 = vmatpush1.bf16.xpose.msra.mxu0 0
      %1864 = vmatprep.subr.bf16.mxu0 0
      %1865 = vmatpush1.bf16.xpose.msra.mxu0 0
      %1866 = vmatprep.subr.bf16.mxu0 0
      %1867 = vmatpush1.bf16.xpose.msra.mxu0 0
      %1868 = vmatprep.subr.bf16.mxu0 0
      %1869 = vmatpush1.bf16.xpose.msra.mxu0 0
      %1870 = vmatprep.subr.bf16.mxu0 0
      %1871 = vmatpush1.bf16.xpose.msra.mxu0 0
      %1872 = vmatprep.subr.bf16.mxu0 0
      %1873 = vmatpush1.bf16.xpose.msra.mxu0 %v1856
      %1874 = vmatprep.subr.bf16.mxu0 0
      %1875 = vmatpush2.bf16.xpose.msra.mxu0 0
      %1876 = vmatprep.subr.bf16.mxu0 0
      %1877 = vmatpush2.bf16.xpose.msra.mxu0 0
      %1878 = vmatprep.subr.bf16.mxu0 0
      %1879 = vmatpush2.bf16.xpose.msra.mxu0 0
      %1880 = vmatprep.subr.bf16.mxu0 0
      %1881 = vmatpush2.bf16.xpose.msra.mxu0 0
      %1882 = vmatprep.subr.bf16.mxu0 0
      %1883 = vmatpush2.bf16.xpose.msra.mxu0 0
      %1884 = vmatprep.subr.bf16.mxu0 0
      %1885 = vmatpush2.bf16.xpose.msra.mxu0 0
      %1886 = vmatprep.subr.bf16.mxu0 0
      %1887 = vmatpush2.bf16.xpose.msra.mxu0 0
      %1888 = vmatprep.subr.bf16.mxu0 0
      %1889 = vmatpush2.bf16.xpose.msra.mxu0 0
      %1890 = vmatprep.mubr.bf16.mxu0 0
      %1891 = vmatmul.mubr.bf16.gmra.mxu0 %v1853
      %v1892 = vpop.f32.mrf.mxu0
      %v1893 = vadd.f32 0.0, %v1892
      %v1894 = vpop.f32.mrf.mxu0
      %v1895 = vpop.f32.mrf.mxu0
      %v1896 = vpop.f32.mrf.mxu0
      %1897 = vdwg.mxu0
      %1898 = vrot.lane.b32.xlu0 %v657, 120
      %v1899 = vpop.permute.xlu0 %1898
      %1900 = vrot.lane.b32.xlu0 %v657, 88
      %v1901 = vpop.permute.xlu0 %1900
      %v1903 = vsel %vm661, %v1899, 0
      %v1906 = vsel %vm661, %v1901, 0
      %1908 = vmatprep.subr.bf16.mxu0 0
      %1909 = vmatpush1.bf16.xpose.msra.mxu0 0
      %1910 = vmatprep.subr.bf16.mxu0 0
      %1911 = vmatpush1.bf16.xpose.msra.mxu0 0
      %1912 = vmatprep.subr.bf16.mxu0 0
      %1913 = vmatpush1.bf16.xpose.msra.mxu0 0
      %1914 = vmatprep.subr.bf16.mxu0 0
      %1915 = vmatpush1.bf16.xpose.msra.mxu0 0
      %1916 = vmatprep.subr.bf16.mxu0 0
      %1917 = vmatpush1.bf16.xpose.msra.mxu0 0
      %1918 = vmatprep.subr.bf16.mxu0 0
      %1919 = vmatpush1.bf16.xpose.msra.mxu0 0
      %1920 = vmatprep.subr.bf16.mxu0 0
      %1921 = vmatpush1.bf16.xpose.msra.mxu0 0
      %1922 = vmatprep.subr.bf16.mxu0 0
      %1923 = vmatpush1.bf16.xpose.msra.mxu0 %v1906
      %1924 = vmatprep.subr.bf16.mxu0 0
      %1925 = vmatpush2.bf16.xpose.msra.mxu0 0
      %1926 = vmatprep.subr.bf16.mxu0 0
      %1927 = vmatpush2.bf16.xpose.msra.mxu0 0
      %1928 = vmatprep.subr.bf16.mxu0 0
      %1929 = vmatpush2.bf16.xpose.msra.mxu0 0
      %1930 = vmatprep.subr.bf16.mxu0 0
      %1931 = vmatpush2.bf16.xpose.msra.mxu0 0
      %1932 = vmatprep.subr.bf16.mxu0 0
      %1933 = vmatpush2.bf16.xpose.msra.mxu0 0
      %1934 = vmatprep.subr.bf16.mxu0 0
      %1935 = vmatpush2.bf16.xpose.msra.mxu0 0
      %1936 = vmatprep.subr.bf16.mxu0 0
      %1937 = vmatpush2.bf16.xpose.msra.mxu0 0
      %1938 = vmatprep.subr.bf16.mxu0 0
      %1939 = vmatpush2.bf16.xpose.msra.mxu0 0
      %1940 = vmatprep.mubr.bf16.mxu0 0
      %1941 = vmatmul.mubr.bf16.gmra.mxu0 %v1903
      %v1942 = vpop.f32.mrf.mxu0
      %v1943 = vadd.f32 0.0, %v1942
      %v1944 = vpop.f32.mrf.mxu0
      %v1945 = vpop.f32.mrf.mxu0
      %v1946 = vpop.f32.mrf.mxu0
      %1947 = vdwg.mxu0
      %v1948 = vmul.f32 %v1593, 0.35355338
      %v1949 = vmul.f32 %v1643, 0.35355338
      %v1950 = vmul.f32 %v1693, 0.35355338
      %v1951 = vmul.f32 %v1743, 0.35355338
      %v1952 = vmul.f32 %v1793, 0.35355338
      %v1953 = vmul.f32 %v1843, 0.35355338
      %v1954 = vmul.f32 %v1893, 0.35355338
      %v1955 = vmul.f32 %v1943, 0.35355338
      %v1956 = vadd.f32 %v1948, %v649
      %v1957 = vadd.f32 %v1949, %v649
      %v1958 = vadd.f32 %v1950, %v649
      %v1959 = vadd.f32 %v1951, %v649
      %v1960 = vadd.f32 %v1952, %v649
      %v1961 = vadd.f32 %v1953, %v649
      %v1962 = vadd.f32 %v1954, %v649
      %v1963 = vadd.f32 %v1955, %v649
      %v1964 = vsel %vm661, %v1956, -inf
      %1965 = vmax.xlane.f32.xlu0 %v1964
      %v1966 = vpop.xlane.xlu0 %1965
      %v1967 = vsel %vm661, %v1957, -inf
      %1968 = vmax.xlane.f32.xlu0 %v1967
      %v1969 = vpop.xlane.xlu0 %1968
      %v1970 = vsel %vm661, %v1958, -inf
      %1971 = vmax.xlane.f32.xlu0 %v1970
      %v1972 = vpop.xlane.xlu0 %1971
      %v1973 = vsel %vm661, %v1959, -inf
      %1974 = vmax.xlane.f32.xlu0 %v1973
      %v1975 = vpop.xlane.xlu0 %1974
      %v1976 = vsel %vm661, %v1960, -inf
      %1977 = vmax.xlane.f32.xlu0 %v1976
      %v1978 = vpop.xlane.xlu0 %1977
      %v1979 = vsel %vm661, %v1961, -inf
      %1980 = vmax.xlane.f32.xlu0 %v1979
      %v1981 = vpop.xlane.xlu0 %1980
      %v1982 = vsel %vm661, %v1962, -inf
      %1983 = vmax.xlane.f32.xlu0 %v1982
      %v1984 = vpop.xlane.xlu0 %1983
      %v1985 = vsel %vm661, %v1963, -inf
      %1986 = vmax.xlane.f32.xlu0 %v1985
      %v1987 = vpop.xlane.xlu0 %1986
      %v1988 = vsub.f32 %v1956, %v1966
      %v1989 = vsub.f32 %v1957, %v1969
      %v1990 = vsub.f32 %v1958, %v1972
      %v1991 = vsub.f32 %v1959, %v1975
      %v1992 = vsub.f32 %v1960, %v1978
      %v1993 = vsub.f32 %v1961, %v1981
      %v1994 = vsub.f32 %v1962, %v1984
      %v1995 = vsub.f32 %v1963, %v1987
      %v1996 = vmul.f32 %v1988, 1.442695
      %v1997 = vpow.pop %v1996
      %v1998 = vmul.f32 %v1989, 1.442695
      %v1999 = vpow.pop %v1998
      %v2000 = vmul.f32 %v1990, 1.442695
      %v2001 = vpow.pop %v2000
      %v2002 = vmul.f32 %v1991, 1.442695
      %v2003 = vpow.pop %v2002
      %v2004 = vmul.f32 %v1992, 1.442695
      %v2005 = vpow.pop %v2004
      %v2006 = vmul.f32 %v1993, 1.442695
      %v2007 = vpow.pop %v2006
      %v2008 = vmul.f32 %v1994, 1.442695
      %v2009 = vpow.pop %v2008
      %v2010 = vmul.f32 %v1995, 1.442695
      %v2011 = vpow.pop %v2010
      %v2012 = vsel %vm661, %v1997, 0.0
      %2013 = vadd.xlane.f32.xlu0 %v2012
      %v2014 = vpop.xlane.xlu0 %2013
      %v2015 = vsel %vm661, %v1999, 0.0
      %2016 = vadd.xlane.f32.xlu0 %v2015
      %v2017 = vpop.xlane.xlu0 %2016
      %v2018 = vsel %vm661, %v2001, 0.0
      %2019 = vadd.xlane.f32.xlu0 %v2018
      %v2020 = vpop.xlane.xlu0 %2019
      %v2021 = vsel %vm661, %v2003, 0.0
      %2022 = vadd.xlane.f32.xlu0 %v2021
      %v2023 = vpop.xlane.xlu0 %2022
      %v2024 = vsel %vm661, %v2005, 0.0
      %2025 = vadd.xlane.f32.xlu0 %v2024
      %v2026 = vpop.xlane.xlu0 %2025
      %v2027 = vsel %vm661, %v2007, 0.0
      %2028 = vadd.xlane.f32.xlu0 %v2027
      %v2029 = vpop.xlane.xlu0 %2028
      %v2030 = vsel %vm661, %v2009, 0.0
      %2031 = vadd.xlane.f32.xlu0 %v2030
      %v2032 = vpop.xlane.xlu0 %2031
      %v2033 = vsel %vm661, %v2011, 0.0
      %2034 = vadd.xlane.f32.xlu0 %v2033
      %v2035 = vpop.xlane.xlu0 %2034
      %v2036 = vrcp.pop %v2014
      %v2037 = vrcp.pop %v2017
      %v2038 = vrcp.pop %v2020
      %v2039 = vrcp.pop %v2023
      %v2040 = vrcp.pop %v2026
      %v2041 = vrcp.pop %v2029
      %v2042 = vrcp.pop %v2032
      %v2043 = vrcp.pop %v2035
      %v2044 = vmul.f32 %v1997, %v2036
      %v2045 = vmul.f32 %v1999, %v2037
      %v2046 = vmul.f32 %v2001, %v2038
      %v2047 = vmul.f32 %v2003, %v2039
      %v2048 = vmul.f32 %v2005, %v2040
      %v2049 = vmul.f32 %v2007, %v2041
      %v2050 = vmul.f32 %v2009, %v2042
      %v2051 = vmul.f32 %v2011, %v2043
      %v2052 = vpack.c.bf16 %v2044, %v2044
      %v2053 = vpack.c.bf16 %v2045, %v2045
      %v2054 = vpack.c.bf16 %v2046, %v2046
      %v2055 = vpack.c.bf16 %v2047, %v2047
      %v2056 = vpack.c.bf16 %v2048, %v2048
      %v2057 = vpack.c.bf16 %v2049, %v2049
      %v2058 = vpack.c.bf16 %v2050, %v2050
      %v2059 = vpack.c.bf16 %v2051, %v2051
      %2060 = vrot.lane.b32.xlu0 %v650, 56
      %v2061 = vpop.permute.xlu0 %2060
      %v2063 = vsel %vm661, %v2052, 0
      %v2066 = vsel %vm1168, %v2061, 0
      %2068 = vmatprep.subr.bf16.mxu0 0
      %2069 = vmatpush1.bf16.msra.mxu0 0
      %2070 = vmatprep.subr.bf16.mxu0 0
      %2071 = vmatpush1.bf16.msra.mxu0 0
      %2072 = vmatprep.subr.bf16.mxu0 0
      %2073 = vmatpush1.bf16.msra.mxu0 0
      %2074 = vmatprep.subr.bf16.mxu0 0
      %2075 = vmatpush1.bf16.msra.mxu0 0
      %2076 = vmatprep.subr.bf16.mxu0 0
      %2077 = vmatpush1.bf16.msra.mxu0 0
      %2078 = vmatprep.subr.bf16.mxu0 0
      %2079 = vmatpush1.bf16.msra.mxu0 0
      %2080 = vmatprep.subr.bf16.mxu0 0
      %2081 = vmatpush1.bf16.msra.mxu0 0
      %2082 = vmatprep.subr.bf16.mxu0 0
      %2083 = vmatpush1.bf16.msra.mxu0 %v2066
      %2084 = vmatprep.subr.bf16.mxu0 0
      %2085 = vmatpush2.bf16.msra.mxu0 0
      %2086 = vmatprep.subr.bf16.mxu0 0
      %2087 = vmatpush2.bf16.msra.mxu0 0
      %2088 = vmatprep.subr.bf16.mxu0 0
      %2089 = vmatpush2.bf16.msra.mxu0 0
      %2090 = vmatprep.subr.bf16.mxu0 0
      %2091 = vmatpush2.bf16.msra.mxu0 0
      %2092 = vmatprep.subr.bf16.mxu0 0
      %2093 = vmatpush2.bf16.msra.mxu0 0
      %2094 = vmatprep.subr.bf16.mxu0 0
      %2095 = vmatpush2.bf16.msra.mxu0 0
      %2096 = vmatprep.subr.bf16.mxu0 0
      %2097 = vmatpush2.bf16.msra.mxu0 0
      %2098 = vmatprep.subr.bf16.mxu0 0
      %2099 = vmatpush2.bf16.msra.mxu0 0
      %2100 = vmatprep.mubr.bf16.mxu0 0
      %2101 = vmatmul.mubr.bf16.gmra.mxu0 %v2063
      %v2102 = vpop.f32.mrf.mxu0
      %v2103 = vadd.f32 0.0, %v2102
      %v2104 = vpop.f32.mrf.mxu0
      %v2105 = vpop.f32.mrf.mxu0
      %v2106 = vpop.f32.mrf.mxu0
      %2107 = vdwg.mxu0
      %2108 = vrot.lane.b32.xlu0 %v651, 56
      %v2109 = vpop.permute.xlu0 %2108
      %v2111 = vsel %vm661, %v2053, 0
      %v2114 = vsel %vm1168, %v2109, 0
      %2116 = vmatprep.subr.bf16.mxu0 0
      %2117 = vmatpush1.bf16.msra.mxu0 0
      %2118 = vmatprep.subr.bf16.mxu0 0
      %2119 = vmatpush1.bf16.msra.mxu0 0
      %2120 = vmatprep.subr.bf16.mxu0 0
      %2121 = vmatpush1.bf16.msra.mxu0 0
      %2122 = vmatprep.subr.bf16.mxu0 0
      %2123 = vmatpush1.bf16.msra.mxu0 0
      %2124 = vmatprep.subr.bf16.mxu0 0
      %2125 = vmatpush1.bf16.msra.mxu0 0
      %2126 = vmatprep.subr.bf16.mxu0 0
      %2127 = vmatpush1.bf16.msra.mxu0 0
      %2128 = vmatprep.subr.bf16.mxu0 0
      %2129 = vmatpush1.bf16.msra.mxu0 0
      %2130 = vmatprep.subr.bf16.mxu0 0
      %2131 = vmatpush1.bf16.msra.mxu0 %v2114
      %2132 = vmatprep.subr.bf16.mxu0 0
      %2133 = vmatpush2.bf16.msra.mxu0 0
      %2134 = vmatprep.subr.bf16.mxu0 0
      %2135 = vmatpush2.bf16.msra.mxu0 0
      %2136 = vmatprep.subr.bf16.mxu0 0
      %2137 = vmatpush2.bf16.msra.mxu0 0
      %2138 = vmatprep.subr.bf16.mxu0 0
      %2139 = vmatpush2.bf16.msra.mxu0 0
      %2140 = vmatprep.subr.bf16.mxu0 0
      %2141 = vmatpush2.bf16.msra.mxu0 0
      %2142 = vmatprep.subr.bf16.mxu0 0
      %2143 = vmatpush2.bf16.msra.mxu0 0
      %2144 = vmatprep.subr.bf16.mxu0 0
      %2145 = vmatpush2.bf16.msra.mxu0 0
      %2146 = vmatprep.subr.bf16.mxu0 0
      %2147 = vmatpush2.bf16.msra.mxu0 0
      %2148 = vmatprep.mubr.bf16.mxu0 0
      %2149 = vmatmul.mubr.bf16.gmra.mxu0 %v2111
      %v2150 = vpop.f32.mrf.mxu0
      %v2151 = vadd.f32 0.0, %v2150
      %v2152 = vpop.f32.mrf.mxu0
      %v2153 = vpop.f32.mrf.mxu0
      %v2154 = vpop.f32.mrf.mxu0
      %2155 = vdwg.mxu0
      %2156 = vrot.lane.b32.xlu0 %v652, 56
      %v2157 = vpop.permute.xlu0 %2156
      %v2159 = vsel %vm661, %v2054, 0
      %v2162 = vsel %vm1168, %v2157, 0
      %2164 = vmatprep.subr.bf16.mxu0 0
      %2165 = vmatpush1.bf16.msra.mxu0 0
      %2166 = vmatprep.subr.bf16.mxu0 0
      %2167 = vmatpush1.bf16.msra.mxu0 0
      %2168 = vmatprep.subr.bf16.mxu0 0
      %2169 = vmatpush1.bf16.msra.mxu0 0
      %2170 = vmatprep.subr.bf16.mxu0 0
      %2171 = vmatpush1.bf16.msra.mxu0 0
      %2172 = vmatprep.subr.bf16.mxu0 0
      %2173 = vmatpush1.bf16.msra.mxu0 0
      %2174 = vmatprep.subr.bf16.mxu0 0
      %2175 = vmatpush1.bf16.msra.mxu0 0
      %2176 = vmatprep.subr.bf16.mxu0 0
      %2177 = vmatpush1.bf16.msra.mxu0 0
      %2178 = vmatprep.subr.bf16.mxu0 0
      %2179 = vmatpush1.bf16.msra.mxu0 %v2162
      %2180 = vmatprep.subr.bf16.mxu0 0
      %2181 = vmatpush2.bf16.msra.mxu0 0
      %2182 = vmatprep.subr.bf16.mxu0 0
      %2183 = vmatpush2.bf16.msra.mxu0 0
      %2184 = vmatprep.subr.bf16.mxu0 0
      %2185 = vmatpush2.bf16.msra.mxu0 0
      %2186 = vmatprep.subr.bf16.mxu0 0
      %2187 = vmatpush2.bf16.msra.mxu0 0
      %2188 = vmatprep.subr.bf16.mxu0 0
      %2189 = vmatpush2.bf16.msra.mxu0 0
      %2190 = vmatprep.subr.bf16.mxu0 0
      %2191 = vmatpush2.bf16.msra.mxu0 0
      %2192 = vmatprep.subr.bf16.mxu0 0
      %2193 = vmatpush2.bf16.msra.mxu0 0
      %2194 = vmatprep.subr.bf16.mxu0 0
      %2195 = vmatpush2.bf16.msra.mxu0 0
      %2196 = vmatprep.mubr.bf16.mxu0 0
      %2197 = vmatmul.mubr.bf16.gmra.mxu0 %v2159
      %v2198 = vpop.f32.mrf.mxu0
      %v2199 = vadd.f32 0.0, %v2198
      %v2200 = vpop.f32.mrf.mxu0
      %v2201 = vpop.f32.mrf.mxu0
      %v2202 = vpop.f32.mrf.mxu0
      %2203 = vdwg.mxu0
      %2204 = vrot.lane.b32.xlu0 %v653, 56
      %v2205 = vpop.permute.xlu0 %2204
      %v2207 = vsel %vm661, %v2055, 0
      %v2210 = vsel %vm1168, %v2205, 0
      %2212 = vmatprep.subr.bf16.mxu0 0
      %2213 = vmatpush1.bf16.msra.mxu0 0
      %2214 = vmatprep.subr.bf16.mxu0 0
      %2215 = vmatpush1.bf16.msra.mxu0 0
      %2216 = vmatprep.subr.bf16.mxu0 0
      %2217 = vmatpush1.bf16.msra.mxu0 0
      %2218 = vmatprep.subr.bf16.mxu0 0
      %2219 = vmatpush1.bf16.msra.mxu0 0
      %2220 = vmatprep.subr.bf16.mxu0 0
      %2221 = vmatpush1.bf16.msra.mxu0 0
      %2222 = vmatprep.subr.bf16.mxu0 0
      %2223 = vmatpush1.bf16.msra.mxu0 0
      %2224 = vmatprep.subr.bf16.mxu0 0
      %2225 = vmatpush1.bf16.msra.mxu0 0
      %2226 = vmatprep.subr.bf16.mxu0 0
      %2227 = vmatpush1.bf16.msra.mxu0 %v2210
      %2228 = vmatprep.subr.bf16.mxu0 0
      %2229 = vmatpush2.bf16.msra.mxu0 0
      %2230 = vmatprep.subr.bf16.mxu0 0
      %2231 = vmatpush2.bf16.msra.mxu0 0
      %2232 = vmatprep.subr.bf16.mxu0 0
      %2233 = vmatpush2.bf16.msra.mxu0 0
      %2234 = vmatprep.subr.bf16.mxu0 0
      %2235 = vmatpush2.bf16.msra.mxu0 0
      %2236 = vmatprep.subr.bf16.mxu0 0
      %2237 = vmatpush2.bf16.msra.mxu0 0
      %2238 = vmatprep.subr.bf16.mxu0 0
      %2239 = vmatpush2.bf16.msra.mxu0 0
      %2240 = vmatprep.subr.bf16.mxu0 0
      %2241 = vmatpush2.bf16.msra.mxu0 0
      %2242 = vmatprep.subr.bf16.mxu0 0
      %2243 = vmatpush2.bf16.msra.mxu0 0
      %2244 = vmatprep.mubr.bf16.mxu0 0
      %2245 = vmatmul.mubr.bf16.gmra.mxu0 %v2207
      %v2246 = vpop.f32.mrf.mxu0
      %v2247 = vadd.f32 0.0, %v2246
      %v2248 = vpop.f32.mrf.mxu0
      %v2249 = vpop.f32.mrf.mxu0
      %v2250 = vpop.f32.mrf.mxu0
      %2251 = vdwg.mxu0
      %2252 = vrot.lane.b32.xlu0 %v654, 56
      %v2253 = vpop.permute.xlu0 %2252
      %v2255 = vsel %vm661, %v2056, 0
      %v2258 = vsel %vm1168, %v2253, 0
      %2260 = vmatprep.subr.bf16.mxu0 0
      %2261 = vmatpush1.bf16.msra.mxu0 0
      %2262 = vmatprep.subr.bf16.mxu0 0
      %2263 = vmatpush1.bf16.msra.mxu0 0
      %2264 = vmatprep.subr.bf16.mxu0 0
      %2265 = vmatpush1.bf16.msra.mxu0 0
      %2266 = vmatprep.subr.bf16.mxu0 0
      %2267 = vmatpush1.bf16.msra.mxu0 0
      %2268 = vmatprep.subr.bf16.mxu0 0
      %2269 = vmatpush1.bf16.msra.mxu0 0
      %2270 = vmatprep.subr.bf16.mxu0 0
      %2271 = vmatpush1.bf16.msra.mxu0 0
      %2272 = vmatprep.subr.bf16.mxu0 0
      %2273 = vmatpush1.bf16.msra.mxu0 0
      %2274 = vmatprep.subr.bf16.mxu0 0
      %2275 = vmatpush1.bf16.msra.mxu0 %v2258
      %2276 = vmatprep.subr.bf16.mxu0 0
      %2277 = vmatpush2.bf16.msra.mxu0 0
      %2278 = vmatprep.subr.bf16.mxu0 0
      %2279 = vmatpush2.bf16.msra.mxu0 0
      %2280 = vmatprep.subr.bf16.mxu0 0
      %2281 = vmatpush2.bf16.msra.mxu0 0
      %2282 = vmatprep.subr.bf16.mxu0 0
      %2283 = vmatpush2.bf16.msra.mxu0 0
      %2284 = vmatprep.subr.bf16.mxu0 0
      %2285 = vmatpush2.bf16.msra.mxu0 0
      %2286 = vmatprep.subr.bf16.mxu0 0
      %2287 = vmatpush2.bf16.msra.mxu0 0
      %2288 = vmatprep.subr.bf16.mxu0 0
      %2289 = vmatpush2.bf16.msra.mxu0 0
      %2290 = vmatprep.subr.bf16.mxu0 0
      %2291 = vmatpush2.bf16.msra.mxu0 0
      %2292 = vmatprep.mubr.bf16.mxu0 0
      %2293 = vmatmul.mubr.bf16.gmra.mxu0 %v2255
      %v2294 = vpop.f32.mrf.mxu0
      %v2295 = vadd.f32 0.0, %v2294
      %v2296 = vpop.f32.mrf.mxu0
      %v2297 = vpop.f32.mrf.mxu0
      %v2298 = vpop.f32.mrf.mxu0
      %2299 = vdwg.mxu0
      %2300 = vrot.lane.b32.xlu0 %v655, 56
      %v2301 = vpop.permute.xlu0 %2300
      %v2303 = vsel %vm661, %v2057, 0
      %v2306 = vsel %vm1168, %v2301, 0
      %2308 = vmatprep.subr.bf16.mxu0 0
      %2309 = vmatpush1.bf16.msra.mxu0 0
      %2310 = vmatprep.subr.bf16.mxu0 0
      %2311 = vmatpush1.bf16.msra.mxu0 0
      %2312 = vmatprep.subr.bf16.mxu0 0
      %2313 = vmatpush1.bf16.msra.mxu0 0
      %2314 = vmatprep.subr.bf16.mxu0 0
      %2315 = vmatpush1.bf16.msra.mxu0 0
      %2316 = vmatprep.subr.bf16.mxu0 0
      %2317 = vmatpush1.bf16.msra.mxu0 0
      %2318 = vmatprep.subr.bf16.mxu0 0
      %2319 = vmatpush1.bf16.msra.mxu0 0
      %2320 = vmatprep.subr.bf16.mxu0 0
      %2321 = vmatpush1.bf16.msra.mxu0 0
      %2322 = vmatprep.subr.bf16.mxu0 0
      %2323 = vmatpush1.bf16.msra.mxu0 %v2306
      %2324 = vmatprep.subr.bf16.mxu0 0
      %2325 = vmatpush2.bf16.msra.mxu0 0
      %2326 = vmatprep.subr.bf16.mxu0 0
      %2327 = vmatpush2.bf16.msra.mxu0 0
      %2328 = vmatprep.subr.bf16.mxu0 0
      %2329 = vmatpush2.bf16.msra.mxu0 0
      %2330 = vmatprep.subr.bf16.mxu0 0
      %2331 = vmatpush2.bf16.msra.mxu0 0
      %2332 = vmatprep.subr.bf16.mxu0 0
      %2333 = vmatpush2.bf16.msra.mxu0 0
      %2334 = vmatprep.subr.bf16.mxu0 0
      %2335 = vmatpush2.bf16.msra.mxu0 0
      %2336 = vmatprep.subr.bf16.mxu0 0
      %2337 = vmatpush2.bf16.msra.mxu0 0
      %2338 = vmatprep.subr.bf16.mxu0 0
      %2339 = vmatpush2.bf16.msra.mxu0 0
      %2340 = vmatprep.mubr.bf16.mxu0 0
      %2341 = vmatmul.mubr.bf16.gmra.mxu0 %v2303
      %v2342 = vpop.f32.mrf.mxu0
      %v2343 = vadd.f32 0.0, %v2342
      %v2344 = vpop.f32.mrf.mxu0
      %v2345 = vpop.f32.mrf.mxu0
      %v2346 = vpop.f32.mrf.mxu0
      %2347 = vdwg.mxu0
      %2348 = vrot.lane.b32.xlu0 %v656, 56
      %v2349 = vpop.permute.xlu0 %2348
      %v2351 = vsel %vm661, %v2058, 0
      %v2354 = vsel %vm1168, %v2349, 0
      %2356 = vmatprep.subr.bf16.mxu0 0
      %2357 = vmatpush1.bf16.msra.mxu0 0
      %2358 = vmatprep.subr.bf16.mxu0 0
      %2359 = vmatpush1.bf16.msra.mxu0 0
      %2360 = vmatprep.subr.bf16.mxu0 0
      %2361 = vmatpush1.bf16.msra.mxu0 0
      %2362 = vmatprep.subr.bf16.mxu0 0
      %2363 = vmatpush1.bf16.msra.mxu0 0
      %2364 = vmatprep.subr.bf16.mxu0 0
      %2365 = vmatpush1.bf16.msra.mxu0 0
      %2366 = vmatprep.subr.bf16.mxu0 0
      %2367 = vmatpush1.bf16.msra.mxu0 0
      %2368 = vmatprep.subr.bf16.mxu0 0
      %2369 = vmatpush1.bf16.msra.mxu0 0
      %2370 = vmatprep.subr.bf16.mxu0 0
      %2371 = vmatpush1.bf16.msra.mxu0 %v2354
      %2372 = vmatprep.subr.bf16.mxu0 0
      %2373 = vmatpush2.bf16.msra.mxu0 0
      %2374 = vmatprep.subr.bf16.mxu0 0
      %2375 = vmatpush2.bf16.msra.mxu0 0
      %2376 = vmatprep.subr.bf16.mxu0 0
      %2377 = vmatpush2.bf16.msra.mxu0 0
      %2378 = vmatprep.subr.bf16.mxu0 0
      %2379 = vmatpush2.bf16.msra.mxu0 0
      %2380 = vmatprep.subr.bf16.mxu0 0
      %2381 = vmatpush2.bf16.msra.mxu0 0
      %2382 = vmatprep.subr.bf16.mxu0 0
      %2383 = vmatpush2.bf16.msra.mxu0 0
      %2384 = vmatprep.subr.bf16.mxu0 0
      %2385 = vmatpush2.bf16.msra.mxu0 0
      %2386 = vmatprep.subr.bf16.mxu0 0
      %2387 = vmatpush2.bf16.msra.mxu0 0
      %2388 = vmatprep.mubr.bf16.mxu0 0
      %2389 = vmatmul.mubr.bf16.gmra.mxu0 %v2351
      %v2390 = vpop.f32.mrf.mxu0
      %v2391 = vadd.f32 0.0, %v2390
      %v2392 = vpop.f32.mrf.mxu0
      %v2393 = vpop.f32.mrf.mxu0
      %v2394 = vpop.f32.mrf.mxu0
      %2395 = vdwg.mxu0
      %2396 = vrot.lane.b32.xlu0 %v657, 56
      %v2397 = vpop.permute.xlu0 %2396
      %v2399 = vsel %vm661, %v2059, 0
      %v2402 = vsel %vm1168, %v2397, 0
      %2404 = vmatprep.subr.bf16.mxu0 0
      %2405 = vmatpush1.bf16.msra.mxu0 0
      %2406 = vmatprep.subr.bf16.mxu0 0
      %2407 = vmatpush1.bf16.msra.mxu0 0
      %2408 = vmatprep.subr.bf16.mxu0 0
      %2409 = vmatpush1.bf16.msra.mxu0 0
      %2410 = vmatprep.subr.bf16.mxu0 0
      %2411 = vmatpush1.bf16.msra.mxu0 0
      %2412 = vmatprep.subr.bf16.mxu0 0
      %2413 = vmatpush1.bf16.msra.mxu0 0
      %2414 = vmatprep.subr.bf16.mxu0 0
      %2415 = vmatpush1.bf16.msra.mxu0 0
      %2416 = vmatprep.subr.bf16.mxu0 0
      %2417 = vmatpush1.bf16.msra.mxu0 0
      %2418 = vmatprep.subr.bf16.mxu0 0
      %2419 = vmatpush1.bf16.msra.mxu0 %v2402
      %2420 = vmatprep.subr.bf16.mxu0 0
      %2421 = vmatpush2.bf16.msra.mxu0 0
      %2422 = vmatprep.subr.bf16.mxu0 0
      %2423 = vmatpush2.bf16.msra.mxu0 0
      %2424 = vmatprep.subr.bf16.mxu0 0
      %2425 = vmatpush2.bf16.msra.mxu0 0
      %2426 = vmatprep.subr.bf16.mxu0 0
      %2427 = vmatpush2.bf16.msra.mxu0 0
      %2428 = vmatprep.subr.bf16.mxu0 0
      %2429 = vmatpush2.bf16.msra.mxu0 0
      %2430 = vmatprep.subr.bf16.mxu0 0
      %2431 = vmatpush2.bf16.msra.mxu0 0
      %2432 = vmatprep.subr.bf16.mxu0 0
      %2433 = vmatpush2.bf16.msra.mxu0 0
      %2434 = vmatprep.subr.bf16.mxu0 0
      %2435 = vmatpush2.bf16.msra.mxu0 0
      %2436 = vmatprep.mubr.bf16.mxu0 0
      %2437 = vmatmul.mubr.bf16.gmra.mxu0 %v2399
      %v2438 = vpop.f32.mrf.mxu0
      %v2439 = vadd.f32 0.0, %v2438
      %v2440 = vpop.f32.mrf.mxu0
      %v2441 = vpop.f32.mrf.mxu0
      %v2442 = vpop.f32.mrf.mxu0
      %2443 = vdwg.mxu0
      %2444 = vrot.lane.b32.xlu0 %v650, 112
      %v2445 = vpop.permute.xlu0 %2444
      %2446 = vrot.lane.b32.xlu0 %v650, 80
      %v2447 = vpop.permute.xlu0 %2446
      %v2449 = vsel %vm661, %v2445, 0
      %v2452 = vsel %vm661, %v2447, 0
      %2454 = vmatprep.subr.bf16.mxu0 0
      %2455 = vmatpush1.bf16.xpose.msra.mxu0 0
      %2456 = vmatprep.subr.bf16.mxu0 0
      %2457 = vmatpush1.bf16.xpose.msra.mxu0 0
      %2458 = vmatprep.subr.bf16.mxu0 0
      %2459 = vmatpush1.bf16.xpose.msra.mxu0 0
      %2460 = vmatprep.subr.bf16.mxu0 0
      %2461 = vmatpush1.bf16.xpose.msra.mxu0 0
      %2462 = vmatprep.subr.bf16.mxu0 0
      %2463 = vmatpush1.bf16.xpose.msra.mxu0 0
      %2464 = vmatprep.subr.bf16.mxu0 0
      %2465 = vmatpush1.bf16.xpose.msra.mxu0 0
      %2466 = vmatprep.subr.bf16.mxu0 0
      %2467 = vmatpush1.bf16.xpose.msra.mxu0 0
      %2468 = vmatprep.subr.bf16.mxu0 0
      %2469 = vmatpush1.bf16.xpose.msra.mxu0 %v2452
      %2470 = vmatprep.subr.bf16.mxu0 0
      %2471 = vmatpush2.bf16.xpose.msra.mxu0 0
      %2472 = vmatprep.subr.bf16.mxu0 0
      %2473 = vmatpush2.bf16.xpose.msra.mxu0 0
      %2474 = vmatprep.subr.bf16.mxu0 0
      %2475 = vmatpush2.bf16.xpose.msra.mxu0 0
      %2476 = vmatprep.subr.bf16.mxu0 0
      %2477 = vmatpush2.bf16.xpose.msra.mxu0 0
      %2478 = vmatprep.subr.bf16.mxu0 0
      %2479 = vmatpush2.bf16.xpose.msra.mxu0 0
      %2480 = vmatprep.subr.bf16.mxu0 0
      %2481 = vmatpush2.bf16.xpose.msra.mxu0 0
      %2482 = vmatprep.subr.bf16.mxu0 0
      %2483 = vmatpush2.bf16.xpose.msra.mxu0 0
      %2484 = vmatprep.subr.bf16.mxu0 0
      %2485 = vmatpush2.bf16.xpose.msra.mxu0 0
      %2486 = vmatprep.mubr.bf16.mxu0 0
      %2487 = vmatmul.mubr.bf16.gmra.mxu0 %v2449
      %v2488 = vpop.f32.mrf.mxu0
      %v2489 = vadd.f32 0.0, %v2488
      %v2490 = vpop.f32.mrf.mxu0
      %v2491 = vpop.f32.mrf.mxu0
      %v2492 = vpop.f32.mrf.mxu0
      %2493 = vdwg.mxu0
      %2494 = vrot.lane.b32.xlu0 %v651, 112
      %v2495 = vpop.permute.xlu0 %2494
      %2496 = vrot.lane.b32.xlu0 %v651, 80
      %v2497 = vpop.permute.xlu0 %2496
      %v2499 = vsel %vm661, %v2495, 0
      %v2502 = vsel %vm661, %v2497, 0
      %2504 = vmatprep.subr.bf16.mxu0 0
      %2505 = vmatpush1.bf16.xpose.msra.mxu0 0
      %2506 = vmatprep.subr.bf16.mxu0 0
      %2507 = vmatpush1.bf16.xpose.msra.mxu0 0
      %2508 = vmatprep.subr.bf16.mxu0 0
      %2509 = vmatpush1.bf16.xpose.msra.mxu0 0
      %2510 = vmatprep.subr.bf16.mxu0 0
      %2511 = vmatpush1.bf16.xpose.msra.mxu0 0
      %2512 = vmatprep.subr.bf16.mxu0 0
      %2513 = vmatpush1.bf16.xpose.msra.mxu0 0
      %2514 = vmatprep.subr.bf16.mxu0 0
      %2515 = vmatpush1.bf16.xpose.msra.mxu0 0
      %2516 = vmatprep.subr.bf16.mxu0 0
      %2517 = vmatpush1.bf16.xpose.msra.mxu0 0
      %2518 = vmatprep.subr.bf16.mxu0 0
      %2519 = vmatpush1.bf16.xpose.msra.mxu0 %v2502
      %2520 = vmatprep.subr.bf16.mxu0 0
      %2521 = vmatpush2.bf16.xpose.msra.mxu0 0
      %2522 = vmatprep.subr.bf16.mxu0 0
      %2523 = vmatpush2.bf16.xpose.msra.mxu0 0
      %2524 = vmatprep.subr.bf16.mxu0 0
      %2525 = vmatpush2.bf16.xpose.msra.mxu0 0
      %2526 = vmatprep.subr.bf16.mxu0 0
      %2527 = vmatpush2.bf16.xpose.msra.mxu0 0
      %2528 = vmatprep.subr.bf16.mxu0 0
      %2529 = vmatpush2.bf16.xpose.msra.mxu0 0
      %2530 = vmatprep.subr.bf16.mxu0 0
      %2531 = vmatpush2.bf16.xpose.msra.mxu0 0
      %2532 = vmatprep.subr.bf16.mxu0 0
      %2533 = vmatpush2.bf16.xpose.msra.mxu0 0
      %2534 = vmatprep.subr.bf16.mxu0 0
      %2535 = vmatpush2.bf16.xpose.msra.mxu0 0
      %2536 = vmatprep.mubr.bf16.mxu0 0
      %2537 = vmatmul.mubr.bf16.gmra.mxu0 %v2499
      %v2538 = vpop.f32.mrf.mxu0
      %v2539 = vadd.f32 0.0, %v2538
      %v2540 = vpop.f32.mrf.mxu0
      %v2541 = vpop.f32.mrf.mxu0
      %v2542 = vpop.f32.mrf.mxu0
      %2543 = vdwg.mxu0
      %2544 = vrot.lane.b32.xlu0 %v652, 112
      %v2545 = vpop.permute.xlu0 %2544
      %2546 = vrot.lane.b32.xlu0 %v652, 80
      %v2547 = vpop.permute.xlu0 %2546
      %v2549 = vsel %vm661, %v2545, 0
      %v2552 = vsel %vm661, %v2547, 0
      %2554 = vmatprep.subr.bf16.mxu0 0
      %2555 = vmatpush1.bf16.xpose.msra.mxu0 0
      %2556 = vmatprep.subr.bf16.mxu0 0
      %2557 = vmatpush1.bf16.xpose.msra.mxu0 0
      %2558 = vmatprep.subr.bf16.mxu0 0
      %2559 = vmatpush1.bf16.xpose.msra.mxu0 0
      %2560 = vmatprep.subr.bf16.mxu0 0
      %2561 = vmatpush1.bf16.xpose.msra.mxu0 0
      %2562 = vmatprep.subr.bf16.mxu0 0
      %2563 = vmatpush1.bf16.xpose.msra.mxu0 0
      %2564 = vmatprep.subr.bf16.mxu0 0
      %2565 = vmatpush1.bf16.xpose.msra.mxu0 0
      %2566 = vmatprep.subr.bf16.mxu0 0
      %2567 = vmatpush1.bf16.xpose.msra.mxu0 0
      %2568 = vmatprep.subr.bf16.mxu0 0
      %2569 = vmatpush1.bf16.xpose.msra.mxu0 %v2552
      %2570 = vmatprep.subr.bf16.mxu0 0
      %2571 = vmatpush2.bf16.xpose.msra.mxu0 0
      %2572 = vmatprep.subr.bf16.mxu0 0
      %2573 = vmatpush2.bf16.xpose.msra.mxu0 0
      %2574 = vmatprep.subr.bf16.mxu0 0
      %2575 = vmatpush2.bf16.xpose.msra.mxu0 0
      %2576 = vmatprep.subr.bf16.mxu0 0
      %2577 = vmatpush2.bf16.xpose.msra.mxu0 0
      %2578 = vmatprep.subr.bf16.mxu0 0
      %2579 = vmatpush2.bf16.xpose.msra.mxu0 0
      %2580 = vmatprep.subr.bf16.mxu0 0
      %2581 = vmatpush2.bf16.xpose.msra.mxu0 0
      %2582 = vmatprep.subr.bf16.mxu0 0
      %2583 = vmatpush2.bf16.xpose.msra.mxu0 0
      %2584 = vmatprep.subr.bf16.mxu0 0
      %2585 = vmatpush2.bf16.xpose.msra.mxu0 0
      %2586 = vmatprep.mubr.bf16.mxu0 0
      %2587 = vmatmul.mubr.bf16.gmra.mxu0 %v2549
      %v2588 = vpop.f32.mrf.mxu0
      %v2589 = vadd.f32 0.0, %v2588
      %v2590 = vpop.f32.mrf.mxu0
      %v2591 = vpop.f32.mrf.mxu0
      %v2592 = vpop.f32.mrf.mxu0
      %2593 = vdwg.mxu0
      %2594 = vrot.lane.b32.xlu0 %v653, 112
      %v2595 = vpop.permute.xlu0 %2594
      %2596 = vrot.lane.b32.xlu0 %v653, 80
      %v2597 = vpop.permute.xlu0 %2596
      %v2599 = vsel %vm661, %v2595, 0
      %v2602 = vsel %vm661, %v2597, 0
      %2604 = vmatprep.subr.bf16.mxu0 0
      %2605 = vmatpush1.bf16.xpose.msra.mxu0 0
      %2606 = vmatprep.subr.bf16.mxu0 0
      %2607 = vmatpush1.bf16.xpose.msra.mxu0 0
      %2608 = vmatprep.subr.bf16.mxu0 0
      %2609 = vmatpush1.bf16.xpose.msra.mxu0 0
      %2610 = vmatprep.subr.bf16.mxu0 0
      %2611 = vmatpush1.bf16.xpose.msra.mxu0 0
      %2612 = vmatprep.subr.bf16.mxu0 0
      %2613 = vmatpush1.bf16.xpose.msra.mxu0 0
      %2614 = vmatprep.subr.bf16.mxu0 0
      %2615 = vmatpush1.bf16.xpose.msra.mxu0 0
      %2616 = vmatprep.subr.bf16.mxu0 0
      %2617 = vmatpush1.bf16.xpose.msra.mxu0 0
      %2618 = vmatprep.subr.bf16.mxu0 0
      %2619 = vmatpush1.bf16.xpose.msra.mxu0 %v2602
      %2620 = vmatprep.subr.bf16.mxu0 0
      %2621 = vmatpush2.bf16.xpose.msra.mxu0 0
      %2622 = vmatprep.subr.bf16.mxu0 0
      %2623 = vmatpush2.bf16.xpose.msra.mxu0 0
      %2624 = vmatprep.subr.bf16.mxu0 0
      %2625 = vmatpush2.bf16.xpose.msra.mxu0 0
      %2626 = vmatprep.subr.bf16.mxu0 0
      %2627 = vmatpush2.bf16.xpose.msra.mxu0 0
      %2628 = vmatprep.subr.bf16.mxu0 0
      %2629 = vmatpush2.bf16.xpose.msra.mxu0 0
      %2630 = vmatprep.subr.bf16.mxu0 0
      %2631 = vmatpush2.bf16.xpose.msra.mxu0 0
      %2632 = vmatprep.subr.bf16.mxu0 0
      %2633 = vmatpush2.bf16.xpose.msra.mxu0 0
      %2634 = vmatprep.subr.bf16.mxu0 0
      %2635 = vmatpush2.bf16.xpose.msra.mxu0 0
      %2636 = vmatprep.mubr.bf16.mxu0 0
      %2637 = vmatmul.mubr.bf16.gmra.mxu0 %v2599
      %v2638 = vpop.f32.mrf.mxu0
      %v2639 = vadd.f32 0.0, %v2638
      %v2640 = vpop.f32.mrf.mxu0
      %v2641 = vpop.f32.mrf.mxu0
      %v2642 = vpop.f32.mrf.mxu0
      %2643 = vdwg.mxu0
      %2644 = vrot.lane.b32.xlu0 %v654, 112
      %v2645 = vpop.permute.xlu0 %2644
      %2646 = vrot.lane.b32.xlu0 %v654, 80
      %v2647 = vpop.permute.xlu0 %2646
      %v2649 = vsel %vm661, %v2645, 0
      %v2652 = vsel %vm661, %v2647, 0
      %2654 = vmatprep.subr.bf16.mxu0 0
      %2655 = vmatpush1.bf16.xpose.msra.mxu0 0
      %2656 = vmatprep.subr.bf16.mxu0 0
      %2657 = vmatpush1.bf16.xpose.msra.mxu0 0
      %2658 = vmatprep.subr.bf16.mxu0 0
      %2659 = vmatpush1.bf16.xpose.msra.mxu0 0
      %2660 = vmatprep.subr.bf16.mxu0 0
      %2661 = vmatpush1.bf16.xpose.msra.mxu0 0
      %2662 = vmatprep.subr.bf16.mxu0 0
      %2663 = vmatpush1.bf16.xpose.msra.mxu0 0
      %2664 = vmatprep.subr.bf16.mxu0 0
      %2665 = vmatpush1.bf16.xpose.msra.mxu0 0
      %2666 = vmatprep.subr.bf16.mxu0 0
      %2667 = vmatpush1.bf16.xpose.msra.mxu0 0
      %2668 = vmatprep.subr.bf16.mxu0 0
      %2669 = vmatpush1.bf16.xpose.msra.mxu0 %v2652
      %2670 = vmatprep.subr.bf16.mxu0 0
      %2671 = vmatpush2.bf16.xpose.msra.mxu0 0
      %2672 = vmatprep.subr.bf16.mxu0 0
      %2673 = vmatpush2.bf16.xpose.msra.mxu0 0
      %2674 = vmatprep.subr.bf16.mxu0 0
      %2675 = vmatpush2.bf16.xpose.msra.mxu0 0
      %2676 = vmatprep.subr.bf16.mxu0 0
      %2677 = vmatpush2.bf16.xpose.msra.mxu0 0
      %2678 = vmatprep.subr.bf16.mxu0 0
      %2679 = vmatpush2.bf16.xpose.msra.mxu0 0
      %2680 = vmatprep.subr.bf16.mxu0 0
      %2681 = vmatpush2.bf16.xpose.msra.mxu0 0
      %2682 = vmatprep.subr.bf16.mxu0 0
      %2683 = vmatpush2.bf16.xpose.msra.mxu0 0
      %2684 = vmatprep.subr.bf16.mxu0 0
      %2685 = vmatpush2.bf16.xpose.msra.mxu0 0
      %2686 = vmatprep.mubr.bf16.mxu0 0
      %2687 = vmatmul.mubr.bf16.gmra.mxu0 %v2649
      %v2688 = vpop.f32.mrf.mxu0
      %v2689 = vadd.f32 0.0, %v2688
      %v2690 = vpop.f32.mrf.mxu0
      %v2691 = vpop.f32.mrf.mxu0
      %v2692 = vpop.f32.mrf.mxu0
      %2693 = vdwg.mxu0
      %2694 = vrot.lane.b32.xlu0 %v655, 112
      %v2695 = vpop.permute.xlu0 %2694
      %2696 = vrot.lane.b32.xlu0 %v655, 80
      %v2697 = vpop.permute.xlu0 %2696
      %v2699 = vsel %vm661, %v2695, 0
      %v2702 = vsel %vm661, %v2697, 0
      %2704 = vmatprep.subr.bf16.mxu0 0
      %2705 = vmatpush1.bf16.xpose.msra.mxu0 0
      %2706 = vmatprep.subr.bf16.mxu0 0
      %2707 = vmatpush1.bf16.xpose.msra.mxu0 0
      %2708 = vmatprep.subr.bf16.mxu0 0
      %2709 = vmatpush1.bf16.xpose.msra.mxu0 0
      %2710 = vmatprep.subr.bf16.mxu0 0
      %2711 = vmatpush1.bf16.xpose.msra.mxu0 0
      %2712 = vmatprep.subr.bf16.mxu0 0
      %2713 = vmatpush1.bf16.xpose.msra.mxu0 0
      %2714 = vmatprep.subr.bf16.mxu0 0
      %2715 = vmatpush1.bf16.xpose.msra.mxu0 0
      %2716 = vmatprep.subr.bf16.mxu0 0
      %2717 = vmatpush1.bf16.xpose.msra.mxu0 0
      %2718 = vmatprep.subr.bf16.mxu0 0
      %2719 = vmatpush1.bf16.xpose.msra.mxu0 %v2702
      %2720 = vmatprep.subr.bf16.mxu0 0
      %2721 = vmatpush2.bf16.xpose.msra.mxu0 0
      %2722 = vmatprep.subr.bf16.mxu0 0
      %2723 = vmatpush2.bf16.xpose.msra.mxu0 0
      %2724 = vmatprep.subr.bf16.mxu0 0
      %2725 = vmatpush2.bf16.xpose.msra.mxu0 0
      %2726 = vmatprep.subr.bf16.mxu0 0
      %2727 = vmatpush2.bf16.xpose.msra.mxu0 0
      %2728 = vmatprep.subr.bf16.mxu0 0
      %2729 = vmatpush2.bf16.xpose.msra.mxu0 0
      %2730 = vmatprep.subr.bf16.mxu0 0
      %2731 = vmatpush2.bf16.xpose.msra.mxu0 0
      %2732 = vmatprep.subr.bf16.mxu0 0
      %2733 = vmatpush2.bf16.xpose.msra.mxu0 0
      %2734 = vmatprep.subr.bf16.mxu0 0
      %2735 = vmatpush2.bf16.xpose.msra.mxu0 0
      %2736 = vmatprep.mubr.bf16.mxu0 0
      %2737 = vmatmul.mubr.bf16.gmra.mxu0 %v2699
      %v2738 = vpop.f32.mrf.mxu0
      %v2739 = vadd.f32 0.0, %v2738
      %v2740 = vpop.f32.mrf.mxu0
      %v2741 = vpop.f32.mrf.mxu0
      %v2742 = vpop.f32.mrf.mxu0
      %2743 = vdwg.mxu0
      %2744 = vrot.lane.b32.xlu0 %v656, 112
      %v2745 = vpop.permute.xlu0 %2744
      %2746 = vrot.lane.b32.xlu0 %v656, 80
      %v2747 = vpop.permute.xlu0 %2746
      %v2749 = vsel %vm661, %v2745, 0
      %v2752 = vsel %vm661, %v2747, 0
      %2754 = vmatprep.subr.bf16.mxu0 0
      %2755 = vmatpush1.bf16.xpose.msra.mxu0 0
      %2756 = vmatprep.subr.bf16.mxu0 0
      %2757 = vmatpush1.bf16.xpose.msra.mxu0 0
      %2758 = vmatprep.subr.bf16.mxu0 0
      %2759 = vmatpush1.bf16.xpose.msra.mxu0 0
      %2760 = vmatprep.subr.bf16.mxu0 0
      %2761 = vmatpush1.bf16.xpose.msra.mxu0 0
      %2762 = vmatprep.subr.bf16.mxu0 0
      %2763 = vmatpush1.bf16.xpose.msra.mxu0 0
      %2764 = vmatprep.subr.bf16.mxu0 0
      %2765 = vmatpush1.bf16.xpose.msra.mxu0 0
      %2766 = vmatprep.subr.bf16.mxu0 0
      %2767 = vmatpush1.bf16.xpose.msra.mxu0 0
      %2768 = vmatprep.subr.bf16.mxu0 0
      %2769 = vmatpush1.bf16.xpose.msra.mxu0 %v2752
      %2770 = vmatprep.subr.bf16.mxu0 0
      %2771 = vmatpush2.bf16.xpose.msra.mxu0 0
      %2772 = vmatprep.subr.bf16.mxu0 0
      %2773 = vmatpush2.bf16.xpose.msra.mxu0 0
      %2774 = vmatprep.subr.bf16.mxu0 0
      %2775 = vmatpush2.bf16.xpose.msra.mxu0 0
      %2776 = vmatprep.subr.bf16.mxu0 0
      %2777 = vmatpush2.bf16.xpose.msra.mxu0 0
      %2778 = vmatprep.subr.bf16.mxu0 0
      %2779 = vmatpush2.bf16.xpose.msra.mxu0 0
      %2780 = vmatprep.subr.bf16.mxu0 0
      %2781 = vmatpush2.bf16.xpose.msra.mxu0 0
      %2782 = vmatprep.subr.bf16.mxu0 0
      %2783 = vmatpush2.bf16.xpose.msra.mxu0 0
      %2784 = vmatprep.subr.bf16.mxu0 0
      %2785 = vmatpush2.bf16.xpose.msra.mxu0 0
      %2786 = vmatprep.mubr.bf16.mxu0 0
      %2787 = vmatmul.mubr.bf16.gmra.mxu0 %v2749
      %v2788 = vpop.f32.mrf.mxu0
      %v2789 = vadd.f32 0.0, %v2788
      %v2790 = vpop.f32.mrf.mxu0
      %v2791 = vpop.f32.mrf.mxu0
      %v2792 = vpop.f32.mrf.mxu0
      %2793 = vdwg.mxu0
      %2794 = vrot.lane.b32.xlu0 %v657, 112
      %v2795 = vpop.permute.xlu0 %2794
      %2796 = vrot.lane.b32.xlu0 %v657, 80
      %v2797 = vpop.permute.xlu0 %2796
      %v2799 = vsel %vm661, %v2795, 0
      %v2802 = vsel %vm661, %v2797, 0
      %2804 = vmatprep.subr.bf16.mxu0 0
      %2805 = vmatpush1.bf16.xpose.msra.mxu0 0
      %2806 = vmatprep.subr.bf16.mxu0 0
      %2807 = vmatpush1.bf16.xpose.msra.mxu0 0
      %2808 = vmatprep.subr.bf16.mxu0 0
      %2809 = vmatpush1.bf16.xpose.msra.mxu0 0
      %2810 = vmatprep.subr.bf16.mxu0 0
      %2811 = vmatpush1.bf16.xpose.msra.mxu0 0
      %2812 = vmatprep.subr.bf16.mxu0 0
      %2813 = vmatpush1.bf16.xpose.msra.mxu0 0
      %2814 = vmatprep.subr.bf16.mxu0 0
      %2815 = vmatpush1.bf16.xpose.msra.mxu0 0
      %2816 = vmatprep.subr.bf16.mxu0 0
      %2817 = vmatpush1.bf16.xpose.msra.mxu0 0
      %2818 = vmatprep.subr.bf16.mxu0 0
      %2819 = vmatpush1.bf16.xpose.msra.mxu0 %v2802
      %2820 = vmatprep.subr.bf16.mxu0 0
      %2821 = vmatpush2.bf16.xpose.msra.mxu0 0
      %2822 = vmatprep.subr.bf16.mxu0 0
      %2823 = vmatpush2.bf16.xpose.msra.mxu0 0
      %2824 = vmatprep.subr.bf16.mxu0 0
      %2825 = vmatpush2.bf16.xpose.msra.mxu0 0
      %2826 = vmatprep.subr.bf16.mxu0 0
      %2827 = vmatpush2.bf16.xpose.msra.mxu0 0
      %2828 = vmatprep.subr.bf16.mxu0 0
      %2829 = vmatpush2.bf16.xpose.msra.mxu0 0
      %2830 = vmatprep.subr.bf16.mxu0 0
      %2831 = vmatpush2.bf16.xpose.msra.mxu0 0
      %2832 = vmatprep.subr.bf16.mxu0 0
      %2833 = vmatpush2.bf16.xpose.msra.mxu0 0
      %2834 = vmatprep.subr.bf16.mxu0 0
      %2835 = vmatpush2.bf16.xpose.msra.mxu0 0
      %2836 = vmatprep.mubr.bf16.mxu0 0
      %2837 = vmatmul.mubr.bf16.gmra.mxu0 %v2799
      %v2838 = vpop.f32.mrf.mxu0
      %v2839 = vadd.f32 0.0, %v2838
      %v2840 = vpop.f32.mrf.mxu0
      %v2841 = vpop.f32.mrf.mxu0
      %v2842 = vpop.f32.mrf.mxu0
      %2843 = vdwg.mxu0
      %v2844 = vmul.f32 %v2489, 0.35355338
      %v2845 = vmul.f32 %v2539, 0.35355338
      %v2846 = vmul.f32 %v2589, 0.35355338
      %v2847 = vmul.f32 %v2639, 0.35355338
      %v2848 = vmul.f32 %v2689, 0.35355338
      %v2849 = vmul.f32 %v2739, 0.35355338
      %v2850 = vmul.f32 %v2789, 0.35355338
      %v2851 = vmul.f32 %v2839, 0.35355338
      %v2852 = vadd.f32 %v2844, %v649
      %v2853 = vadd.f32 %v2845, %v649
      %v2854 = vadd.f32 %v2846, %v649
      %v2855 = vadd.f32 %v2847, %v649
      %v2856 = vadd.f32 %v2848, %v649
      %v2857 = vadd.f32 %v2849, %v649
      %v2858 = vadd.f32 %v2850, %v649
      %v2859 = vadd.f32 %v2851, %v649
      %v2860 = vsel %vm661, %v2852, -inf
      %2861 = vmax.xlane.f32.xlu0 %v2860
      %v2862 = vpop.xlane.xlu0 %2861
      %v2863 = vsel %vm661, %v2853, -inf
      %2864 = vmax.xlane.f32.xlu0 %v2863
      %v2865 = vpop.xlane.xlu0 %2864
      %v2866 = vsel %vm661, %v2854, -inf
      %2867 = vmax.xlane.f32.xlu0 %v2866
      %v2868 = vpop.xlane.xlu0 %2867
      %v2869 = vsel %vm661, %v2855, -inf
      %2870 = vmax.xlane.f32.xlu0 %v2869
      %v2871 = vpop.xlane.xlu0 %2870
      %v2872 = vsel %vm661, %v2856, -inf
      %2873 = vmax.xlane.f32.xlu0 %v2872
      %v2874 = vpop.xlane.xlu0 %2873
      %v2875 = vsel %vm661, %v2857, -inf
      %2876 = vmax.xlane.f32.xlu0 %v2875
      %v2877 = vpop.xlane.xlu0 %2876
      %v2878 = vsel %vm661, %v2858, -inf
      %2879 = vmax.xlane.f32.xlu0 %v2878
      %v2880 = vpop.xlane.xlu0 %2879
      %v2881 = vsel %vm661, %v2859, -inf
      %2882 = vmax.xlane.f32.xlu0 %v2881
      %v2883 = vpop.xlane.xlu0 %2882
      %v2884 = vsub.f32 %v2852, %v2862
      %v2885 = vsub.f32 %v2853, %v2865
      %v2886 = vsub.f32 %v2854, %v2868
      %v2887 = vsub.f32 %v2855, %v2871
      %v2888 = vsub.f32 %v2856, %v2874
      %v2889 = vsub.f32 %v2857, %v2877
      %v2890 = vsub.f32 %v2858, %v2880
      %v2891 = vsub.f32 %v2859, %v2883
      %v2892 = vmul.f32 %v2884, 1.442695
      %v2893 = vpow.pop %v2892
      %v2894 = vmul.f32 %v2885, 1.442695
      %v2895 = vpow.pop %v2894
      %v2896 = vmul.f32 %v2886, 1.442695
      %v2897 = vpow.pop %v2896
      %v2898 = vmul.f32 %v2887, 1.442695
      %v2899 = vpow.pop %v2898
      %v2900 = vmul.f32 %v2888, 1.442695
      %v2901 = vpow.pop %v2900
      %v2902 = vmul.f32 %v2889, 1.442695
      %v2903 = vpow.pop %v2902
      %v2904 = vmul.f32 %v2890, 1.442695
      %v2905 = vpow.pop %v2904
      %v2906 = vmul.f32 %v2891, 1.442695
      %v2907 = vpow.pop %v2906
      %v2908 = vsel %vm661, %v2893, 0.0
      %2909 = vadd.xlane.f32.xlu0 %v2908
      %v2910 = vpop.xlane.xlu0 %2909
      %v2911 = vsel %vm661, %v2895, 0.0
      %2912 = vadd.xlane.f32.xlu0 %v2911
      %v2913 = vpop.xlane.xlu0 %2912
      %v2914 = vsel %vm661, %v2897, 0.0
      %2915 = vadd.xlane.f32.xlu0 %v2914
      %v2916 = vpop.xlane.xlu0 %2915
      %v2917 = vsel %vm661, %v2899, 0.0
      %2918 = vadd.xlane.f32.xlu0 %v2917
      %v2919 = vpop.xlane.xlu0 %2918
      %v2920 = vsel %vm661, %v2901, 0.0
      %2921 = vadd.xlane.f32.xlu0 %v2920
      %v2922 = vpop.xlane.xlu0 %2921
      %v2923 = vsel %vm661, %v2903, 0.0
      %2924 = vadd.xlane.f32.xlu0 %v2923
      %v2925 = vpop.xlane.xlu0 %2924
      %v2926 = vsel %vm661, %v2905, 0.0
      %2927 = vadd.xlane.f32.xlu0 %v2926
      %v2928 = vpop.xlane.xlu0 %2927
      %v2929 = vsel %vm661, %v2907, 0.0
      %2930 = vadd.xlane.f32.xlu0 %v2929
      %v2931 = vpop.xlane.xlu0 %2930
      %v2932 = vrcp.pop %v2910
      %v2933 = vrcp.pop %v2913
      %v2934 = vrcp.pop %v2916
      %v2935 = vrcp.pop %v2919
      %v2936 = vrcp.pop %v2922
      %v2937 = vrcp.pop %v2925
      %v2938 = vrcp.pop %v2928
      %v2939 = vrcp.pop %v2931
      %v2940 = vmul.f32 %v2893, %v2932
      %v2941 = vmul.f32 %v2895, %v2933
      %v2942 = vmul.f32 %v2897, %v2934
      %v2943 = vmul.f32 %v2899, %v2935
      %v2944 = vmul.f32 %v2901, %v2936
      %v2945 = vmul.f32 %v2903, %v2937
      %v2946 = vmul.f32 %v2905, %v2938
      %v2947 = vmul.f32 %v2907, %v2939
      %v2948 = vpack.c.bf16 %v2940, %v2940
      %v2949 = vpack.c.bf16 %v2941, %v2941
      %v2950 = vpack.c.bf16 %v2942, %v2942
      %v2951 = vpack.c.bf16 %v2943, %v2943
      %v2952 = vpack.c.bf16 %v2944, %v2944
      %v2953 = vpack.c.bf16 %v2945, %v2945
      %v2954 = vpack.c.bf16 %v2946, %v2946
      %v2955 = vpack.c.bf16 %v2947, %v2947
      %2956 = vrot.lane.b32.xlu0 %v650, 48
      %v2957 = vpop.permute.xlu0 %2956
      %v2959 = vsel %vm661, %v2948, 0
      %v2962 = vsel %vm1168, %v2957, 0
      %2964 = vmatprep.subr.bf16.mxu0 0
      %2965 = vmatpush1.bf16.msra.mxu0 0
      %2966 = vmatprep.subr.bf16.mxu0 0
      %2967 = vmatpush1.bf16.msra.mxu0 0
      %2968 = vmatprep.subr.bf16.mxu0 0
      %2969 = vmatpush1.bf16.msra.mxu0 0
      %2970 = vmatprep.subr.bf16.mxu0 0
      %2971 = vmatpush1.bf16.msra.mxu0 0
      %2972 = vmatprep.subr.bf16.mxu0 0
      %2973 = vmatpush1.bf16.msra.mxu0 0
      %2974 = vmatprep.subr.bf16.mxu0 0
      %2975 = vmatpush1.bf16.msra.mxu0 0
      %2976 = vmatprep.subr.bf16.mxu0 0
      %2977 = vmatpush1.bf16.msra.mxu0 0
      %2978 = vmatprep.subr.bf16.mxu0 0
      %2979 = vmatpush1.bf16.msra.mxu0 %v2962
      %2980 = vmatprep.subr.bf16.mxu0 0
      %2981 = vmatpush2.bf16.msra.mxu0 0
      %2982 = vmatprep.subr.bf16.mxu0 0
      %2983 = vmatpush2.bf16.msra.mxu0 0
      %2984 = vmatprep.subr.bf16.mxu0 0
      %2985 = vmatpush2.bf16.msra.mxu0 0
      %2986 = vmatprep.subr.bf16.mxu0 0
      %2987 = vmatpush2.bf16.msra.mxu0 0
      %2988 = vmatprep.subr.bf16.mxu0 0
      %2989 = vmatpush2.bf16.msra.mxu0 0
      %2990 = vmatprep.subr.bf16.mxu0 0
      %2991 = vmatpush2.bf16.msra.mxu0 0
      %2992 = vmatprep.subr.bf16.mxu0 0
      %2993 = vmatpush2.bf16.msra.mxu0 0
      %2994 = vmatprep.subr.bf16.mxu0 0
      %2995 = vmatpush2.bf16.msra.mxu0 0
      %2996 = vmatprep.mubr.bf16.mxu0 0
      %2997 = vmatmul.mubr.bf16.gmra.mxu0 %v2959
      %v2998 = vpop.f32.mrf.mxu0
      %v2999 = vadd.f32 0.0, %v2998
      %v3000 = vpop.f32.mrf.mxu0
      %v3001 = vpop.f32.mrf.mxu0
      %v3002 = vpop.f32.mrf.mxu0
      %3003 = vdwg.mxu0
      %3004 = vrot.lane.b32.xlu0 %v651, 48
      %v3005 = vpop.permute.xlu0 %3004
      %v3007 = vsel %vm661, %v2949, 0
      %v3010 = vsel %vm1168, %v3005, 0
      %3012 = vmatprep.subr.bf16.mxu0 0
      %3013 = vmatpush1.bf16.msra.mxu0 0
      %3014 = vmatprep.subr.bf16.mxu0 0
      %3015 = vmatpush1.bf16.msra.mxu0 0
      %3016 = vmatprep.subr.bf16.mxu0 0
      %3017 = vmatpush1.bf16.msra.mxu0 0
      %3018 = vmatprep.subr.bf16.mxu0 0
      %3019 = vmatpush1.bf16.msra.mxu0 0
      %3020 = vmatprep.subr.bf16.mxu0 0
      %3021 = vmatpush1.bf16.msra.mxu0 0
      %3022 = vmatprep.subr.bf16.mxu0 0
      %3023 = vmatpush1.bf16.msra.mxu0 0
      %3024 = vmatprep.subr.bf16.mxu0 0
      %3025 = vmatpush1.bf16.msra.mxu0 0
      %3026 = vmatprep.subr.bf16.mxu0 0
      %3027 = vmatpush1.bf16.msra.mxu0 %v3010
      %3028 = vmatprep.subr.bf16.mxu0 0
      %3029 = vmatpush2.bf16.msra.mxu0 0
      %3030 = vmatprep.subr.bf16.mxu0 0
      %3031 = vmatpush2.bf16.msra.mxu0 0
      %3032 = vmatprep.subr.bf16.mxu0 0
      %3033 = vmatpush2.bf16.msra.mxu0 0
      %3034 = vmatprep.subr.bf16.mxu0 0
      %3035 = vmatpush2.bf16.msra.mxu0 0
      %3036 = vmatprep.subr.bf16.mxu0 0
      %3037 = vmatpush2.bf16.msra.mxu0 0
      %3038 = vmatprep.subr.bf16.mxu0 0
      %3039 = vmatpush2.bf16.msra.mxu0 0
      %3040 = vmatprep.subr.bf16.mxu0 0
      %3041 = vmatpush2.bf16.msra.mxu0 0
      %3042 = vmatprep.subr.bf16.mxu0 0
      %3043 = vmatpush2.bf16.msra.mxu0 0
      %3044 = vmatprep.mubr.bf16.mxu0 0
      %3045 = vmatmul.mubr.bf16.gmra.mxu0 %v3007
      %v3046 = vpop.f32.mrf.mxu0
      %v3047 = vadd.f32 0.0, %v3046
      %v3048 = vpop.f32.mrf.mxu0
      %v3049 = vpop.f32.mrf.mxu0
      %v3050 = vpop.f32.mrf.mxu0
      %3051 = vdwg.mxu0
      %3052 = vrot.lane.b32.xlu0 %v652, 48
      %v3053 = vpop.permute.xlu0 %3052
      %v3055 = vsel %vm661, %v2950, 0
      %v3058 = vsel %vm1168, %v3053, 0
      %3060 = vmatprep.subr.bf16.mxu0 0
      %3061 = vmatpush1.bf16.msra.mxu0 0
      %3062 = vmatprep.subr.bf16.mxu0 0
      %3063 = vmatpush1.bf16.msra.mxu0 0
      %3064 = vmatprep.subr.bf16.mxu0 0
      %3065 = vmatpush1.bf16.msra.mxu0 0
      %3066 = vmatprep.subr.bf16.mxu0 0
      %3067 = vmatpush1.bf16.msra.mxu0 0
      %3068 = vmatprep.subr.bf16.mxu0 0
      %3069 = vmatpush1.bf16.msra.mxu0 0
      %3070 = vmatprep.subr.bf16.mxu0 0
      %3071 = vmatpush1.bf16.msra.mxu0 0
      %3072 = vmatprep.subr.bf16.mxu0 0
      %3073 = vmatpush1.bf16.msra.mxu0 0
      %3074 = vmatprep.subr.bf16.mxu0 0
      %3075 = vmatpush1.bf16.msra.mxu0 %v3058
      %3076 = vmatprep.subr.bf16.mxu0 0
      %3077 = vmatpush2.bf16.msra.mxu0 0
      %3078 = vmatprep.subr.bf16.mxu0 0
      %3079 = vmatpush2.bf16.msra.mxu0 0
      %3080 = vmatprep.subr.bf16.mxu0 0
      %3081 = vmatpush2.bf16.msra.mxu0 0
      %3082 = vmatprep.subr.bf16.mxu0 0
      %3083 = vmatpush2.bf16.msra.mxu0 0
      %3084 = vmatprep.subr.bf16.mxu0 0
      %3085 = vmatpush2.bf16.msra.mxu0 0
      %3086 = vmatprep.subr.bf16.mxu0 0
      %3087 = vmatpush2.bf16.msra.mxu0 0
      %3088 = vmatprep.subr.bf16.mxu0 0
      %3089 = vmatpush2.bf16.msra.mxu0 0
      %3090 = vmatprep.subr.bf16.mxu0 0
      %3091 = vmatpush2.bf16.msra.mxu0 0
      %3092 = vmatprep.mubr.bf16.mxu0 0
      %3093 = vmatmul.mubr.bf16.gmra.mxu0 %v3055
      %v3094 = vpop.f32.mrf.mxu0
      %v3095 = vadd.f32 0.0, %v3094
      %v3096 = vpop.f32.mrf.mxu0
      %v3097 = vpop.f32.mrf.mxu0
      %v3098 = vpop.f32.mrf.mxu0
      %3099 = vdwg.mxu0
      %3100 = vrot.lane.b32.xlu0 %v653, 48
      %v3101 = vpop.permute.xlu0 %3100
      %v3103 = vsel %vm661, %v2951, 0
      %v3106 = vsel %vm1168, %v3101, 0
      %3108 = vmatprep.subr.bf16.mxu0 0
      %3109 = vmatpush1.bf16.msra.mxu0 0
      %3110 = vmatprep.subr.bf16.mxu0 0
      %3111 = vmatpush1.bf16.msra.mxu0 0
      %3112 = vmatprep.subr.bf16.mxu0 0
      %3113 = vmatpush1.bf16.msra.mxu0 0
      %3114 = vmatprep.subr.bf16.mxu0 0
      %3115 = vmatpush1.bf16.msra.mxu0 0
      %3116 = vmatprep.subr.bf16.mxu0 0
      %3117 = vmatpush1.bf16.msra.mxu0 0
      %3118 = vmatprep.subr.bf16.mxu0 0
      %3119 = vmatpush1.bf16.msra.mxu0 0
      %3120 = vmatprep.subr.bf16.mxu0 0
      %3121 = vmatpush1.bf16.msra.mxu0 0
      %3122 = vmatprep.subr.bf16.mxu0 0
      %3123 = vmatpush1.bf16.msra.mxu0 %v3106
      %3124 = vmatprep.subr.bf16.mxu0 0
      %3125 = vmatpush2.bf16.msra.mxu0 0
      %3126 = vmatprep.subr.bf16.mxu0 0
      %3127 = vmatpush2.bf16.msra.mxu0 0
      %3128 = vmatprep.subr.bf16.mxu0 0
      %3129 = vmatpush2.bf16.msra.mxu0 0
      %3130 = vmatprep.subr.bf16.mxu0 0
      %3131 = vmatpush2.bf16.msra.mxu0 0
      %3132 = vmatprep.subr.bf16.mxu0 0
      %3133 = vmatpush2.bf16.msra.mxu0 0
      %3134 = vmatprep.subr.bf16.mxu0 0
      %3135 = vmatpush2.bf16.msra.mxu0 0
      %3136 = vmatprep.subr.bf16.mxu0 0
      %3137 = vmatpush2.bf16.msra.mxu0 0
      %3138 = vmatprep.subr.bf16.mxu0 0
      %3139 = vmatpush2.bf16.msra.mxu0 0
      %3140 = vmatprep.mubr.bf16.mxu0 0
      %3141 = vmatmul.mubr.bf16.gmra.mxu0 %v3103
      %v3142 = vpop.f32.mrf.mxu0
      %v3143 = vadd.f32 0.0, %v3142
      %v3144 = vpop.f32.mrf.mxu0
      %v3145 = vpop.f32.mrf.mxu0
      %v3146 = vpop.f32.mrf.mxu0
      %3147 = vdwg.mxu0
      %3148 = vrot.lane.b32.xlu0 %v654, 48
      %v3149 = vpop.permute.xlu0 %3148
      %v3151 = vsel %vm661, %v2952, 0
      %v3154 = vsel %vm1168, %v3149, 0
      %3156 = vmatprep.subr.bf16.mxu0 0
      %3157 = vmatpush1.bf16.msra.mxu0 0
      %3158 = vmatprep.subr.bf16.mxu0 0
      %3159 = vmatpush1.bf16.msra.mxu0 0
      %3160 = vmatprep.subr.bf16.mxu0 0
      %3161 = vmatpush1.bf16.msra.mxu0 0
      %3162 = vmatprep.subr.bf16.mxu0 0
      %3163 = vmatpush1.bf16.msra.mxu0 0
      %3164 = vmatprep.subr.bf16.mxu0 0
      %3165 = vmatpush1.bf16.msra.mxu0 0
      %3166 = vmatprep.subr.bf16.mxu0 0
      %3167 = vmatpush1.bf16.msra.mxu0 0
      %3168 = vmatprep.subr.bf16.mxu0 0
      %3169 = vmatpush1.bf16.msra.mxu0 0
      %3170 = vmatprep.subr.bf16.mxu0 0
      %3171 = vmatpush1.bf16.msra.mxu0 %v3154
      %3172 = vmatprep.subr.bf16.mxu0 0
      %3173 = vmatpush2.bf16.msra.mxu0 0
      %3174 = vmatprep.subr.bf16.mxu0 0
      %3175 = vmatpush2.bf16.msra.mxu0 0
      %3176 = vmatprep.subr.bf16.mxu0 0
      %3177 = vmatpush2.bf16.msra.mxu0 0
      %3178 = vmatprep.subr.bf16.mxu0 0
      %3179 = vmatpush2.bf16.msra.mxu0 0
      %3180 = vmatprep.subr.bf16.mxu0 0
      %3181 = vmatpush2.bf16.msra.mxu0 0
      %3182 = vmatprep.subr.bf16.mxu0 0
      %3183 = vmatpush2.bf16.msra.mxu0 0
      %3184 = vmatprep.subr.bf16.mxu0 0
      %3185 = vmatpush2.bf16.msra.mxu0 0
      %3186 = vmatprep.subr.bf16.mxu0 0
      %3187 = vmatpush2.bf16.msra.mxu0 0
      %3188 = vmatprep.mubr.bf16.mxu0 0
      %3189 = vmatmul.mubr.bf16.gmra.mxu0 %v3151
      %v3190 = vpop.f32.mrf.mxu0
      %v3191 = vadd.f32 0.0, %v3190
      %v3192 = vpop.f32.mrf.mxu0
      %v3193 = vpop.f32.mrf.mxu0
      %v3194 = vpop.f32.mrf.mxu0
      %3195 = vdwg.mxu0
      %3196 = vrot.lane.b32.xlu0 %v655, 48
      %v3197 = vpop.permute.xlu0 %3196
      %v3199 = vsel %vm661, %v2953, 0
      %v3202 = vsel %vm1168, %v3197, 0
      %3204 = vmatprep.subr.bf16.mxu0 0
      %3205 = vmatpush1.bf16.msra.mxu0 0
      %3206 = vmatprep.subr.bf16.mxu0 0
      %3207 = vmatpush1.bf16.msra.mxu0 0
      %3208 = vmatprep.subr.bf16.mxu0 0
      %3209 = vmatpush1.bf16.msra.mxu0 0
      %3210 = vmatprep.subr.bf16.mxu0 0
      %3211 = vmatpush1.bf16.msra.mxu0 0
      %3212 = vmatprep.subr.bf16.mxu0 0
      %3213 = vmatpush1.bf16.msra.mxu0 0
      %3214 = vmatprep.subr.bf16.mxu0 0
      %3215 = vmatpush1.bf16.msra.mxu0 0
      %3216 = vmatprep.subr.bf16.mxu0 0
      %3217 = vmatpush1.bf16.msra.mxu0 0
      %3218 = vmatprep.subr.bf16.mxu0 0
      %3219 = vmatpush1.bf16.msra.mxu0 %v3202
      %3220 = vmatprep.subr.bf16.mxu0 0
      %3221 = vmatpush2.bf16.msra.mxu0 0
      %3222 = vmatprep.subr.bf16.mxu0 0
      %3223 = vmatpush2.bf16.msra.mxu0 0
      %3224 = vmatprep.subr.bf16.mxu0 0
      %3225 = vmatpush2.bf16.msra.mxu0 0
      %3226 = vmatprep.subr.bf16.mxu0 0
      %3227 = vmatpush2.bf16.msra.mxu0 0
      %3228 = vmatprep.subr.bf16.mxu0 0
      %3229 = vmatpush2.bf16.msra.mxu0 0
      %3230 = vmatprep.subr.bf16.mxu0 0
      %3231 = vmatpush2.bf16.msra.mxu0 0
      %3232 = vmatprep.subr.bf16.mxu0 0
      %3233 = vmatpush2.bf16.msra.mxu0 0
      %3234 = vmatprep.subr.bf16.mxu0 0
      %3235 = vmatpush2.bf16.msra.mxu0 0
      %3236 = vmatprep.mubr.bf16.mxu0 0
      %3237 = vmatmul.mubr.bf16.gmra.mxu0 %v3199
      %v3238 = vpop.f32.mrf.mxu0
      %v3239 = vadd.f32 0.0, %v3238
      %v3240 = vpop.f32.mrf.mxu0
      %v3241 = vpop.f32.mrf.mxu0
      %v3242 = vpop.f32.mrf.mxu0
      %3243 = vdwg.mxu0
      %3244 = vrot.lane.b32.xlu0 %v656, 48
      %v3245 = vpop.permute.xlu0 %3244
      %v3247 = vsel %vm661, %v2954, 0
      %v3250 = vsel %vm1168, %v3245, 0
      %3252 = vmatprep.subr.bf16.mxu0 0
      %3253 = vmatpush1.bf16.msra.mxu0 0
      %3254 = vmatprep.subr.bf16.mxu0 0
      %3255 = vmatpush1.bf16.msra.mxu0 0
      %3256 = vmatprep.subr.bf16.mxu0 0
      %3257 = vmatpush1.bf16.msra.mxu0 0
      %3258 = vmatprep.subr.bf16.mxu0 0
      %3259 = vmatpush1.bf16.msra.mxu0 0
      %3260 = vmatprep.subr.bf16.mxu0 0
      %3261 = vmatpush1.bf16.msra.mxu0 0
      %3262 = vmatprep.subr.bf16.mxu0 0
      %3263 = vmatpush1.bf16.msra.mxu0 0
      %3264 = vmatprep.subr.bf16.mxu0 0
      %3265 = vmatpush1.bf16.msra.mxu0 0
      %3266 = vmatprep.subr.bf16.mxu0 0
      %3267 = vmatpush1.bf16.msra.mxu0 %v3250
      %3268 = vmatprep.subr.bf16.mxu0 0
      %3269 = vmatpush2.bf16.msra.mxu0 0
      %3270 = vmatprep.subr.bf16.mxu0 0
      %3271 = vmatpush2.bf16.msra.mxu0 0
      %3272 = vmatprep.subr.bf16.mxu0 0
      %3273 = vmatpush2.bf16.msra.mxu0 0
      %3274 = vmatprep.subr.bf16.mxu0 0
      %3275 = vmatpush2.bf16.msra.mxu0 0
      %3276 = vmatprep.subr.bf16.mxu0 0
      %3277 = vmatpush2.bf16.msra.mxu0 0
      %3278 = vmatprep.subr.bf16.mxu0 0
      %3279 = vmatpush2.bf16.msra.mxu0 0
      %3280 = vmatprep.subr.bf16.mxu0 0
      %3281 = vmatpush2.bf16.msra.mxu0 0
      %3282 = vmatprep.subr.bf16.mxu0 0
      %3283 = vmatpush2.bf16.msra.mxu0 0
      %3284 = vmatprep.mubr.bf16.mxu0 0
      %3285 = vmatmul.mubr.bf16.gmra.mxu0 %v3247
      %v3286 = vpop.f32.mrf.mxu0
      %v3287 = vadd.f32 0.0, %v3286
      %v3288 = vpop.f32.mrf.mxu0
      %v3289 = vpop.f32.mrf.mxu0
      %v3290 = vpop.f32.mrf.mxu0
      %3291 = vdwg.mxu0
      %3292 = vrot.lane.b32.xlu0 %v657, 48
      %v3293 = vpop.permute.xlu0 %3292
      %v3295 = vsel %vm661, %v2955, 0
      %v3298 = vsel %vm1168, %v3293, 0
      %3300 = vmatprep.subr.bf16.mxu0 0
      %3301 = vmatpush1.bf16.msra.mxu0 0
      %3302 = vmatprep.subr.bf16.mxu0 0
      %3303 = vmatpush1.bf16.msra.mxu0 0
      %3304 = vmatprep.subr.bf16.mxu0 0
      %3305 = vmatpush1.bf16.msra.mxu0 0
      %3306 = vmatprep.subr.bf16.mxu0 0
      %3307 = vmatpush1.bf16.msra.mxu0 0
      %3308 = vmatprep.subr.bf16.mxu0 0
      %3309 = vmatpush1.bf16.msra.mxu0 0
      %3310 = vmatprep.subr.bf16.mxu0 0
      %3311 = vmatpush1.bf16.msra.mxu0 0
      %3312 = vmatprep.subr.bf16.mxu0 0
      %3313 = vmatpush1.bf16.msra.mxu0 0
      %3314 = vmatprep.subr.bf16.mxu0 0
      %3315 = vmatpush1.bf16.msra.mxu0 %v3298
      %3316 = vmatprep.subr.bf16.mxu0 0
      %3317 = vmatpush2.bf16.msra.mxu0 0
      %3318 = vmatprep.subr.bf16.mxu0 0
      %3319 = vmatpush2.bf16.msra.mxu0 0
      %3320 = vmatprep.subr.bf16.mxu0 0
      %3321 = vmatpush2.bf16.msra.mxu0 0
      %3322 = vmatprep.subr.bf16.mxu0 0
      %3323 = vmatpush2.bf16.msra.mxu0 0
      %3324 = vmatprep.subr.bf16.mxu0 0
      %3325 = vmatpush2.bf16.msra.mxu0 0
      %3326 = vmatprep.subr.bf16.mxu0 0
      %3327 = vmatpush2.bf16.msra.mxu0 0
      %3328 = vmatprep.subr.bf16.mxu0 0
      %3329 = vmatpush2.bf16.msra.mxu0 0
      %3330 = vmatprep.subr.bf16.mxu0 0
      %3331 = vmatpush2.bf16.msra.mxu0 0
      %3332 = vmatprep.mubr.bf16.mxu0 0
      %3333 = vmatmul.mubr.bf16.gmra.mxu0 %v3295
      %v3334 = vpop.f32.mrf.mxu0
      %v3335 = vadd.f32 0.0, %v3334
      %v3336 = vpop.f32.mrf.mxu0
      %v3337 = vpop.f32.mrf.mxu0
      %v3338 = vpop.f32.mrf.mxu0
      %3339 = vdwg.mxu0
      %3340 = vrot.lane.b32.xlu0 %v650, 104
      %v3341 = vpop.permute.xlu0 %3340
      %3342 = vrot.lane.b32.xlu0 %v650, 72
      %v3343 = vpop.permute.xlu0 %3342
      %v3345 = vsel %vm661, %v3341, 0
      %v3348 = vsel %vm661, %v3343, 0
      %3350 = vmatprep.subr.bf16.mxu0 0
      %3351 = vmatpush1.bf16.xpose.msra.mxu0 0
      %3352 = vmatprep.subr.bf16.mxu0 0
      %3353 = vmatpush1.bf16.xpose.msra.mxu0 0
      %3354 = vmatprep.subr.bf16.mxu0 0
      %3355 = vmatpush1.bf16.xpose.msra.mxu0 0
      %3356 = vmatprep.subr.bf16.mxu0 0
      %3357 = vmatpush1.bf16.xpose.msra.mxu0 0
      %3358 = vmatprep.subr.bf16.mxu0 0
      %3359 = vmatpush1.bf16.xpose.msra.mxu0 0
      %3360 = vmatprep.subr.bf16.mxu0 0
      %3361 = vmatpush1.bf16.xpose.msra.mxu0 0
      %3362 = vmatprep.subr.bf16.mxu0 0
      %3363 = vmatpush1.bf16.xpose.msra.mxu0 0
      %3364 = vmatprep.subr.bf16.mxu0 0
      %3365 = vmatpush1.bf16.xpose.msra.mxu0 %v3348
      %3366 = vmatprep.subr.bf16.mxu0 0
      %3367 = vmatpush2.bf16.xpose.msra.mxu0 0
      %3368 = vmatprep.subr.bf16.mxu0 0
      %3369 = vmatpush2.bf16.xpose.msra.mxu0 0
      %3370 = vmatprep.subr.bf16.mxu0 0
      %3371 = vmatpush2.bf16.xpose.msra.mxu0 0
      %3372 = vmatprep.subr.bf16.mxu0 0
      %3373 = vmatpush2.bf16.xpose.msra.mxu0 0
      %3374 = vmatprep.subr.bf16.mxu0 0
      %3375 = vmatpush2.bf16.xpose.msra.mxu0 0
      %3376 = vmatprep.subr.bf16.mxu0 0
      %3377 = vmatpush2.bf16.xpose.msra.mxu0 0
      %3378 = vmatprep.subr.bf16.mxu0 0
      %3379 = vmatpush2.bf16.xpose.msra.mxu0 0
      %3380 = vmatprep.subr.bf16.mxu0 0
      %3381 = vmatpush2.bf16.xpose.msra.mxu0 0
      %3382 = vmatprep.mubr.bf16.mxu0 0
      %3383 = vmatmul.mubr.bf16.gmra.mxu0 %v3345
      %v3384 = vpop.f32.mrf.mxu0
      %v3385 = vadd.f32 0.0, %v3384
      %v3386 = vpop.f32.mrf.mxu0
      %v3387 = vpop.f32.mrf.mxu0
      %v3388 = vpop.f32.mrf.mxu0
      %3389 = vdwg.mxu0
      %3390 = vrot.lane.b32.xlu0 %v651, 104
      %v3391 = vpop.permute.xlu0 %3390
      %3392 = vrot.lane.b32.xlu0 %v651, 72
      %v3393 = vpop.permute.xlu0 %3392
      %v3395 = vsel %vm661, %v3391, 0
      %v3398 = vsel %vm661, %v3393, 0
      %3400 = vmatprep.subr.bf16.mxu0 0
      %3401 = vmatpush1.bf16.xpose.msra.mxu0 0
      %3402 = vmatprep.subr.bf16.mxu0 0
      %3403 = vmatpush1.bf16.xpose.msra.mxu0 0
      %3404 = vmatprep.subr.bf16.mxu0 0
      %3405 = vmatpush1.bf16.xpose.msra.mxu0 0
      %3406 = vmatprep.subr.bf16.mxu0 0
      %3407 = vmatpush1.bf16.xpose.msra.mxu0 0
      %3408 = vmatprep.subr.bf16.mxu0 0
      %3409 = vmatpush1.bf16.xpose.msra.mxu0 0
      %3410 = vmatprep.subr.bf16.mxu0 0
      %3411 = vmatpush1.bf16.xpose.msra.mxu0 0
      %3412 = vmatprep.subr.bf16.mxu0 0
      %3413 = vmatpush1.bf16.xpose.msra.mxu0 0
      %3414 = vmatprep.subr.bf16.mxu0 0
      %3415 = vmatpush1.bf16.xpose.msra.mxu0 %v3398
      %3416 = vmatprep.subr.bf16.mxu0 0
      %3417 = vmatpush2.bf16.xpose.msra.mxu0 0
      %3418 = vmatprep.subr.bf16.mxu0 0
      %3419 = vmatpush2.bf16.xpose.msra.mxu0 0
      %3420 = vmatprep.subr.bf16.mxu0 0
      %3421 = vmatpush2.bf16.xpose.msra.mxu0 0
      %3422 = vmatprep.subr.bf16.mxu0 0
      %3423 = vmatpush2.bf16.xpose.msra.mxu0 0
      %3424 = vmatprep.subr.bf16.mxu0 0
      %3425 = vmatpush2.bf16.xpose.msra.mxu0 0
      %3426 = vmatprep.subr.bf16.mxu0 0
      %3427 = vmatpush2.bf16.xpose.msra.mxu0 0
      %3428 = vmatprep.subr.bf16.mxu0 0
      %3429 = vmatpush2.bf16.xpose.msra.mxu0 0
      %3430 = vmatprep.subr.bf16.mxu0 0
      %3431 = vmatpush2.bf16.xpose.msra.mxu0 0
      %3432 = vmatprep.mubr.bf16.mxu0 0
      %3433 = vmatmul.mubr.bf16.gmra.mxu0 %v3395
      %v3434 = vpop.f32.mrf.mxu0
      %v3435 = vadd.f32 0.0, %v3434
      %v3436 = vpop.f32.mrf.mxu0
      %v3437 = vpop.f32.mrf.mxu0
      %v3438 = vpop.f32.mrf.mxu0
      %3439 = vdwg.mxu0
      %3440 = vrot.lane.b32.xlu0 %v652, 104
      %v3441 = vpop.permute.xlu0 %3440
      %3442 = vrot.lane.b32.xlu0 %v652, 72
      %v3443 = vpop.permute.xlu0 %3442
      %v3445 = vsel %vm661, %v3441, 0
      %v3448 = vsel %vm661, %v3443, 0
      %3450 = vmatprep.subr.bf16.mxu0 0
      %3451 = vmatpush1.bf16.xpose.msra.mxu0 0
      %3452 = vmatprep.subr.bf16.mxu0 0
      %3453 = vmatpush1.bf16.xpose.msra.mxu0 0
      %3454 = vmatprep.subr.bf16.mxu0 0
      %3455 = vmatpush1.bf16.xpose.msra.mxu0 0
      %3456 = vmatprep.subr.bf16.mxu0 0
      %3457 = vmatpush1.bf16.xpose.msra.mxu0 0
      %3458 = vmatprep.subr.bf16.mxu0 0
      %3459 = vmatpush1.bf16.xpose.msra.mxu0 0
      %3460 = vmatprep.subr.bf16.mxu0 0
      %3461 = vmatpush1.bf16.xpose.msra.mxu0 0
      %3462 = vmatprep.subr.bf16.mxu0 0
      %3463 = vmatpush1.bf16.xpose.msra.mxu0 0
      %3464 = vmatprep.subr.bf16.mxu0 0
      %3465 = vmatpush1.bf16.xpose.msra.mxu0 %v3448
      %3466 = vmatprep.subr.bf16.mxu0 0
      %3467 = vmatpush2.bf16.xpose.msra.mxu0 0
      %3468 = vmatprep.subr.bf16.mxu0 0
      %3469 = vmatpush2.bf16.xpose.msra.mxu0 0
      %3470 = vmatprep.subr.bf16.mxu0 0
      %3471 = vmatpush2.bf16.xpose.msra.mxu0 0
      %3472 = vmatprep.subr.bf16.mxu0 0
      %3473 = vmatpush2.bf16.xpose.msra.mxu0 0
      %3474 = vmatprep.subr.bf16.mxu0 0
      %3475 = vmatpush2.bf16.xpose.msra.mxu0 0
      %3476 = vmatprep.subr.bf16.mxu0 0
      %3477 = vmatpush2.bf16.xpose.msra.mxu0 0
      %3478 = vmatprep.subr.bf16.mxu0 0
      %3479 = vmatpush2.bf16.xpose.msra.mxu0 0
      %3480 = vmatprep.subr.bf16.mxu0 0
      %3481 = vmatpush2.bf16.xpose.msra.mxu0 0
      %3482 = vmatprep.mubr.bf16.mxu0 0
      %3483 = vmatmul.mubr.bf16.gmra.mxu0 %v3445
      %v3484 = vpop.f32.mrf.mxu0
      %v3485 = vadd.f32 0.0, %v3484
      %v3486 = vpop.f32.mrf.mxu0
      %v3487 = vpop.f32.mrf.mxu0
      %v3488 = vpop.f32.mrf.mxu0
      %3489 = vdwg.mxu0
      %3490 = vrot.lane.b32.xlu0 %v653, 104
      %v3491 = vpop.permute.xlu0 %3490
      %3492 = vrot.lane.b32.xlu0 %v653, 72
      %v3493 = vpop.permute.xlu0 %3492
      %v3495 = vsel %vm661, %v3491, 0
      %v3498 = vsel %vm661, %v3493, 0
      %3500 = vmatprep.subr.bf16.mxu0 0
      %3501 = vmatpush1.bf16.xpose.msra.mxu0 0
      %3502 = vmatprep.subr.bf16.mxu0 0
      %3503 = vmatpush1.bf16.xpose.msra.mxu0 0
      %3504 = vmatprep.subr.bf16.mxu0 0
      %3505 = vmatpush1.bf16.xpose.msra.mxu0 0
      %3506 = vmatprep.subr.bf16.mxu0 0
      %3507 = vmatpush1.bf16.xpose.msra.mxu0 0
      %3508 = vmatprep.subr.bf16.mxu0 0
      %3509 = vmatpush1.bf16.xpose.msra.mxu0 0
      %3510 = vmatprep.subr.bf16.mxu0 0
      %3511 = vmatpush1.bf16.xpose.msra.mxu0 0
      %3512 = vmatprep.subr.bf16.mxu0 0
      %3513 = vmatpush1.bf16.xpose.msra.mxu0 0
      %3514 = vmatprep.subr.bf16.mxu0 0
      %3515 = vmatpush1.bf16.xpose.msra.mxu0 %v3498
      %3516 = vmatprep.subr.bf16.mxu0 0
      %3517 = vmatpush2.bf16.xpose.msra.mxu0 0
      %3518 = vmatprep.subr.bf16.mxu0 0
      %3519 = vmatpush2.bf16.xpose.msra.mxu0 0
      %3520 = vmatprep.subr.bf16.mxu0 0
      %3521 = vmatpush2.bf16.xpose.msra.mxu0 0
      %3522 = vmatprep.subr.bf16.mxu0 0
      %3523 = vmatpush2.bf16.xpose.msra.mxu0 0
      %3524 = vmatprep.subr.bf16.mxu0 0
      %3525 = vmatpush2.bf16.xpose.msra.mxu0 0
      %3526 = vmatprep.subr.bf16.mxu0 0
      %3527 = vmatpush2.bf16.xpose.msra.mxu0 0
      %3528 = vmatprep.subr.bf16.mxu0 0
      %3529 = vmatpush2.bf16.xpose.msra.mxu0 0
      %3530 = vmatprep.subr.bf16.mxu0 0
      %3531 = vmatpush2.bf16.xpose.msra.mxu0 0
      %3532 = vmatprep.mubr.bf16.mxu0 0
      %3533 = vmatmul.mubr.bf16.gmra.mxu0 %v3495
      %v3534 = vpop.f32.mrf.mxu0
      %v3535 = vadd.f32 0.0, %v3534
      %v3536 = vpop.f32.mrf.mxu0
      %v3537 = vpop.f32.mrf.mxu0
      %v3538 = vpop.f32.mrf.mxu0
      %3539 = vdwg.mxu0
      %3540 = vrot.lane.b32.xlu0 %v654, 104
      %v3541 = vpop.permute.xlu0 %3540
      %3542 = vrot.lane.b32.xlu0 %v654, 72
      %v3543 = vpop.permute.xlu0 %3542
      %v3545 = vsel %vm661, %v3541, 0
      %v3548 = vsel %vm661, %v3543, 0
      %3550 = vmatprep.subr.bf16.mxu0 0
      %3551 = vmatpush1.bf16.xpose.msra.mxu0 0
      %3552 = vmatprep.subr.bf16.mxu0 0
      %3553 = vmatpush1.bf16.xpose.msra.mxu0 0
      %3554 = vmatprep.subr.bf16.mxu0 0
      %3555 = vmatpush1.bf16.xpose.msra.mxu0 0
      %3556 = vmatprep.subr.bf16.mxu0 0
      %3557 = vmatpush1.bf16.xpose.msra.mxu0 0
      %3558 = vmatprep.subr.bf16.mxu0 0
      %3559 = vmatpush1.bf16.xpose.msra.mxu0 0
      %3560 = vmatprep.subr.bf16.mxu0 0
      %3561 = vmatpush1.bf16.xpose.msra.mxu0 0
      %3562 = vmatprep.subr.bf16.mxu0 0
      %3563 = vmatpush1.bf16.xpose.msra.mxu0 0
      %3564 = vmatprep.subr.bf16.mxu0 0
      %3565 = vmatpush1.bf16.xpose.msra.mxu0 %v3548
      %3566 = vmatprep.subr.bf16.mxu0 0
      %3567 = vmatpush2.bf16.xpose.msra.mxu0 0
      %3568 = vmatprep.subr.bf16.mxu0 0
      %3569 = vmatpush2.bf16.xpose.msra.mxu0 0
      %3570 = vmatprep.subr.bf16.mxu0 0
      %3571 = vmatpush2.bf16.xpose.msra.mxu0 0
      %3572 = vmatprep.subr.bf16.mxu0 0
      %3573 = vmatpush2.bf16.xpose.msra.mxu0 0
      %3574 = vmatprep.subr.bf16.mxu0 0
      %3575 = vmatpush2.bf16.xpose.msra.mxu0 0
      %3576 = vmatprep.subr.bf16.mxu0 0
      %3577 = vmatpush2.bf16.xpose.msra.mxu0 0
      %3578 = vmatprep.subr.bf16.mxu0 0
      %3579 = vmatpush2.bf16.xpose.msra.mxu0 0
      %3580 = vmatprep.subr.bf16.mxu0 0
      %3581 = vmatpush2.bf16.xpose.msra.mxu0 0
      %3582 = vmatprep.mubr.bf16.mxu0 0
      %3583 = vmatmul.mubr.bf16.gmra.mxu0 %v3545
      %v3584 = vpop.f32.mrf.mxu0
      %v3585 = vadd.f32 0.0, %v3584
      %v3586 = vpop.f32.mrf.mxu0
      %v3587 = vpop.f32.mrf.mxu0
      %v3588 = vpop.f32.mrf.mxu0
      %3589 = vdwg.mxu0
      %3590 = vrot.lane.b32.xlu0 %v655, 104
      %v3591 = vpop.permute.xlu0 %3590
      %3592 = vrot.lane.b32.xlu0 %v655, 72
      %v3593 = vpop.permute.xlu0 %3592
      %v3595 = vsel %vm661, %v3591, 0
      %v3598 = vsel %vm661, %v3593, 0
      %3600 = vmatprep.subr.bf16.mxu0 0
      %3601 = vmatpush1.bf16.xpose.msra.mxu0 0
      %3602 = vmatprep.subr.bf16.mxu0 0
      %3603 = vmatpush1.bf16.xpose.msra.mxu0 0
      %3604 = vmatprep.subr.bf16.mxu0 0
      %3605 = vmatpush1.bf16.xpose.msra.mxu0 0
      %3606 = vmatprep.subr.bf16.mxu0 0
      %3607 = vmatpush1.bf16.xpose.msra.mxu0 0
      %3608 = vmatprep.subr.bf16.mxu0 0
      %3609 = vmatpush1.bf16.xpose.msra.mxu0 0
      %3610 = vmatprep.subr.bf16.mxu0 0
      %3611 = vmatpush1.bf16.xpose.msra.mxu0 0
      %3612 = vmatprep.subr.bf16.mxu0 0
      %3613 = vmatpush1.bf16.xpose.msra.mxu0 0
      %3614 = vmatprep.subr.bf16.mxu0 0
      %3615 = vmatpush1.bf16.xpose.msra.mxu0 %v3598
      %3616 = vmatprep.subr.bf16.mxu0 0
      %3617 = vmatpush2.bf16.xpose.msra.mxu0 0
      %3618 = vmatprep.subr.bf16.mxu0 0
      %3619 = vmatpush2.bf16.xpose.msra.mxu0 0
      %3620 = vmatprep.subr.bf16.mxu0 0
      %3621 = vmatpush2.bf16.xpose.msra.mxu0 0
      %3622 = vmatprep.subr.bf16.mxu0 0
      %3623 = vmatpush2.bf16.xpose.msra.mxu0 0
      %3624 = vmatprep.subr.bf16.mxu0 0
      %3625 = vmatpush2.bf16.xpose.msra.mxu0 0
      %3626 = vmatprep.subr.bf16.mxu0 0
      %3627 = vmatpush2.bf16.xpose.msra.mxu0 0
      %3628 = vmatprep.subr.bf16.mxu0 0
      %3629 = vmatpush2.bf16.xpose.msra.mxu0 0
      %3630 = vmatprep.subr.bf16.mxu0 0
      %3631 = vmatpush2.bf16.xpose.msra.mxu0 0
      %3632 = vmatprep.mubr.bf16.mxu0 0
      %3633 = vmatmul.mubr.bf16.gmra.mxu0 %v3595
      %v3634 = vpop.f32.mrf.mxu0
      %v3635 = vadd.f32 0.0, %v3634
      %v3636 = vpop.f32.mrf.mxu0
      %v3637 = vpop.f32.mrf.mxu0
      %v3638 = vpop.f32.mrf.mxu0
      %3639 = vdwg.mxu0
      %3640 = vrot.lane.b32.xlu0 %v656, 104
      %v3641 = vpop.permute.xlu0 %3640
      %3642 = vrot.lane.b32.xlu0 %v656, 72
      %v3643 = vpop.permute.xlu0 %3642
      %v3645 = vsel %vm661, %v3641, 0
      %v3648 = vsel %vm661, %v3643, 0
      %3650 = vmatprep.subr.bf16.mxu0 0
      %3651 = vmatpush1.bf16.xpose.msra.mxu0 0
      %3652 = vmatprep.subr.bf16.mxu0 0
      %3653 = vmatpush1.bf16.xpose.msra.mxu0 0
      %3654 = vmatprep.subr.bf16.mxu0 0
      %3655 = vmatpush1.bf16.xpose.msra.mxu0 0
      %3656 = vmatprep.subr.bf16.mxu0 0
      %3657 = vmatpush1.bf16.xpose.msra.mxu0 0
      %3658 = vmatprep.subr.bf16.mxu0 0
      %3659 = vmatpush1.bf16.xpose.msra.mxu0 0
      %3660 = vmatprep.subr.bf16.mxu0 0
      %3661 = vmatpush1.bf16.xpose.msra.mxu0 0
      %3662 = vmatprep.subr.bf16.mxu0 0
      %3663 = vmatpush1.bf16.xpose.msra.mxu0 0
      %3664 = vmatprep.subr.bf16.mxu0 0
      %3665 = vmatpush1.bf16.xpose.msra.mxu0 %v3648
      %3666 = vmatprep.subr.bf16.mxu0 0
      %3667 = vmatpush2.bf16.xpose.msra.mxu0 0
      %3668 = vmatprep.subr.bf16.mxu0 0
      %3669 = vmatpush2.bf16.xpose.msra.mxu0 0
      %3670 = vmatprep.subr.bf16.mxu0 0
      %3671 = vmatpush2.bf16.xpose.msra.mxu0 0
      %3672 = vmatprep.subr.bf16.mxu0 0
      %3673 = vmatpush2.bf16.xpose.msra.mxu0 0
      %3674 = vmatprep.subr.bf16.mxu0 0
      %3675 = vmatpush2.bf16.xpose.msra.mxu0 0
      %3676 = vmatprep.subr.bf16.mxu0 0
      %3677 = vmatpush2.bf16.xpose.msra.mxu0 0
      %3678 = vmatprep.subr.bf16.mxu0 0
      %3679 = vmatpush2.bf16.xpose.msra.mxu0 0
      %3680 = vmatprep.subr.bf16.mxu0 0
      %3681 = vmatpush2.bf16.xpose.msra.mxu0 0
      %3682 = vmatprep.mubr.bf16.mxu0 0
      %3683 = vmatmul.mubr.bf16.gmra.mxu0 %v3645
      %v3684 = vpop.f32.mrf.mxu0
      %v3685 = vadd.f32 0.0, %v3684
      %v3686 = vpop.f32.mrf.mxu0
      %v3687 = vpop.f32.mrf.mxu0
      %v3688 = vpop.f32.mrf.mxu0
      %3689 = vdwg.mxu0
      %3690 = vrot.lane.b32.xlu0 %v657, 104
      %v3691 = vpop.permute.xlu0 %3690
      %3692 = vrot.lane.b32.xlu0 %v657, 72
      %v3693 = vpop.permute.xlu0 %3692
      %v3695 = vsel %vm661, %v3691, 0
      %v3698 = vsel %vm661, %v3693, 0
      %3700 = vmatprep.subr.bf16.mxu0 0
      %3701 = vmatpush1.bf16.xpose.msra.mxu0 0
      %3702 = vmatprep.subr.bf16.mxu0 0
      %3703 = vmatpush1.bf16.xpose.msra.mxu0 0
      %3704 = vmatprep.subr.bf16.mxu0 0
      %3705 = vmatpush1.bf16.xpose.msra.mxu0 0
      %3706 = vmatprep.subr.bf16.mxu0 0
      %3707 = vmatpush1.bf16.xpose.msra.mxu0 0
      %3708 = vmatprep.subr.bf16.mxu0 0
      %3709 = vmatpush1.bf16.xpose.msra.mxu0 0
      %3710 = vmatprep.subr.bf16.mxu0 0
      %3711 = vmatpush1.bf16.xpose.msra.mxu0 0
      %3712 = vmatprep.subr.bf16.mxu0 0
      %3713 = vmatpush1.bf16.xpose.msra.mxu0 0
      %3714 = vmatprep.subr.bf16.mxu0 0
      %3715 = vmatpush1.bf16.xpose.msra.mxu0 %v3698
      %3716 = vmatprep.subr.bf16.mxu0 0
      %3717 = vmatpush2.bf16.xpose.msra.mxu0 0
      %3718 = vmatprep.subr.bf16.mxu0 0
      %3719 = vmatpush2.bf16.xpose.msra.mxu0 0
      %3720 = vmatprep.subr.bf16.mxu0 0
      %3721 = vmatpush2.bf16.xpose.msra.mxu0 0
      %3722 = vmatprep.subr.bf16.mxu0 0
      %3723 = vmatpush2.bf16.xpose.msra.mxu0 0
      %3724 = vmatprep.subr.bf16.mxu0 0
      %3725 = vmatpush2.bf16.xpose.msra.mxu0 0
      %3726 = vmatprep.subr.bf16.mxu0 0
      %3727 = vmatpush2.bf16.xpose.msra.mxu0 0
      %3728 = vmatprep.subr.bf16.mxu0 0
      %3729 = vmatpush2.bf16.xpose.msra.mxu0 0
      %3730 = vmatprep.subr.bf16.mxu0 0
      %3731 = vmatpush2.bf16.xpose.msra.mxu0 0
      %3732 = vmatprep.mubr.bf16.mxu0 0
      %3733 = vmatmul.mubr.bf16.gmra.mxu0 %v3695
      %v3734 = vpop.f32.mrf.mxu0
      %v3735 = vadd.f32 0.0, %v3734
      %v3736 = vpop.f32.mrf.mxu0
      %v3737 = vpop.f32.mrf.mxu0
      %v3738 = vpop.f32.mrf.mxu0
      %3739 = vdwg.mxu0
      %v3740 = vmul.f32 %v3385, 0.35355338
      %v3741 = vmul.f32 %v3435, 0.35355338
      %v3742 = vmul.f32 %v3485, 0.35355338
      %v3743 = vmul.f32 %v3535, 0.35355338
      %v3744 = vmul.f32 %v3585, 0.35355338
      %v3745 = vmul.f32 %v3635, 0.35355338
      %v3746 = vmul.f32 %v3685, 0.35355338
      %v3747 = vmul.f32 %v3735, 0.35355338
      %v3748 = vadd.f32 %v3740, %v649
      %v3749 = vadd.f32 %v3741, %v649
      %v3750 = vadd.f32 %v3742, %v649
      %v3751 = vadd.f32 %v3743, %v649
      %v3752 = vadd.f32 %v3744, %v649
      %v3753 = vadd.f32 %v3745, %v649
      %v3754 = vadd.f32 %v3746, %v649
      %v3755 = vadd.f32 %v3747, %v649
      %v3756 = vsel %vm661, %v3748, -inf
      %3757 = vmax.xlane.f32.xlu0 %v3756
      %v3758 = vpop.xlane.xlu0 %3757
      %v3759 = vsel %vm661, %v3749, -inf
      %3760 = vmax.xlane.f32.xlu0 %v3759
      %v3761 = vpop.xlane.xlu0 %3760
      %v3762 = vsel %vm661, %v3750, -inf
      %3763 = vmax.xlane.f32.xlu0 %v3762
      %v3764 = vpop.xlane.xlu0 %3763
      %v3765 = vsel %vm661, %v3751, -inf
      %3766 = vmax.xlane.f32.xlu0 %v3765
      %v3767 = vpop.xlane.xlu0 %3766
      %v3768 = vsel %vm661, %v3752, -inf
      %3769 = vmax.xlane.f32.xlu0 %v3768
      %v3770 = vpop.xlane.xlu0 %3769
      %v3771 = vsel %vm661, %v3753, -inf
      %3772 = vmax.xlane.f32.xlu0 %v3771
      %v3773 = vpop.xlane.xlu0 %3772
      %v3774 = vsel %vm661, %v3754, -inf
      %3775 = vmax.xlane.f32.xlu0 %v3774
      %v3776 = vpop.xlane.xlu0 %3775
      %v3777 = vsel %vm661, %v3755, -inf
      %3778 = vmax.xlane.f32.xlu0 %v3777
      %v3779 = vpop.xlane.xlu0 %3778
      %v3780 = vsub.f32 %v3748, %v3758
      %v3781 = vsub.f32 %v3749, %v3761
      %v3782 = vsub.f32 %v3750, %v3764
      %v3783 = vsub.f32 %v3751, %v3767
      %v3784 = vsub.f32 %v3752, %v3770
      %v3785 = vsub.f32 %v3753, %v3773
      %v3786 = vsub.f32 %v3754, %v3776
      %v3787 = vsub.f32 %v3755, %v3779
      %v3788 = vmul.f32 %v3780, 1.442695
      %v3789 = vpow.pop %v3788
      %v3790 = vmul.f32 %v3781, 1.442695
      %v3791 = vpow.pop %v3790
      %v3792 = vmul.f32 %v3782, 1.442695
      %v3793 = vpow.pop %v3792
      %v3794 = vmul.f32 %v3783, 1.442695
      %v3795 = vpow.pop %v3794
      %v3796 = vmul.f32 %v3784, 1.442695
      %v3797 = vpow.pop %v3796
      %v3798 = vmul.f32 %v3785, 1.442695
      %v3799 = vpow.pop %v3798
      %v3800 = vmul.f32 %v3786, 1.442695
      %v3801 = vpow.pop %v3800
      %v3802 = vmul.f32 %v3787, 1.442695
      %v3803 = vpow.pop %v3802
      %v3804 = vsel %vm661, %v3789, 0.0
      %3805 = vadd.xlane.f32.xlu0 %v3804
      %v3806 = vpop.xlane.xlu0 %3805
      %v3807 = vsel %vm661, %v3791, 0.0
      %3808 = vadd.xlane.f32.xlu0 %v3807
      %v3809 = vpop.xlane.xlu0 %3808
      %v3810 = vsel %vm661, %v3793, 0.0
      %3811 = vadd.xlane.f32.xlu0 %v3810
      %v3812 = vpop.xlane.xlu0 %3811
      %v3813 = vsel %vm661, %v3795, 0.0
      %3814 = vadd.xlane.f32.xlu0 %v3813
      %v3815 = vpop.xlane.xlu0 %3814
      %v3816 = vsel %vm661, %v3797, 0.0
      %3817 = vadd.xlane.f32.xlu0 %v3816
      %v3818 = vpop.xlane.xlu0 %3817
      %v3819 = vsel %vm661, %v3799, 0.0
      %3820 = vadd.xlane.f32.xlu0 %v3819
      %v3821 = vpop.xlane.xlu0 %3820
      %v3822 = vsel %vm661, %v3801, 0.0
      %3823 = vadd.xlane.f32.xlu0 %v3822
      %v3824 = vpop.xlane.xlu0 %3823
      %v3825 = vsel %vm661, %v3803, 0.0
      %3826 = vadd.xlane.f32.xlu0 %v3825
      %v3827 = vpop.xlane.xlu0 %3826
      %v3828 = vrcp.pop %v3806
      %v3829 = vrcp.pop %v3809
      %v3830 = vrcp.pop %v3812
      %v3831 = vrcp.pop %v3815
      %v3832 = vrcp.pop %v3818
      %v3833 = vrcp.pop %v3821
      %v3834 = vrcp.pop %v3824
      %v3835 = vrcp.pop %v3827
      %v3836 = vmul.f32 %v3789, %v3828
      %v3837 = vmul.f32 %v3791, %v3829
      %v3838 = vmul.f32 %v3793, %v3830
      %v3839 = vmul.f32 %v3795, %v3831
      %v3840 = vmul.f32 %v3797, %v3832
      %v3841 = vmul.f32 %v3799, %v3833
      %v3842 = vmul.f32 %v3801, %v3834
      %v3843 = vmul.f32 %v3803, %v3835
      %v3844 = vpack.c.bf16 %v3836, %v3836
      %v3845 = vpack.c.bf16 %v3837, %v3837
      %v3846 = vpack.c.bf16 %v3838, %v3838
      %v3847 = vpack.c.bf16 %v3839, %v3839
      %v3848 = vpack.c.bf16 %v3840, %v3840
      %v3849 = vpack.c.bf16 %v3841, %v3841
      %v3850 = vpack.c.bf16 %v3842, %v3842
      %v3851 = vpack.c.bf16 %v3843, %v3843
      %3852 = vrot.lane.b32.xlu0 %v650, 40
      %v3853 = vpop.permute.xlu0 %3852
      %v3855 = vsel %vm661, %v3844, 0
      %v3858 = vsel %vm1168, %v3853, 0
      %3860 = vmatprep.subr.bf16.mxu0 0
      %3861 = vmatpush1.bf16.msra.mxu0 0
      %3862 = vmatprep.subr.bf16.mxu0 0
      %3863 = vmatpush1.bf16.msra.mxu0 0
      %3864 = vmatprep.subr.bf16.mxu0 0
      %3865 = vmatpush1.bf16.msra.mxu0 0
      %3866 = vmatprep.subr.bf16.mxu0 0
      %3867 = vmatpush1.bf16.msra.mxu0 0
      %3868 = vmatprep.subr.bf16.mxu0 0
      %3869 = vmatpush1.bf16.msra.mxu0 0
      %3870 = vmatprep.subr.bf16.mxu0 0
      %3871 = vmatpush1.bf16.msra.mxu0 0
      %3872 = vmatprep.subr.bf16.mxu0 0
      %3873 = vmatpush1.bf16.msra.mxu0 0
      %3874 = vmatprep.subr.bf16.mxu0 0
      %3875 = vmatpush1.bf16.msra.mxu0 %v3858
      %3876 = vmatprep.subr.bf16.mxu0 0
      %3877 = vmatpush2.bf16.msra.mxu0 0
      %3878 = vmatprep.subr.bf16.mxu0 0
      %3879 = vmatpush2.bf16.msra.mxu0 0
      %3880 = vmatprep.subr.bf16.mxu0 0
      %3881 = vmatpush2.bf16.msra.mxu0 0
      %3882 = vmatprep.subr.bf16.mxu0 0
      %3883 = vmatpush2.bf16.msra.mxu0 0
      %3884 = vmatprep.subr.bf16.mxu0 0
      %3885 = vmatpush2.bf16.msra.mxu0 0
      %3886 = vmatprep.subr.bf16.mxu0 0
      %3887 = vmatpush2.bf16.msra.mxu0 0
      %3888 = vmatprep.subr.bf16.mxu0 0
      %3889 = vmatpush2.bf16.msra.mxu0 0
      %3890 = vmatprep.subr.bf16.mxu0 0
      %3891 = vmatpush2.bf16.msra.mxu0 0
      %3892 = vmatprep.mubr.bf16.mxu0 0
      %3893 = vmatmul.mubr.bf16.gmra.mxu0 %v3855
      %v3894 = vpop.f32.mrf.mxu0
      %v3895 = vadd.f32 0.0, %v3894
      %v3896 = vpop.f32.mrf.mxu0
      %v3897 = vpop.f32.mrf.mxu0
      %v3898 = vpop.f32.mrf.mxu0
      %3899 = vdwg.mxu0
      %3900 = vrot.lane.b32.xlu0 %v651, 40
      %v3901 = vpop.permute.xlu0 %3900
      %v3903 = vsel %vm661, %v3845, 0
      %v3906 = vsel %vm1168, %v3901, 0
      %3908 = vmatprep.subr.bf16.mxu0 0
      %3909 = vmatpush1.bf16.msra.mxu0 0
      %3910 = vmatprep.subr.bf16.mxu0 0
      %3911 = vmatpush1.bf16.msra.mxu0 0
      %3912 = vmatprep.subr.bf16.mxu0 0
      %3913 = vmatpush1.bf16.msra.mxu0 0
      %3914 = vmatprep.subr.bf16.mxu0 0
      %3915 = vmatpush1.bf16.msra.mxu0 0
      %3916 = vmatprep.subr.bf16.mxu0 0
      %3917 = vmatpush1.bf16.msra.mxu0 0
      %3918 = vmatprep.subr.bf16.mxu0 0
      %3919 = vmatpush1.bf16.msra.mxu0 0
      %3920 = vmatprep.subr.bf16.mxu0 0
      %3921 = vmatpush1.bf16.msra.mxu0 0
      %3922 = vmatprep.subr.bf16.mxu0 0
      %3923 = vmatpush1.bf16.msra.mxu0 %v3906
      %3924 = vmatprep.subr.bf16.mxu0 0
      %3925 = vmatpush2.bf16.msra.mxu0 0
      %3926 = vmatprep.subr.bf16.mxu0 0
      %3927 = vmatpush2.bf16.msra.mxu0 0
      %3928 = vmatprep.subr.bf16.mxu0 0
      %3929 = vmatpush2.bf16.msra.mxu0 0
      %3930 = vmatprep.subr.bf16.mxu0 0
      %3931 = vmatpush2.bf16.msra.mxu0 0
      %3932 = vmatprep.subr.bf16.mxu0 0
      %3933 = vmatpush2.bf16.msra.mxu0 0
      %3934 = vmatprep.subr.bf16.mxu0 0
      %3935 = vmatpush2.bf16.msra.mxu0 0
      %3936 = vmatprep.subr.bf16.mxu0 0
      %3937 = vmatpush2.bf16.msra.mxu0 0
      %3938 = vmatprep.subr.bf16.mxu0 0
      %3939 = vmatpush2.bf16.msra.mxu0 0
      %3940 = vmatprep.mubr.bf16.mxu0 0
      %3941 = vmatmul.mubr.bf16.gmra.mxu0 %v3903
      %v3942 = vpop.f32.mrf.mxu0
      %v3943 = vadd.f32 0.0, %v3942
      %v3944 = vpop.f32.mrf.mxu0
      %v3945 = vpop.f32.mrf.mxu0
      %v3946 = vpop.f32.mrf.mxu0
      %3947 = vdwg.mxu0
      %3948 = vrot.lane.b32.xlu0 %v652, 40
      %v3949 = vpop.permute.xlu0 %3948
      %v3951 = vsel %vm661, %v3846, 0
      %v3954 = vsel %vm1168, %v3949, 0
      %3956 = vmatprep.subr.bf16.mxu0 0
      %3957 = vmatpush1.bf16.msra.mxu0 0
      %3958 = vmatprep.subr.bf16.mxu0 0
      %3959 = vmatpush1.bf16.msra.mxu0 0
      %3960 = vmatprep.subr.bf16.mxu0 0
      %3961 = vmatpush1.bf16.msra.mxu0 0
      %3962 = vmatprep.subr.bf16.mxu0 0
      %3963 = vmatpush1.bf16.msra.mxu0 0
      %3964 = vmatprep.subr.bf16.mxu0 0
      %3965 = vmatpush1.bf16.msra.mxu0 0
      %3966 = vmatprep.subr.bf16.mxu0 0
      %3967 = vmatpush1.bf16.msra.mxu0 0
      %3968 = vmatprep.subr.bf16.mxu0 0
      %3969 = vmatpush1.bf16.msra.mxu0 0
      %3970 = vmatprep.subr.bf16.mxu0 0
      %3971 = vmatpush1.bf16.msra.mxu0 %v3954
      %3972 = vmatprep.subr.bf16.mxu0 0
      %3973 = vmatpush2.bf16.msra.mxu0 0
      %3974 = vmatprep.subr.bf16.mxu0 0
      %3975 = vmatpush2.bf16.msra.mxu0 0
      %3976 = vmatprep.subr.bf16.mxu0 0
      %3977 = vmatpush2.bf16.msra.mxu0 0
      %3978 = vmatprep.subr.bf16.mxu0 0
      %3979 = vmatpush2.bf16.msra.mxu0 0
      %3980 = vmatprep.subr.bf16.mxu0 0
      %3981 = vmatpush2.bf16.msra.mxu0 0
      %3982 = vmatprep.subr.bf16.mxu0 0
      %3983 = vmatpush2.bf16.msra.mxu0 0
      %3984 = vmatprep.subr.bf16.mxu0 0
      %3985 = vmatpush2.bf16.msra.mxu0 0
      %3986 = vmatprep.subr.bf16.mxu0 0
      %3987 = vmatpush2.bf16.msra.mxu0 0
      %3988 = vmatprep.mubr.bf16.mxu0 0
      %3989 = vmatmul.mubr.bf16.gmra.mxu0 %v3951
      %v3990 = vpop.f32.mrf.mxu0
      %v3991 = vadd.f32 0.0, %v3990
      %v3992 = vpop.f32.mrf.mxu0
      %v3993 = vpop.f32.mrf.mxu0
      %v3994 = vpop.f32.mrf.mxu0
      %3995 = vdwg.mxu0
      %3996 = vrot.lane.b32.xlu0 %v653, 40
      %v3997 = vpop.permute.xlu0 %3996
      %v3999 = vsel %vm661, %v3847, 0
      %v4002 = vsel %vm1168, %v3997, 0
      %4004 = vmatprep.subr.bf16.mxu0 0
      %4005 = vmatpush1.bf16.msra.mxu0 0
      %4006 = vmatprep.subr.bf16.mxu0 0
      %4007 = vmatpush1.bf16.msra.mxu0 0
      %4008 = vmatprep.subr.bf16.mxu0 0
      %4009 = vmatpush1.bf16.msra.mxu0 0
      %4010 = vmatprep.subr.bf16.mxu0 0
      %4011 = vmatpush1.bf16.msra.mxu0 0
      %4012 = vmatprep.subr.bf16.mxu0 0
      %4013 = vmatpush1.bf16.msra.mxu0 0
      %4014 = vmatprep.subr.bf16.mxu0 0
      %4015 = vmatpush1.bf16.msra.mxu0 0
      %4016 = vmatprep.subr.bf16.mxu0 0
      %4017 = vmatpush1.bf16.msra.mxu0 0
      %4018 = vmatprep.subr.bf16.mxu0 0
      %4019 = vmatpush1.bf16.msra.mxu0 %v4002
      %4020 = vmatprep.subr.bf16.mxu0 0
      %4021 = vmatpush2.bf16.msra.mxu0 0
      %4022 = vmatprep.subr.bf16.mxu0 0
      %4023 = vmatpush2.bf16.msra.mxu0 0
      %4024 = vmatprep.subr.bf16.mxu0 0
      %4025 = vmatpush2.bf16.msra.mxu0 0
      %4026 = vmatprep.subr.bf16.mxu0 0
      %4027 = vmatpush2.bf16.msra.mxu0 0
      %4028 = vmatprep.subr.bf16.mxu0 0
      %4029 = vmatpush2.bf16.msra.mxu0 0
      %4030 = vmatprep.subr.bf16.mxu0 0
      %4031 = vmatpush2.bf16.msra.mxu0 0
      %4032 = vmatprep.subr.bf16.mxu0 0
      %4033 = vmatpush2.bf16.msra.mxu0 0
      %4034 = vmatprep.subr.bf16.mxu0 0
      %4035 = vmatpush2.bf16.msra.mxu0 0
      %4036 = vmatprep.mubr.bf16.mxu0 0
      %4037 = vmatmul.mubr.bf16.gmra.mxu0 %v3999
      %v4038 = vpop.f32.mrf.mxu0
      %v4039 = vadd.f32 0.0, %v4038
      %v4040 = vpop.f32.mrf.mxu0
      %v4041 = vpop.f32.mrf.mxu0
      %v4042 = vpop.f32.mrf.mxu0
      %4043 = vdwg.mxu0
      %4044 = vrot.lane.b32.xlu0 %v654, 40
      %v4045 = vpop.permute.xlu0 %4044
      %v4047 = vsel %vm661, %v3848, 0
      %v4050 = vsel %vm1168, %v4045, 0
      %4052 = vmatprep.subr.bf16.mxu0 0
      %4053 = vmatpush1.bf16.msra.mxu0 0
      %4054 = vmatprep.subr.bf16.mxu0 0
      %4055 = vmatpush1.bf16.msra.mxu0 0
      %4056 = vmatprep.subr.bf16.mxu0 0
      %4057 = vmatpush1.bf16.msra.mxu0 0
      %4058 = vmatprep.subr.bf16.mxu0 0
      %4059 = vmatpush1.bf16.msra.mxu0 0
      %4060 = vmatprep.subr.bf16.mxu0 0
      %4061 = vmatpush1.bf16.msra.mxu0 0
      %4062 = vmatprep.subr.bf16.mxu0 0
      %4063 = vmatpush1.bf16.msra.mxu0 0
      %4064 = vmatprep.subr.bf16.mxu0 0
      %4065 = vmatpush1.bf16.msra.mxu0 0
      %4066 = vmatprep.subr.bf16.mxu0 0
      %4067 = vmatpush1.bf16.msra.mxu0 %v4050
      %4068 = vmatprep.subr.bf16.mxu0 0
      %4069 = vmatpush2.bf16.msra.mxu0 0
      %4070 = vmatprep.subr.bf16.mxu0 0
      %4071 = vmatpush2.bf16.msra.mxu0 0
      %4072 = vmatprep.subr.bf16.mxu0 0
      %4073 = vmatpush2.bf16.msra.mxu0 0
      %4074 = vmatprep.subr.bf16.mxu0 0
      %4075 = vmatpush2.bf16.msra.mxu0 0
      %4076 = vmatprep.subr.bf16.mxu0 0
      %4077 = vmatpush2.bf16.msra.mxu0 0
      %4078 = vmatprep.subr.bf16.mxu0 0
      %4079 = vmatpush2.bf16.msra.mxu0 0
      %4080 = vmatprep.subr.bf16.mxu0 0
      %4081 = vmatpush2.bf16.msra.mxu0 0
      %4082 = vmatprep.subr.bf16.mxu0 0
      %4083 = vmatpush2.bf16.msra.mxu0 0
      %4084 = vmatprep.mubr.bf16.mxu0 0
      %4085 = vmatmul.mubr.bf16.gmra.mxu0 %v4047
      %v4086 = vpop.f32.mrf.mxu0
      %v4087 = vadd.f32 0.0, %v4086
      %v4088 = vpop.f32.mrf.mxu0
      %v4089 = vpop.f32.mrf.mxu0
      %v4090 = vpop.f32.mrf.mxu0
      %4091 = vdwg.mxu0
      %4092 = vrot.lane.b32.xlu0 %v655, 40
      %v4093 = vpop.permute.xlu0 %4092
      %v4095 = vsel %vm661, %v3849, 0
      %v4098 = vsel %vm1168, %v4093, 0
      %4100 = vmatprep.subr.bf16.mxu0 0
      %4101 = vmatpush1.bf16.msra.mxu0 0
      %4102 = vmatprep.subr.bf16.mxu0 0
      %4103 = vmatpush1.bf16.msra.mxu0 0
      %4104 = vmatprep.subr.bf16.mxu0 0
      %4105 = vmatpush1.bf16.msra.mxu0 0
      %4106 = vmatprep.subr.bf16.mxu0 0
      %4107 = vmatpush1.bf16.msra.mxu0 0
      %4108 = vmatprep.subr.bf16.mxu0 0
      %4109 = vmatpush1.bf16.msra.mxu0 0
      %4110 = vmatprep.subr.bf16.mxu0 0
      %4111 = vmatpush1.bf16.msra.mxu0 0
      %4112 = vmatprep.subr.bf16.mxu0 0
      %4113 = vmatpush1.bf16.msra.mxu0 0
      %4114 = vmatprep.subr.bf16.mxu0 0
      %4115 = vmatpush1.bf16.msra.mxu0 %v4098
      %4116 = vmatprep.subr.bf16.mxu0 0
      %4117 = vmatpush2.bf16.msra.mxu0 0
      %4118 = vmatprep.subr.bf16.mxu0 0
      %4119 = vmatpush2.bf16.msra.mxu0 0
      %4120 = vmatprep.subr.bf16.mxu0 0
      %4121 = vmatpush2.bf16.msra.mxu0 0
      %4122 = vmatprep.subr.bf16.mxu0 0
      %4123 = vmatpush2.bf16.msra.mxu0 0
      %4124 = vmatprep.subr.bf16.mxu0 0
      %4125 = vmatpush2.bf16.msra.mxu0 0
      %4126 = vmatprep.subr.bf16.mxu0 0
      %4127 = vmatpush2.bf16.msra.mxu0 0
      %4128 = vmatprep.subr.bf16.mxu0 0
      %4129 = vmatpush2.bf16.msra.mxu0 0
      %4130 = vmatprep.subr.bf16.mxu0 0
      %4131 = vmatpush2.bf16.msra.mxu0 0
      %4132 = vmatprep.mubr.bf16.mxu0 0
      %4133 = vmatmul.mubr.bf16.gmra.mxu0 %v4095
      %v4134 = vpop.f32.mrf.mxu0
      %v4135 = vadd.f32 0.0, %v4134
      %v4136 = vpop.f32.mrf.mxu0
      %v4137 = vpop.f32.mrf.mxu0
      %v4138 = vpop.f32.mrf.mxu0
      %4139 = vdwg.mxu0
      %4140 = vrot.lane.b32.xlu0 %v656, 40
      %v4141 = vpop.permute.xlu0 %4140
      %v4143 = vsel %vm661, %v3850, 0
      %v4146 = vsel %vm1168, %v4141, 0
      %4148 = vmatprep.subr.bf16.mxu0 0
      %4149 = vmatpush1.bf16.msra.mxu0 0
      %4150 = vmatprep.subr.bf16.mxu0 0
      %4151 = vmatpush1.bf16.msra.mxu0 0
      %4152 = vmatprep.subr.bf16.mxu0 0
      %4153 = vmatpush1.bf16.msra.mxu0 0
      %4154 = vmatprep.subr.bf16.mxu0 0
      %4155 = vmatpush1.bf16.msra.mxu0 0
      %4156 = vmatprep.subr.bf16.mxu0 0
      %4157 = vmatpush1.bf16.msra.mxu0 0
      %4158 = vmatprep.subr.bf16.mxu0 0
      %4159 = vmatpush1.bf16.msra.mxu0 0
      %4160 = vmatprep.subr.bf16.mxu0 0
      %4161 = vmatpush1.bf16.msra.mxu0 0
      %4162 = vmatprep.subr.bf16.mxu0 0
      %4163 = vmatpush1.bf16.msra.mxu0 %v4146
      %4164 = vmatprep.subr.bf16.mxu0 0
      %4165 = vmatpush2.bf16.msra.mxu0 0
      %4166 = vmatprep.subr.bf16.mxu0 0
      %4167 = vmatpush2.bf16.msra.mxu0 0
      %4168 = vmatprep.subr.bf16.mxu0 0
      %4169 = vmatpush2.bf16.msra.mxu0 0
      %4170 = vmatprep.subr.bf16.mxu0 0
      %4171 = vmatpush2.bf16.msra.mxu0 0
      %4172 = vmatprep.subr.bf16.mxu0 0
      %4173 = vmatpush2.bf16.msra.mxu0 0
      %4174 = vmatprep.subr.bf16.mxu0 0
      %4175 = vmatpush2.bf16.msra.mxu0 0
      %4176 = vmatprep.subr.bf16.mxu0 0
      %4177 = vmatpush2.bf16.msra.mxu0 0
      %4178 = vmatprep.subr.bf16.mxu0 0
      %4179 = vmatpush2.bf16.msra.mxu0 0
      %4180 = vmatprep.mubr.bf16.mxu0 0
      %4181 = vmatmul.mubr.bf16.gmra.mxu0 %v4143
      %v4182 = vpop.f32.mrf.mxu0
      %v4183 = vadd.f32 0.0, %v4182
      %v4184 = vpop.f32.mrf.mxu0
      %v4185 = vpop.f32.mrf.mxu0
      %v4186 = vpop.f32.mrf.mxu0
      %4187 = vdwg.mxu0
      %4188 = vrot.lane.b32.xlu0 %v657, 40
      %v4189 = vpop.permute.xlu0 %4188
      %v4191 = vsel %vm661, %v3851, 0
      %v4194 = vsel %vm1168, %v4189, 0
      %4196 = vmatprep.subr.bf16.mxu0 0
      %4197 = vmatpush1.bf16.msra.mxu0 0
      %4198 = vmatprep.subr.bf16.mxu0 0
      %4199 = vmatpush1.bf16.msra.mxu0 0
      %4200 = vmatprep.subr.bf16.mxu0 0
      %4201 = vmatpush1.bf16.msra.mxu0 0
      %4202 = vmatprep.subr.bf16.mxu0 0
      %4203 = vmatpush1.bf16.msra.mxu0 0
      %4204 = vmatprep.subr.bf16.mxu0 0
      %4205 = vmatpush1.bf16.msra.mxu0 0
      %4206 = vmatprep.subr.bf16.mxu0 0
      %4207 = vmatpush1.bf16.msra.mxu0 0
      %4208 = vmatprep.subr.bf16.mxu0 0
      %4209 = vmatpush1.bf16.msra.mxu0 0
      %4210 = vmatprep.subr.bf16.mxu0 0
      %4211 = vmatpush1.bf16.msra.mxu0 %v4194
      %4212 = vmatprep.subr.bf16.mxu0 0
      %4213 = vmatpush2.bf16.msra.mxu0 0
      %4214 = vmatprep.subr.bf16.mxu0 0
      %4215 = vmatpush2.bf16.msra.mxu0 0
      %4216 = vmatprep.subr.bf16.mxu0 0
      %4217 = vmatpush2.bf16.msra.mxu0 0
      %4218 = vmatprep.subr.bf16.mxu0 0
      %4219 = vmatpush2.bf16.msra.mxu0 0
      %4220 = vmatprep.subr.bf16.mxu0 0
      %4221 = vmatpush2.bf16.msra.mxu0 0
      %4222 = vmatprep.subr.bf16.mxu0 0
      %4223 = vmatpush2.bf16.msra.mxu0 0
      %4224 = vmatprep.subr.bf16.mxu0 0
      %4225 = vmatpush2.bf16.msra.mxu0 0
      %4226 = vmatprep.subr.bf16.mxu0 0
      %4227 = vmatpush2.bf16.msra.mxu0 0
      %4228 = vmatprep.mubr.bf16.mxu0 0
      %4229 = vmatmul.mubr.bf16.gmra.mxu0 %v4191
      %v4230 = vpop.f32.mrf.mxu0
      %v4231 = vadd.f32 0.0, %v4230
      %v4232 = vpop.f32.mrf.mxu0
      %v4233 = vpop.f32.mrf.mxu0
      %v4234 = vpop.f32.mrf.mxu0
      %4235 = vdwg.mxu0
      %4244 = vrot.lane.b32.xlu0 %v2103, 8
      %v4245 = vpop.permute.xlu0 %4244
      %4246 = vrot.lane.b32.xlu0 %v2151, 8
      %v4247 = vpop.permute.xlu0 %4246
      %4248 = vrot.lane.b32.xlu0 %v2199, 8
      %v4249 = vpop.permute.xlu0 %4248
      %4250 = vrot.lane.b32.xlu0 %v2247, 8
      %v4251 = vpop.permute.xlu0 %4250
      %4252 = vrot.lane.b32.xlu0 %v2295, 8
      %v4253 = vpop.permute.xlu0 %4252
      %4254 = vrot.lane.b32.xlu0 %v2343, 8
      %v4255 = vpop.permute.xlu0 %4254
      %4256 = vrot.lane.b32.xlu0 %v2391, 8
      %v4257 = vpop.permute.xlu0 %4256
      %4258 = vrot.lane.b32.xlu0 %v2439, 8
      %v4259 = vpop.permute.xlu0 %4258
      %4276 = vrot.lane.b32.xlu0 %v2999, 16
      %v4277 = vpop.permute.xlu0 %4276
      %4278 = vrot.lane.b32.xlu0 %v3047, 16
      %v4279 = vpop.permute.xlu0 %4278
      %4280 = vrot.lane.b32.xlu0 %v3095, 16
      %v4281 = vpop.permute.xlu0 %4280
      %4282 = vrot.lane.b32.xlu0 %v3143, 16
      %v4283 = vpop.permute.xlu0 %4282
      %4284 = vrot.lane.b32.xlu0 %v3191, 16
      %v4285 = vpop.permute.xlu0 %4284
      %4286 = vrot.lane.b32.xlu0 %v3239, 16
      %v4287 = vpop.permute.xlu0 %4286
      %4288 = vrot.lane.b32.xlu0 %v3287, 16
      %v4289 = vpop.permute.xlu0 %4288
      %4290 = vrot.lane.b32.xlu0 %v3335, 16
      %v4291 = vpop.permute.xlu0 %4290
      %4308 = vrot.lane.b32.xlu0 %v3895, 24
      %v4309 = vpop.permute.xlu0 %4308
      %4310 = vrot.lane.b32.xlu0 %v3943, 24
      %v4311 = vpop.permute.xlu0 %4310
      %4312 = vrot.lane.b32.xlu0 %v3991, 24
      %v4313 = vpop.permute.xlu0 %4312
      %4314 = vrot.lane.b32.xlu0 %v4039, 24
      %v4315 = vpop.permute.xlu0 %4314
      %4316 = vrot.lane.b32.xlu0 %v4087, 24
      %v4317 = vpop.permute.xlu0 %4316
      %4318 = vrot.lane.b32.xlu0 %v4135, 24
      %v4319 = vpop.permute.xlu0 %4318
      %4320 = vrot.lane.b32.xlu0 %v4183, 24
      %v4321 = vpop.permute.xlu0 %4320
      %4322 = vrot.lane.b32.xlu0 %v4231, 24
      %v4323 = vpop.permute.xlu0 %4322
      %v4332 = vsel %vm661, %v1207, %v4245
      %v4333 = vsel %vm661, %v1255, %v4247
      %v4334 = vsel %vm661, %v1303, %v4249
      %v4335 = vsel %vm661, %v1351, %v4251
      %v4336 = vsel %vm661, %v1399, %v4253
      %v4337 = vsel %vm661, %v1447, %v4255
      %v4338 = vsel %vm661, %v1495, %v4257
      %v4339 = vsel %vm661, %v1543, %v4259
      %vm4340 = vcmask 130048
      %v4341 = vsel %vm4340, %v4332, %v4277
      %v4342 = vsel %vm4340, %v4333, %v4279
      %v4343 = vsel %vm4340, %v4334, %v4281
      %v4344 = vsel %vm4340, %v4335, %v4283
      %v4345 = vsel %vm4340, %v4336, %v4285
      %v4346 = vsel %vm4340, %v4337, %v4287
      %v4347 = vsel %vm4340, %v4338, %v4289
      %v4348 = vsel %vm4340, %v4339, %v4291
      %vm4349 = vcmask 195584
      %v4350 = vsel %vm4349, %v4341, %v4309
      %v4351 = vsel %vm4349, %v4342, %v4311
      %v4352 = vsel %vm4349, %v4343, %v4313
      %v4353 = vsel %vm4349, %v4344, %v4315
      %v4354 = vsel %vm4349, %v4345, %v4317
      %v4355 = vsel %vm4349, %v4346, %v4319
      %v4356 = vsel %vm4349, %v4347, %v4321
      %v4357 = vsel %vm4349, %v4348, %v4323
      %v4358 = vpack.c.bf16 %v4351, %v4350
      %v4359 = vpack.c.bf16 %v4353, %v4352
      %v4360 = vpack.c.bf16 %v4355, %v4354
      %v4361 = vpack.c.bf16 %v4357, %v4356
      %v4362 = vld [vmem:[%s505] sm:$0xf]
      %v4363 = vld [vmem:[%s505 + $0x4] sm:$0xf]
      %v4364 = vld [vmem:[%s505 + $0x8] sm:$0xf]
      %v4365 = vld [vmem:[%s505 + $0xc] sm:$0xf]
      %v4366 = vld [vmem:[%s508] sm:$0x1]
      %v4368 = vlaneseq
      %v4369 = vshrl.u32 %v4368, 7
      %v4370 = vsub.s32 0, %v4369
      %v4371 = vrot.slane %v4366, %v4370
      %v4377 = vunpack.c.l.b16 %v4362
      %v4378 = vunpack.c.l.b16 %v4363
      %v4379 = vunpack.c.l.b16 %v4364
      %v4380 = vunpack.c.l.b16 %v4365
      %v4381 = vpack.c.b16 %v4378, %v4377
      %v4382 = vpack.c.b16 %v4380, %v4379
      %v4386 = vsel %vm571, %v4358, 0
      %v4389 = vsel %vm571, %v4359, 0
      %v4392 = vsel %vm571, %v4360, 0
      %v4395 = vsel %vm571, %v4361, 0
      %4397 = vmatprep.subr.bf16.mxu0 0
      %4398 = vmatpush1.bf16.msra.mxu0 0
      %4399 = vmatprep.subr.bf16.mxu0 0
      %4400 = vmatpush1.bf16.msra.mxu0 0
      %4401 = vmatprep.subr.bf16.mxu0 0
      %4402 = vmatpush1.bf16.msra.mxu0 0
      %4403 = vmatprep.subr.bf16.mxu0 0
      %4404 = vmatpush1.bf16.msra.mxu0 0
      %4405 = vmatprep.subr.bf16.mxu0 0
      %4406 = vmatpush1.bf16.msra.mxu0 0
      %4407 = vmatprep.subr.bf16.mxu0 0
      %4408 = vmatpush1.bf16.msra.mxu0 0
      %4409 = vmatprep.subr.bf16.mxu0 0
      %4410 = vmatpush1.bf16.msra.mxu0 %v4382
      %4411 = vmatprep.subr.bf16.mxu0 0
      %4412 = vmatpush1.bf16.msra.mxu0 %v4381
      %4413 = vmatprep.subr.bf16.mxu0 0
      %4414 = vmatpush2.bf16.msra.mxu0 0
      %4415 = vmatprep.subr.bf16.mxu0 0
      %4416 = vmatpush2.bf16.msra.mxu0 0
      %4417 = vmatprep.subr.bf16.mxu0 0
      %4418 = vmatpush2.bf16.msra.mxu0 0
      %4419 = vmatprep.subr.bf16.mxu0 0
      %4420 = vmatpush2.bf16.msra.mxu0 0
      %4421 = vmatprep.subr.bf16.mxu0 0
      %4422 = vmatpush2.bf16.msra.mxu0 0
      %4423 = vmatprep.subr.bf16.mxu0 0
      %4424 = vmatpush2.bf16.msra.mxu0 0
      %4425 = vmatprep.subr.bf16.mxu0 0
      %4426 = vmatpush2.bf16.msra.mxu0 0
      %4427 = vmatprep.subr.bf16.mxu0 0
      %4428 = vmatpush2.bf16.msra.mxu0 0
      %4429 = vmatprep.mubr.bf16.mxu0 0
      %4430 = vmatmul.mubr.bf16.gmra.mxu0 %v4386
      %v4431 = vpop.f32.mrf.mxu0
      %v4432 = vadd.f32 %v4371, %v4431
      %v4433 = vpop.f32.mrf.mxu0
      %v4434 = vpop.f32.mrf.mxu0
      %v4435 = vadd.f32 %v4371, %v4434
      %v4436 = vpop.f32.mrf.mxu0
      %4437 = vmatprep.mubr.bf16.mxu0 0
      %4438 = vmatmul.mubr.bf16.gmra.mxu0 %v4389
      %v4439 = vpop.f32.mrf.mxu0
      %v4440 = vadd.f32 %v4371, %v4439
      %v4441 = vpop.f32.mrf.mxu0
      %v4442 = vpop.f32.mrf.mxu0
      %v4443 = vadd.f32 %v4371, %v4442
      %v4444 = vpop.f32.mrf.mxu0
      %4445 = vmatprep.mubr.bf16.mxu0 0
      %4446 = vmatmul.mubr.bf16.gmra.mxu0 %v4392
      %v4447 = vpop.f32.mrf.mxu0
      %v4448 = vadd.f32 %v4371, %v4447
      %v4449 = vpop.f32.mrf.mxu0
      %v4450 = vpop.f32.mrf.mxu0
      %v4451 = vadd.f32 %v4371, %v4450
      %v4452 = vpop.f32.mrf.mxu0
      %4453 = vmatprep.mubr.bf16.mxu0 0
      %4454 = vmatmul.mubr.bf16.gmra.mxu0 %v4395
      %v4455 = vpop.f32.mrf.mxu0
      %v4456 = vadd.f32 %v4371, %v4455
      %v4457 = vpop.f32.mrf.mxu0
      %v4458 = vpop.f32.mrf.mxu0
      %v4459 = vadd.f32 %v4371, %v4458
      %v4460 = vpop.f32.mrf.mxu0
      %4461 = vdwg.mxu0
      %v4462 = vadd.f32 %v536, %v4432
      %v4463 = vadd.f32 %v537, %v4435
      %v4464 = vadd.f32 %v538, %v4440
      %v4465 = vadd.f32 %v539, %v4443
      %v4466 = vadd.f32 %v540, %v4448
      %v4467 = vadd.f32 %v541, %v4451
      %v4468 = vadd.f32 %v542, %v4456
      %v4469 = vadd.f32 %v543, %v4459
      %v4470 = vpack.c.bf16 %v4463, %v4462
      %v4471 = vpack.c.bf16 %v4465, %v4464
      %v4472 = vpack.c.bf16 %v4467, %v4466
      %v4473 = vpack.c.bf16 %v4469, %v4468
      %v4474 = vld [vmem:[%s513] sm:$0xf]
      %v4475 = vld [vmem:[%s513 + $0x4] sm:$0xf]
      %v4476 = vld [vmem:[%s513 + $0x8] sm:$0xf]
      %v4477 = vld [vmem:[%s513 + $0xc] sm:$0xf]
      %v4478 = vld [vmem:[%s516] sm:$0x1]
      %v4480 = vlaneseq
      %v4481 = vshrl.u32 %v4480, 7
      %v4482 = vsub.s32 0, %v4481
      %v4483 = vrot.slane %v4478, %v4482
      %v4489 = vunpack.c.l.b16 %v4474
      %v4490 = vunpack.c.l.b16 %v4475
      %v4491 = vunpack.c.l.b16 %v4476
      %v4492 = vunpack.c.l.b16 %v4477
      %v4493 = vpack.c.b16 %v4490, %v4489
      %v4494 = vpack.c.b16 %v4492, %v4491
      %v4498 = vsel %vm571, %v4470, 0
      %v4501 = vsel %vm571, %v4471, 0
      %v4504 = vsel %vm571, %v4472, 0
      %v4507 = vsel %vm571, %v4473, 0
      %4509 = vmatprep.subr.bf16.mxu0 0
      %4510 = vmatpush1.bf16.msra.mxu0 0
      %4511 = vmatprep.subr.bf16.mxu0 0
      %4512 = vmatpush1.bf16.msra.mxu0 0
      %4513 = vmatprep.subr.bf16.mxu0 0
      %4514 = vmatpush1.bf16.msra.mxu0 0
      %4515 = vmatprep.subr.bf16.mxu0 0
      %4516 = vmatpush1.bf16.msra.mxu0 0
      %4517 = vmatprep.subr.bf16.mxu0 0
      %4518 = vmatpush1.bf16.msra.mxu0 0
      %4519 = vmatprep.subr.bf16.mxu0 0
      %4520 = vmatpush1.bf16.msra.mxu0 0
      %4521 = vmatprep.subr.bf16.mxu0 0
      %4522 = vmatpush1.bf16.msra.mxu0 %v4494
      %4523 = vmatprep.subr.bf16.mxu0 0
      %4524 = vmatpush1.bf16.msra.mxu0 %v4493
      %4525 = vmatprep.subr.bf16.mxu0 0
      %4526 = vmatpush2.bf16.msra.mxu0 0
      %4527 = vmatprep.subr.bf16.mxu0 0
      %4528 = vmatpush2.bf16.msra.mxu0 0
      %4529 = vmatprep.subr.bf16.mxu0 0
      %4530 = vmatpush2.bf16.msra.mxu0 0
      %4531 = vmatprep.subr.bf16.mxu0 0
      %4532 = vmatpush2.bf16.msra.mxu0 0
      %4533 = vmatprep.subr.bf16.mxu0 0
      %4534 = vmatpush2.bf16.msra.mxu0 0
      %4535 = vmatprep.subr.bf16.mxu0 0
      %4536 = vmatpush2.bf16.msra.mxu0 0
      %4537 = vmatprep.subr.bf16.mxu0 0
      %4538 = vmatpush2.bf16.msra.mxu0 0
      %4539 = vmatprep.subr.bf16.mxu0 0
      %4540 = vmatpush2.bf16.msra.mxu0 0
      %4541 = vmatprep.mubr.bf16.mxu0 0
      %4542 = vmatmul.mubr.bf16.gmra.mxu0 %v4498
      %v4543 = vpop.f32.mrf.mxu0
      %v4544 = vadd.f32 %v4483, %v4543
      %v4545 = vpop.f32.mrf.mxu0
      %v4546 = vpop.f32.mrf.mxu0
      %v4547 = vadd.f32 %v4483, %v4546
      %v4548 = vpop.f32.mrf.mxu0
      %4549 = vmatprep.mubr.bf16.mxu0 0
      %4550 = vmatmul.mubr.bf16.gmra.mxu0 %v4501
      %v4551 = vpop.f32.mrf.mxu0
      %v4552 = vadd.f32 %v4483, %v4551
      %v4553 = vpop.f32.mrf.mxu0
      %v4554 = vpop.f32.mrf.mxu0
      %v4555 = vadd.f32 %v4483, %v4554
      %v4556 = vpop.f32.mrf.mxu0
      %4557 = vmatprep.mubr.bf16.mxu0 0
      %4558 = vmatmul.mubr.bf16.gmra.mxu0 %v4504
      %v4559 = vpop.f32.mrf.mxu0
      %v4560 = vadd.f32 %v4483, %v4559
      %v4561 = vpop.f32.mrf.mxu0
      %v4562 = vpop.f32.mrf.mxu0
      %v4563 = vadd.f32 %v4483, %v4562
      %v4564 = vpop.f32.mrf.mxu0
      %4565 = vmatprep.mubr.bf16.mxu0 0
      %4566 = vmatmul.mubr.bf16.gmra.mxu0 %v4507
      %v4567 = vpop.f32.mrf.mxu0
      %v4568 = vadd.f32 %v4483, %v4567
      %v4569 = vpop.f32.mrf.mxu0
      %v4570 = vpop.f32.mrf.mxu0
      %v4571 = vadd.f32 %v4483, %v4570
      %v4572 = vpop.f32.mrf.mxu0
      %4573 = vdwg.mxu0
      %v4574 = vmax.f32 %v4544, 0.0
      %v4575 = vmax.f32 %v4547, 0.0
      %v4576 = vmax.f32 %v4552, 0.0
      %v4577 = vmax.f32 %v4555, 0.0
      %v4578 = vmax.f32 %v4560, 0.0
      %v4579 = vmax.f32 %v4563, 0.0
      %v4580 = vmax.f32 %v4568, 0.0
      %v4581 = vmax.f32 %v4571, 0.0
      %v4582 = vpack.c.bf16 %v4575, %v4574
      %v4583 = vpack.c.bf16 %v4577, %v4576
      %v4584 = vpack.c.bf16 %v4579, %v4578
      %v4585 = vpack.c.bf16 %v4581, %v4580
      %v4586 = vld [vmem:[%s521] sm:$0xf]
      %v4587 = vld [vmem:[%s521 + $0x4] sm:$0xf]
      %v4588 = vld [vmem:[%s521 + $0x8] sm:$0xf]
      %v4589 = vld [vmem:[%s521 + $0xc] sm:$0xf]
      %v4590 = vld [vmem:[%s521 + $0x10] sm:$0xf]
      %v4591 = vld [vmem:[%s521 + $0x14] sm:$0xf]
      %v4592 = vld [vmem:[%s521 + $0x18] sm:$0xf]
      %v4593 = vld [vmem:[%s521 + $0x1c] sm:$0xf]
      %v4594 = vld [vmem:[%s521 + $0x20] sm:$0xf]
      %v4595 = vld [vmem:[%s521 + $0x24] sm:$0xf]
      %v4596 = vld [vmem:[%s521 + $0x28] sm:$0xf]
      %v4597 = vld [vmem:[%s521 + $0x2c] sm:$0xf]
      %v4598 = vld [vmem:[%s521 + $0x30] sm:$0xf]
      %v4599 = vld [vmem:[%s521 + $0x34] sm:$0xf]
      %v4600 = vld [vmem:[%s521 + $0x38] sm:$0xf]
      %v4601 = vld [vmem:[%s521 + $0x3c] sm:$0xf]
      %v4602 = vld [vmem:[%s524] sm:$0x1]
      %v4604 = vlaneseq
      %v4605 = vshrl.u32 %v4604, 7
      %v4606 = vsub.s32 0, %v4605
      %v4607 = vrot.slane %v4602, %v4606
      %v4625 = vunpack.c.l.b16 %v4586
      %v4626 = vunpack.c.l.b16 %v4587
      %v4627 = vunpack.c.l.b16 %v4588
      %v4628 = vunpack.c.l.b16 %v4589
      %v4629 = vunpack.c.l.b16 %v4590
      %v4630 = vunpack.c.l.b16 %v4591
      %v4631 = vunpack.c.l.b16 %v4592
      %v4632 = vunpack.c.l.b16 %v4593
      %v4633 = vunpack.c.l.b16 %v4594
      %v4634 = vunpack.c.l.b16 %v4595
      %v4635 = vunpack.c.l.b16 %v4596
      %v4636 = vunpack.c.l.b16 %v4597
      %v4637 = vunpack.c.l.b16 %v4598
      %v4638 = vunpack.c.l.b16 %v4599
      %v4639 = vunpack.c.l.b16 %v4600
      %v4640 = vunpack.c.l.b16 %v4601
      %v4641 = vpack.c.b16 %v4626, %v4625
      %v4642 = vpack.c.b16 %v4628, %v4627
      %v4643 = vpack.c.b16 %v4630, %v4629
      %v4644 = vpack.c.b16 %v4632, %v4631
      %v4645 = vpack.c.b16 %v4634, %v4633
      %v4646 = vpack.c.b16 %v4636, %v4635
      %v4647 = vpack.c.b16 %v4638, %v4637
      %v4648 = vpack.c.b16 %v4640, %v4639
      %4657 = vmatprep.subr.bf16.mxu0 0
      %4658 = vmatpush1.bf16.msra.mxu0 %v4648
      %4659 = vmatprep.subr.bf16.mxu0 0
      %4660 = vmatpush1.bf16.msra.mxu0 %v4647
      %4661 = vmatprep.subr.bf16.mxu0 0
      %4662 = vmatpush1.bf16.msra.mxu0 %v4646
      %4663 = vmatprep.subr.bf16.mxu0 0
      %4664 = vmatpush1.bf16.msra.mxu0 %v4645
      %4665 = vmatprep.subr.bf16.mxu0 0
      %4666 = vmatpush1.bf16.msra.mxu0 %v4644
      %4667 = vmatprep.subr.bf16.mxu0 0
      %4668 = vmatpush1.bf16.msra.mxu0 %v4643
      %4669 = vmatprep.subr.bf16.mxu0 0
      %4670 = vmatpush1.bf16.msra.mxu0 %v4642
      %4671 = vmatprep.subr.bf16.mxu0 0
      %4672 = vmatpush1.bf16.msra.mxu0 %v4641
      %4673 = vmatprep.subr.bf16.mxu0 0
      %4674 = vmatpush2.bf16.msra.mxu0 0
      %4675 = vmatprep.subr.bf16.mxu0 0
      %4676 = vmatpush2.bf16.msra.mxu0 0
      %4677 = vmatprep.subr.bf16.mxu0 0
      %4678 = vmatpush2.bf16.msra.mxu0 0
      %4679 = vmatprep.subr.bf16.mxu0 0
      %4680 = vmatpush2.bf16.msra.mxu0 0
      %4681 = vmatprep.subr.bf16.mxu0 0
      %4682 = vmatpush2.bf16.msra.mxu0 0
      %4683 = vmatprep.subr.bf16.mxu0 0
      %4684 = vmatpush2.bf16.msra.mxu0 0
      %4685 = vmatprep.subr.bf16.mxu0 0
      %4686 = vmatpush2.bf16.msra.mxu0 0
      %4687 = vmatprep.subr.bf16.mxu0 0
      %4688 = vmatpush2.bf16.msra.mxu0 0
      %4689 = vmatprep.mubr.bf16.mxu0 0
      %4690 = vmatmul.mubr.bf16.gmra.mxu0 %v4582
      %v4691 = vpop.f32.mrf.mxu0
      %v4692 = vadd.f32 %v4607, %v4691
      %v4693 = vpop.f32.mrf.mxu0
      %v4694 = vpop.f32.mrf.mxu0
      %v4695 = vadd.f32 %v4607, %v4694
      %v4696 = vpop.f32.mrf.mxu0
      %4697 = vmatprep.mubr.bf16.mxu0 0
      %4698 = vmatmul.mubr.bf16.gmra.mxu0 %v4583
      %v4699 = vpop.f32.mrf.mxu0
      %v4700 = vadd.f32 %v4607, %v4699
      %v4701 = vpop.f32.mrf.mxu0
      %v4702 = vpop.f32.mrf.mxu0
      %v4703 = vadd.f32 %v4607, %v4702
      %v4704 = vpop.f32.mrf.mxu0
      %4705 = vmatprep.mubr.bf16.mxu0 0
      %4706 = vmatmul.mubr.bf16.gmra.mxu0 %v4584
      %v4707 = vpop.f32.mrf.mxu0
      %v4708 = vadd.f32 %v4607, %v4707
      %v4709 = vpop.f32.mrf.mxu0
      %v4710 = vpop.f32.mrf.mxu0
      %v4711 = vadd.f32 %v4607, %v4710
      %v4712 = vpop.f32.mrf.mxu0
      %4713 = vmatprep.mubr.bf16.mxu0 0
      %4714 = vmatmul.mubr.bf16.gmra.mxu0 %v4585
      %v4715 = vpop.f32.mrf.mxu0
      %v4716 = vadd.f32 %v4607, %v4715
      %v4717 = vpop.f32.mrf.mxu0
      %v4718 = vpop.f32.mrf.mxu0
      %v4719 = vadd.f32 %v4607, %v4718
      %v4720 = vpop.f32.mrf.mxu0
      %4721 = vdwg.mxu0
      %v4722 = vadd.f32 %v4462, %v4692
      %v4723 = vadd.f32 %v4463, %v4695
      %v4724 = vadd.f32 %v4464, %v4700
      %v4725 = vadd.f32 %v4465, %v4703
      %v4726 = vadd.f32 %v4466, %v4708
      %v4727 = vadd.f32 %v4467, %v4711
      %v4728 = vadd.f32 %v4468, %v4716
      %v4729 = vadd.f32 %v4469, %v4719
      %4730 = vst.msk [vmem:[%s533] sm:$0xff] %vm571, %v4722
      %4731 = vst.msk [vmem:[%s533 + $0x8] sm:$0xff] %vm571, %v4723
      %4732 = vst.msk [vmem:[%s533 + $0x10] sm:$0xff] %vm571, %v4724
      %4733 = vst.msk [vmem:[%s533 + $0x18] sm:$0xff] %vm571, %v4725
      %4734 = vst.msk [vmem:[%s533 + $0x20] sm:$0xff] %vm571, %v4726
      %4735 = vst.msk [vmem:[%s533 + $0x28] sm:$0xff] %vm571, %v4727
      %4736 = vst.msk [vmem:[%s533 + $0x30] sm:$0xff] %vm571, %v4728
      %4737 = vst.msk [vmem:[%s533 + $0x38] sm:$0xff] %vm571, %v4729
      %s4738 = smul.u32 8, %s26
      %p4739 = scmp.lt.s32.totalorder %s25, 1
      %s4740 = scalar_select %p4739, %s25, 1
      %p4741 = scmp.lt.s32.totalorder %s4738, 15
      %s4742 = scalar_select %p4741, %s4738, 15
      %s4743 = smul.addr %s4740, 16
      %s4744 = sadd.s32 %s4742, %s4743
      %s4745 = smul.addr %s4744, 8
      %s4746 = scalar_lea.vmem %s10, %s4745
      // Predicated region
      $region61: #{_lambda_.3} parent=59 // pred_check
        %p4747 = pneg %p310
      $region62: #{_lambda_.3} parent=59 // pred_check_branch
        %4749 = sbr.rel (%p4747) target = $region64
      $region63: #{_lambda_.3} parent=59 // pred_region
        %s4750 = smul.u32 8, %s26
      $region64: #{_lambda_.3} parent=59 // pred_fallthru
        _
    $region60: #{_lambda_.3} parent=5 // pred_fallthru
      _
    %p4751 = scmp.le.s32.totalorder 2, %s16
    // Predicated region
    $region65: #{_lambda_.3} parent=5 // pred_check
      %p4752 = pneg %p4751
    $region66: #{_lambda_.3} parent=5 // pred_check_branch
      %4754 = sbr.rel (%p4752) target = $region68
    $region67: #{_lambda_.3} parent=5 // pred_region
      %s4755 = ssub.s32 %s16, 2
      // Predicated region
      $region69: #{_lambda_.3} parent=67 // pred_check
        %p4756 = pneg %p316
      $region70: #{_lambda_.3} parent=67 // pred_check_branch
        %4758 = sbr.rel (%p4756) target = $region72
      $region71: #{_lambda_.3} parent=67 // pred_region
        %s4759 = smul.u32 8, %s28
        %p4760 = scmp.lt.s32.totalorder %s27, 1
        %s4761 = scalar_select %p4760, %s27, 1
        %p4762 = scmp.lt.s32.totalorder %s4759, 15
        %s4763 = scalar_select %p4762, %s4759, 15
        %s4764 = smul.addr %s4761, 16
        %s4765 = sadd.s32 %s4763, %s4764
        %s4766 = smul.addr %s4765, 8
        %s4767 = scalar_lea.vmem %s10, %s4766
      $region72: #{_lambda_.3} parent=67 // pred_fallthru
        _
    $region68: #{_lambda_.3} parent=5 // pred_fallthru
      _
  $region6: #{_lambda_.3} parent=0 // loop_footer
    %s20 = sadd.s32 1, %s16
  $region7: #{_lambda_.3} parent=0 // loop_footer_branch
    %15 = sbr.rel target = $region3
  $region8: #{_lambda_.3} parent=0 // loop_exit
    _

</llo_original>
